<compile_context>
chip_gen: v6e
topology: v6e:2x2x1
jax: 0.10.0
libtpu: 0.0.40
codegen_flags: <defaults>
</compile_context>

<pallas_src>
import functools

import jax
import jax.numpy as jnp
from jax.experimental import pallas as pl
from jax.experimental.pallas import tpu as pltpu

# ---- small, CLIP-vision-shaped config ---------------------------------------
BATCH = 2
CHANNELS = 3
IMAGE = 32
PATCH = 16
GRID = IMAGE // PATCH
NUM_PATCHES = GRID * GRID            # 4
SEQ = NUM_PATCHES + 1                # 5 (CLS + patches)
HIDDEN = 64
HEADS = 4
HEAD_DIM = HIDDEN // HEADS           # 16
INTERMEDIATE = 128
LAYERS = 2
PROJ_DIM = 512                       # FashionCLIP requires embedding_dim == 512
LN_EPS = 1e-5
PATCH_DIM = CHANNELS * PATCH * PATCH # 768

# ---- packed small-parameter row layout (lane dim = HIDDEN) -------------------
ROW_PRE_W = 0
ROW_PRE_B = 1
ROW_LN1_W = 2
ROW_LN1_B = ROW_LN1_W + LAYERS
ROW_LN2_W = ROW_LN1_B + LAYERS
ROW_LN2_B = ROW_LN2_W + LAYERS
ROW_BO = ROW_LN2_B + LAYERS
ROW_B2 = ROW_BO + LAYERS
ROW_POST_W = ROW_B2 + LAYERS
ROW_POST_B = ROW_POST_W + 1
N_SMALL = ROW_POST_B + 1


def _layer_norm(x, w, b):
    mu = jnp.mean(x, axis=-1, keepdims=True)
    var = jnp.mean(jnp.square(x - mu), axis=-1, keepdims=True)
    return (x - mu) * jax.lax.rsqrt(var + LN_EPS) * w + b


def _softmax_last(x):
    m = jnp.max(x, axis=-1, keepdims=True)
    e = jnp.exp(x - m)
    return e * pl.reciprocal(jnp.sum(e, axis=-1, keepdims=True), approx=True)


def _clip_vision_kernel(normalize,
                        tokens_ref, embadd_ref, small_ref, bias_ref, pool_ref,
                        bqkv_ref, b1_ref,
                        patch_w_ref, wqkv_ref, wo_ref, w1_ref, w2_ref, proj_ref,
                        out_ref):
    # Patch embedding: Conv2d(stride=patch, no bias) == one 2-D bf16 MXU matmul
    # over flattened patches (CLS rows are zero so they stay zero).
    emb = jnp.dot(tokens_ref[...], patch_w_ref[...],
                  preferred_element_type=jnp.float32)          # (BS, D) f32

    # class embedding (folded into position 0 of embadd) + position embeddings,
    # then pre-LayerNorm.
    h = emb + embadd_ref[...]
    h = _layer_norm(h, small_ref[ROW_PRE_W:ROW_PRE_W + 1, :],
                    small_ref[ROW_PRE_B:ROW_PRE_B + 1, :])

    scale = HEAD_DIM ** -0.5
    for l in range(LAYERS):
        # ---- self-attention block -------------------------------------------
        residual = h
        x = _layer_norm(h, small_ref[ROW_LN1_W + l:ROW_LN1_W + l + 1, :],
                        small_ref[ROW_LN1_B + l:ROW_LN1_B + l + 1, :])

        # Fused QKV projection: one (BS, D) @ (D, 3D) matmul.
        qkv = jnp.dot(x.astype(jnp.bfloat16), wqkv_ref[l],
                      preferred_element_type=jnp.float32) + bqkv_ref[l:l + 1, :]
        q = qkv[:, 0:HIDDEN] * scale                            # HF CLIP scales queries
        k = qkv[:, HIDDEN:2 * HIDDEN]
        v = qkv[:, 2 * HIDDEN:3 * HIDDEN]

        # Head-major stacks (HEADS, BS, HEAD_DIM): all heads run through a
        # single batched matmul and a single softmax.
        qh = jnp.stack([q[:, i * HEAD_DIM:(i + 1) * HEAD_DIM]
                        for i in range(HEADS)], axis=0).astype(jnp.bfloat16)
        kh = jnp.stack([k[:, i * HEAD_DIM:(i + 1) * HEAD_DIM]
                        for i in range(HEADS)], axis=0).astype(jnp.bfloat16)
        vh = jnp.stack([v[:, i * HEAD_DIM:(i + 1) * HEAD_DIM]
                        for i in range(HEADS)], axis=0).astype(jnp.bfloat16)

        scores = jnp.einsum('hsd,htd->hst', qh, kh,
                            preferred_element_type=jnp.float32)  # (H, BS, BS)
        # bias keeps attention within each image (batch and seq share one row
        # axis inside the kernel).
        scores = scores + bias_ref[...][None, :, :]
        probs = _softmax_last(scores)
        ctx = jnp.einsum('hst,htd->hsd', probs.astype(jnp.bfloat16), vh,
                         preferred_element_type=jnp.float32)     # (H, BS, Dh)

        # Output projection: per-head weight blocks (H, Dh, D) in one batched
        # matmul, summed over heads == concat(heads) @ Wo.
        part = jnp.einsum('hsd,hde->hse', ctx.astype(jnp.bfloat16), wo_ref[l],
                          preferred_element_type=jnp.float32)    # (H, BS, D)
        attn = part[0]
        for i in range(1, HEADS):
            attn = attn + part[i]
        h = residual + attn + small_ref[ROW_BO + l:ROW_BO + l + 1, :]

        # ---- MLP block --------------------------------------------------------
        residual = h
        x = _layer_norm(h, small_ref[ROW_LN2_W + l:ROW_LN2_W + l + 1, :],
                        small_ref[ROW_LN2_B + l:ROW_LN2_B + l + 1, :])
        x1 = jnp.dot(x.astype(jnp.bfloat16), w1_ref[l],
                     preferred_element_type=jnp.float32) + b1_ref[l:l + 1, :]
        x1 = x1 * jax.nn.sigmoid(1.702 * x1)                     # quick_gelu
        x2 = jnp.dot(x1.astype(jnp.bfloat16), w2_ref[l],
                     preferred_element_type=jnp.float32) \
            + small_ref[ROW_B2 + l:ROW_B2 + l + 1, :]
        h = residual + x2

    # Pool the CLS row of each image via a tiny one-hot selection matmul,
    # post-LayerNorm, visual projection (no bias).
    pooled = jnp.dot(pool_ref[...], h, preferred_element_type=jnp.float32)  # (B, D)
    pooled = _layer_norm(pooled, small_ref[ROW_POST_W:ROW_POST_W + 1, :],
                         small_ref[ROW_POST_B:ROW_POST_B + 1, :])
    y = jnp.dot(pooled.astype(jnp.bfloat16), proj_ref[...],
                preferred_element_type=jnp.float32)              # (B, PROJ_DIM)

    if normalize:                                                # F.normalize(p=2, dim=1)
        ss = jnp.sum(jnp.square(y), axis=-1, keepdims=True)
        y = y * jax.lax.rsqrt(jnp.maximum(ss, 1e-24))            # == y / max(||y||, 1e-12)

    out_ref[...] = y.astype(out_ref.dtype)


def init_params(key):
    keys = jax.random.split(key, 10)

    def nrm(k, shape, scale=0.02):
        return (scale * jax.random.normal(k, shape)).astype(jnp.float32)

    L, D, I = LAYERS, HIDDEN, INTERMEDIATE
    return {
        # Linear weights are stored as (in, out) so the kernel computes x @ W.
        'patch_w': nrm(keys[0], (PATCH_DIM, D)),
        'cls':     nrm(keys[1], (1, D)),
        'pos':     nrm(keys[2], (SEQ, D)),
        'pre_w':   jnp.ones((1, D), jnp.float32),
        'pre_b':   jnp.zeros((1, D), jnp.float32),
        'ln1_w':   jnp.ones((L, D), jnp.float32),
        'ln1_b':   jnp.zeros((L, D), jnp.float32),
        'wq':      nrm(keys[3], (L, D, D)),
        'bq':      jnp.zeros((L, D), jnp.float32),
        'wk':      nrm(keys[4], (L, D, D)),
        'bk':      jnp.zeros((L, D), jnp.float32),
        'wv':      nrm(keys[5], (L, D, D)),
        'bv':      jnp.zeros((L, D), jnp.float32),
        'wo':      nrm(keys[6], (L, D, D)),
        'bo':      jnp.zeros((L, D), jnp.float32),
        'ln2_w':   jnp.ones((L, D), jnp.float32),
        'ln2_b':   jnp.zeros((L, D), jnp.float32),
        'w1':      nrm(keys[7], (L, D, I)),
        'b1':      jnp.zeros((L, I), jnp.float32),
        'w2':      nrm(keys[8], (L, I, D)),
        'b2':      jnp.zeros((L, D), jnp.float32),
        'post_w':  jnp.ones((1, D), jnp.float32),
        'post_b':  jnp.zeros((1, D), jnp.float32),
        'proj':    nrm(keys[9], (D, PROJ_DIM)),
    }


def _pack_params(params, batch):
    """Plain-JAX glue: fuse QKV, split Wo per head, pack small vectors, bf16 weights."""
    f32, bf16 = jnp.float32, jnp.bfloat16
    L = LAYERS
    bs = batch * SEQ

    # Fused QKV projection: (L, D, 3D) weight and (L, 3D) bias.
    wqkv = jnp.concatenate([params['wq'], params['wk'], params['wv']], axis=-1)
    bqkv = jnp.concatenate([params['bq'], params['bk'], params['bv']], axis=-1)

    # Output projection split into per-head blocks: (L, H, Dh, D).
    wo = params['wo'].reshape(L, HEADS, HEAD_DIM, HIDDEN)

    # Additive embedding per row of the flattened (batch*seq) axis: position
    # embeddings with the class embedding folded into position 0.
    pos_cls = params['pos'].at[0:1, :].add(params['cls'])
    embed_add = jnp.tile(pos_cls, (batch, 1))                    # (B*SEQ, D)

    # Attention bias blocking cross-image attention, and CLS-row selector.
    img = jnp.arange(bs, dtype=jnp.int32) // SEQ
    attn_bias = jnp.where(img[:, None] == img[None, :], 0.0, -1e9).astype(f32)
    pool_sel = (jnp.arange(bs)[None, :] ==
                (jnp.arange(batch) * SEQ)[:, None]).astype(f32)  # (B, B*SEQ)

    # All remaining (.., HIDDEN)-shaped vectors packed into one VMEM block.
    small = jnp.concatenate([
        params['pre_w'], params['pre_b'],
        params['ln1_w'], params['ln1_b'],
        params['ln2_w'], params['ln2_b'],
        params['bo'], params['b2'],
        params['post_w'], params['post_b'],
    ], axis=0).astype(f32)
    assert small.shape == (N_SMALL, HIDDEN)

    return {
        'embed_add': embed_add.astype(f32),
        'small': small,
        'attn_bias': attn_bias,
        'pool_sel': pool_sel,
        'bqkv': bqkv.astype(f32),
        'b1': params['b1'].astype(f32),
        'patch_w': params['patch_w'].astype(bf16),
        'wqkv': wqkv.astype(bf16),
        'wo': wo.astype(bf16),
        'w1': params['w1'].astype(bf16),
        'w2': params['w2'].astype(bf16),
        'proj': params['proj'].astype(bf16),
    }


def fashion_clip_transformer_encoder(x, params, normalize=False):
    """Forward pass: y = CLIPVisionModelWithProjection(x).image_embeds (+ optional L2 norm)."""
    B, C, H, W = x.shape
    gh, gw = H // PATCH, W // PATCH

    # Glue: NCHW -> non-overlapping patches flattened in (C, ph, pw) order,
    # sequence in row-major (gh, gw) order (matches conv+flatten(2).transpose(1,2)),
    # then flatten (batch, seq) into one row axis for 2-D MXU matmuls.
    xp = x.reshape(B, C, gh, PATCH, gw, PATCH)
    xp = xp.transpose(0, 2, 4, 1, 3, 5)                          # (B, gh, gw, C, P, P)
    patches = xp.reshape(B, gh * gw, C * PATCH * PATCH)
    tokens = jnp.concatenate(
        [jnp.zeros((B, 1, C * PATCH * PATCH), patches.dtype), patches], axis=1)
    tokens = tokens.reshape(B * SEQ, C * PATCH * PATCH).astype(jnp.bfloat16)

    packed = _pack_params(params, B)
    order = ['embed_add', 'small', 'attn_bias', 'pool_sel', 'bqkv', 'b1',
             'patch_w', 'wqkv', 'wo', 'w1', 'w2', 'proj']
    args = [tokens] + [packed[k] for k in order]

    kernel = functools.partial(_clip_vision_kernel, normalize)
    return pl.pallas_call(
        kernel,
        out_shape=jax.ShapeDtypeStruct((B, PROJ_DIM), jnp.float32),
        in_specs=[pl.BlockSpec(memory_space=pltpu.MemorySpace.VMEM)] * len(args),
        out_specs=pl.BlockSpec(memory_space=pltpu.MemorySpace.VMEM),
    )(*args)


if __name__ == "__main__":
    key = jax.random.PRNGKey(0)
    pkey, xkey = jax.random.split(key)
    params = init_params(pkey)
    x = jax.random.normal(xkey, (BATCH, CHANNELS, IMAGE, IMAGE), dtype=jnp.float32)

    y = fashion_clip_transformer_encoder(x, params, normalize=False)
    y = jax.block_until_ready(y)
    assert y.shape == (BATCH, PROJ_DIM) and y.dtype == jnp.float32

    y_n = fashion_clip_transformer_encoder(x, params, normalize=True)
    y_n = jax.block_until_ready(y_n)
    assert y_n.shape == (BATCH, PROJ_DIM)

    print("KERNEL_OK")
</pallas_src>

<mosaic_0001>
module attributes {stable_mosaic.version = 11 : i64} {
  func.func @_clip_vision_kernel(%arg0: memref<10x768xbf16, #tpu.memory_space<vmem>>, %arg1: memref<10x64xf32, #tpu.memory_space<vmem>>, %arg2: memref<16x64xf32, #tpu.memory_space<vmem>>, %arg3: memref<10x10xf32, #tpu.memory_space<vmem>>, %arg4: memref<2x10xf32, #tpu.memory_space<vmem>>, %arg5: memref<2x192xf32, #tpu.memory_space<vmem>>, %arg6: memref<2x128xf32, #tpu.memory_space<vmem>>, %arg7: memref<768x64xbf16, #tpu.memory_space<vmem>>, %arg8: memref<2x64x192xbf16, #tpu.memory_space<vmem>>, %arg9: memref<2x4x16x64xbf16, #tpu.memory_space<vmem>>, %arg10: memref<2x64x128xbf16, #tpu.memory_space<vmem>>, %arg11: memref<2x128x64xbf16, #tpu.memory_space<vmem>>, %arg12: memref<64x512xbf16, #tpu.memory_space<vmem>>, %arg13: memref<2x512xf32, #tpu.memory_space<vmem>>) attributes {dimension_semantics = [], scalar_prefetch = 0 : i64, scratch_operands = 0 : i64, tpu.core_type = #tpu.core_type<tc>} {
    %c0 = arith.constant 0 : index
    %c0_0 = arith.constant 0 : index
    %0 = vector.load %arg0[%c0, %c0_0] : memref<10x768xbf16, #tpu.memory_space<vmem>>, vector<10x768xbf16>
    %c0_1 = arith.constant 0 : index
    %c0_2 = arith.constant 0 : index
    %1 = vector.load %arg7[%c0_1, %c0_2] : memref<768x64xbf16, #tpu.memory_space<vmem>>, vector<768x64xbf16>
    %cst = arith.constant dense<0.000000e+00> : vector<10x64xf32>
    %2 = tpu.matmul %0, %1, %cst {dimension_numbers = #tpu.dot_dimension_numbers<[1], [0], [0], [1], [0, 0, 1, 1], [], []>} : vector<10x768xbf16>, vector<768x64xbf16>, vector<10x64xf32> -> vector<10x64xf32>
    %c0_3 = arith.constant 0 : index
    %c0_4 = arith.constant 0 : index
    %3 = vector.load %arg1[%c0_3, %c0_4] : memref<10x64xf32, #tpu.memory_space<vmem>>, vector<10x64xf32>
    %4 = arith.addf %2, %3 : vector<10x64xf32>
    %c0_5 = arith.constant 0 : index
    %c0_6 = arith.constant 0 : index
    %5 = vector.load %arg2[%c0_5, %c0_6] : memref<16x64xf32, #tpu.memory_space<vmem>>, vector<1x64xf32>
    %c1 = arith.constant 1 : index
    %c0_7 = arith.constant 0 : index
    %6 = vector.load %arg2[%c1, %c0_7] : memref<16x64xf32, #tpu.memory_space<vmem>>, vector<1x64xf32>
    %cst_8 = arith.constant dense<0.000000e+00> : vector<10xf32>
    %7 = vector.multi_reduction <add>, %4, %cst_8 [1] : vector<10x64xf32> to vector<10xf32>
    %8 = vector.shape_cast %7 : vector<10xf32> to vector<10x1xf32>
    %cst_9 = arith.constant 6.400000e+01 : f32
    %9 = vector.broadcast %cst_9 : f32 to vector<10x1xf32>
    %10 = arith.divf %8, %9 : vector<10x1xf32>
    %11 = vector.broadcast %10 : vector<10x1xf32> to vector<10x64xf32>
    %12 = arith.subf %4, %11 : vector<10x64xf32>
    %13 = arith.mulf %12, %12 : vector<10x64xf32>
    %cst_10 = arith.constant dense<0.000000e+00> : vector<10xf32>
    %14 = vector.multi_reduction <add>, %13, %cst_10 [1] : vector<10x64xf32> to vector<10xf32>
    %15 = vector.shape_cast %14 : vector<10xf32> to vector<10x1xf32>
    %cst_11 = arith.constant 6.400000e+01 : f32
    %16 = vector.broadcast %cst_11 : f32 to vector<10x1xf32>
    %17 = arith.divf %15, %16 : vector<10x1xf32>
    %18 = vector.broadcast %10 : vector<10x1xf32> to vector<10x64xf32>
    %19 = arith.subf %4, %18 : vector<10x64xf32>
    %cst_12 = arith.constant 9.99999974E-6 : f32
    %20 = vector.broadcast %cst_12 : f32 to vector<10x1xf32>
    %21 = arith.addf %17, %20 : vector<10x1xf32>
    %22 = math.rsqrt %21 : vector<10x1xf32>
    %23 = vector.broadcast %22 : vector<10x1xf32> to vector<10x64xf32>
    %24 = arith.mulf %19, %23 : vector<10x64xf32>
    %25 = vector.broadcast %5 : vector<1x64xf32> to vector<10x64xf32>
    %26 = arith.mulf %24, %25 : vector<10x64xf32>
    %27 = vector.broadcast %6 : vector<1x64xf32> to vector<10x64xf32>
    %28 = arith.addf %26, %27 : vector<10x64xf32>
    %c2 = arith.constant 2 : index
    %c0_13 = arith.constant 0 : index
    %29 = vector.load %arg2[%c2, %c0_13] : memref<16x64xf32, #tpu.memory_space<vmem>>, vector<1x64xf32>
    %c4 = arith.constant 4 : index
    %c0_14 = arith.constant 0 : index
    %30 = vector.load %arg2[%c4, %c0_14] : memref<16x64xf32, #tpu.memory_space<vmem>>, vector<1x64xf32>
    %cst_15 = arith.constant dense<0.000000e+00> : vector<10xf32>
    %31 = vector.multi_reduction <add>, %28, %cst_15 [1] : vector<10x64xf32> to vector<10xf32>
    %32 = vector.shape_cast %31 : vector<10xf32> to vector<10x1xf32>
    %cst_16 = arith.constant 6.400000e+01 : f32
    %33 = vector.broadcast %cst_16 : f32 to vector<10x1xf32>
    %34 = arith.divf %32, %33 : vector<10x1xf32>
    %35 = vector.broadcast %34 : vector<10x1xf32> to vector<10x64xf32>
    %36 = arith.subf %28, %35 : vector<10x64xf32>
    %37 = arith.mulf %36, %36 : vector<10x64xf32>
    %cst_17 = arith.constant dense<0.000000e+00> : vector<10xf32>
    %38 = vector.multi_reduction <add>, %37, %cst_17 [1] : vector<10x64xf32> to vector<10xf32>
    %39 = vector.shape_cast %38 : vector<10xf32> to vector<10x1xf32>
    %cst_18 = arith.constant 6.400000e+01 : f32
    %40 = vector.broadcast %cst_18 : f32 to vector<10x1xf32>
    %41 = arith.divf %39, %40 : vector<10x1xf32>
    %42 = vector.broadcast %34 : vector<10x1xf32> to vector<10x64xf32>
    %43 = arith.subf %28, %42 : vector<10x64xf32>
    %cst_19 = arith.constant 9.99999974E-6 : f32
    %44 = vector.broadcast %cst_19 : f32 to vector<10x1xf32>
    %45 = arith.addf %41, %44 : vector<10x1xf32>
    %46 = math.rsqrt %45 : vector<10x1xf32>
    %47 = vector.broadcast %46 : vector<10x1xf32> to vector<10x64xf32>
    %48 = arith.mulf %43, %47 : vector<10x64xf32>
    %49 = vector.broadcast %29 : vector<1x64xf32> to vector<10x64xf32>
    %50 = arith.mulf %48, %49 : vector<10x64xf32>
    %51 = vector.broadcast %30 : vector<1x64xf32> to vector<10x64xf32>
    %52 = arith.addf %50, %51 : vector<10x64xf32>
    %53 = arith.truncf %52 : vector<10x64xf32> to vector<10x64xbf16>
    %c0_20 = arith.constant 0 : index
    %c0_21 = arith.constant 0 : index
    %c0_22 = arith.constant 0 : index
    %54 = vector.load %arg8[%c0_20, %c0_21, %c0_22] : memref<2x64x192xbf16, #tpu.memory_space<vmem>>, vector<1x64x192xbf16>
    %55 = vector.shape_cast %54 : vector<1x64x192xbf16> to vector<64x192xbf16>
    %cst_23 = arith.constant dense<0.000000e+00> : vector<10x192xf32>
    %56 = tpu.matmul %53, %55, %cst_23 {dimension_numbers = #tpu.dot_dimension_numbers<[1], [0], [0], [1], [0, 0, 1, 1], [], []>} : vector<10x64xbf16>, vector<64x192xbf16>, vector<10x192xf32> -> vector<10x192xf32>
    %c0_24 = arith.constant 0 : index
    %c0_25 = arith.constant 0 : index
    %57 = vector.load %arg5[%c0_24, %c0_25] : memref<2x192xf32, #tpu.memory_space<vmem>>, vector<1x192xf32>
    %58 = vector.broadcast %57 : vector<1x192xf32> to vector<10x192xf32>
    %59 = arith.addf %56, %58 : vector<10x192xf32>
    %60 = vector.extract_strided_slice %59 {offsets = [0, 0], sizes = [10, 64], strides = [1, 1]} : vector<10x192xf32> to vector<10x64xf32>
    %cst_26 = arith.constant 2.500000e-01 : f32
    %61 = vector.broadcast %cst_26 : f32 to vector<10x64xf32>
    %62 = arith.mulf %60, %61 : vector<10x64xf32>
    %63 = vector.extract_strided_slice %59 {offsets = [0, 64], sizes = [10, 64], strides = [1, 1]} : vector<10x192xf32> to vector<10x64xf32>
    %64 = vector.extract_strided_slice %59 {offsets = [0, 128], sizes = [10, 64], strides = [1, 1]} : vector<10x192xf32> to vector<10x64xf32>
    %65 = vector.extract_strided_slice %62 {offsets = [0, 0], sizes = [10, 16], strides = [1, 1]} : vector<10x64xf32> to vector<10x16xf32>
    %66 = vector.extract_strided_slice %62 {offsets = [0, 16], sizes = [10, 16], strides = [1, 1]} : vector<10x64xf32> to vector<10x16xf32>
    %67 = vector.extract_strided_slice %62 {offsets = [0, 32], sizes = [10, 16], strides = [1, 1]} : vector<10x64xf32> to vector<10x16xf32>
    %68 = vector.extract_strided_slice %62 {offsets = [0, 48], sizes = [10, 16], strides = [1, 1]} : vector<10x64xf32> to vector<10x16xf32>
    %69 = vector.shape_cast %65 : vector<10x16xf32> to vector<1x10x16xf32>
    %70 = vector.shape_cast %66 : vector<10x16xf32> to vector<1x10x16xf32>
    %71 = vector.shape_cast %67 : vector<10x16xf32> to vector<1x10x16xf32>
    %72 = vector.shape_cast %68 : vector<10x16xf32> to vector<1x10x16xf32>
    %73 = tpu.concatenate %69, %70, %71, %72 in 0 : vector<1x10x16xf32>, vector<1x10x16xf32>, vector<1x10x16xf32>, vector<1x10x16xf32> -> vector<4x10x16xf32>
    %74 = arith.truncf %73 : vector<4x10x16xf32> to vector<4x10x16xbf16>
    %75 = vector.extract_strided_slice %63 {offsets = [0, 0], sizes = [10, 16], strides = [1, 1]} : vector<10x64xf32> to vector<10x16xf32>
    %76 = vector.extract_strided_slice %63 {offsets = [0, 16], sizes = [10, 16], strides = [1, 1]} : vector<10x64xf32> to vector<10x16xf32>
    %77 = vector.extract_strided_slice %63 {offsets = [0, 32], sizes = [10, 16], strides = [1, 1]} : vector<10x64xf32> to vector<10x16xf32>
    %78 = vector.extract_strided_slice %63 {offsets = [0, 48], sizes = [10, 16], strides = [1, 1]} : vector<10x64xf32> to vector<10x16xf32>
    %79 = vector.shape_cast %75 : vector<10x16xf32> to vector<1x10x16xf32>
    %80 = vector.shape_cast %76 : vector<10x16xf32> to vector<1x10x16xf32>
    %81 = vector.shape_cast %77 : vector<10x16xf32> to vector<1x10x16xf32>
    %82 = vector.shape_cast %78 : vector<10x16xf32> to vector<1x10x16xf32>
    %83 = tpu.concatenate %79, %80, %81, %82 in 0 : vector<1x10x16xf32>, vector<1x10x16xf32>, vector<1x10x16xf32>, vector<1x10x16xf32> -> vector<4x10x16xf32>
    %84 = arith.truncf %83 : vector<4x10x16xf32> to vector<4x10x16xbf16>
    %85 = vector.extract_strided_slice %64 {offsets = [0, 0], sizes = [10, 16], strides = [1, 1]} : vector<10x64xf32> to vector<10x16xf32>
    %86 = vector.extract_strided_slice %64 {offsets = [0, 16], sizes = [10, 16], strides = [1, 1]} : vector<10x64xf32> to vector<10x16xf32>
    %87 = vector.extract_strided_slice %64 {offsets = [0, 32], sizes = [10, 16], strides = [1, 1]} : vector<10x64xf32> to vector<10x16xf32>
    %88 = vector.extract_strided_slice %64 {offsets = [0, 48], sizes = [10, 16], strides = [1, 1]} : vector<10x64xf32> to vector<10x16xf32>
    %89 = vector.shape_cast %85 : vector<10x16xf32> to vector<1x10x16xf32>
    %90 = vector.shape_cast %86 : vector<10x16xf32> to vector<1x10x16xf32>
    %91 = vector.shape_cast %87 : vector<10x16xf32> to vector<1x10x16xf32>
    %92 = vector.shape_cast %88 : vector<10x16xf32> to vector<1x10x16xf32>
    %93 = tpu.concatenate %89, %90, %91, %92 in 0 : vector<1x10x16xf32>, vector<1x10x16xf32>, vector<1x10x16xf32>, vector<1x10x16xf32> -> vector<4x10x16xf32>
    %94 = arith.truncf %93 : vector<4x10x16xf32> to vector<4x10x16xbf16>
    "tpu.trace_start"() <{level = 10 : i32, message = "hsd,htd->hst"}> : () -> ()
    %cst_27 = arith.constant dense<0.000000e+00> : vector<4x10x10xf32>
    %95 = tpu.matmul %74, %84, %cst_27 {dimension_numbers = #tpu.dot_dimension_numbers<[2], [2], [1], [1], [0, 0, 0, 1, 1, 1], [0], [0]>} : vector<4x10x16xbf16>, vector<4x10x16xbf16>, vector<4x10x10xf32> -> vector<4x10x10xf32>
    "tpu.trace_stop"() : () -> ()
    %c0_28 = arith.constant 0 : index
    %c0_29 = arith.constant 0 : index
    %96 = vector.load %arg3[%c0_28, %c0_29] : memref<10x10xf32, #tpu.memory_space<vmem>>, vector<10x10xf32>
    %97 = vector.shape_cast %96 : vector<10x10xf32> to vector<1x10x10xf32>
    %98 = vector.broadcast %97 : vector<1x10x10xf32> to vector<4x10x10xf32>
    %99 = arith.addf %95, %98 : vector<4x10x10xf32>
    %cst_30 = arith.constant dense<0xFF800000> : vector<4x10xf32>
    %100 = vector.multi_reduction <maximumf>, %99, %cst_30 [2] : vector<4x10x10xf32> to vector<4x10xf32>
    %101 = vector.shape_cast %100 : vector<4x10xf32> to vector<4x10x1xf32>
    %102 = vector.broadcast %101 : vector<4x10x1xf32> to vector<4x10x10xf32>
    %103 = arith.subf %99, %102 : vector<4x10x10xf32>
    %104 = math.exp %103 : vector<4x10x10xf32>
    %cst_31 = arith.constant dense<0.000000e+00> : vector<4x10xf32>
    %105 = vector.multi_reduction <add>, %104, %cst_31 [2] : vector<4x10x10xf32> to vector<4x10xf32>
    %106 = vector.shape_cast %105 : vector<4x10xf32> to vector<4x10x1xf32>
    %107 = tpu.reciprocal %106 {approx = true} : vector<4x10x1xf32> -> vector<4x10x1xf32>
    %108 = vector.broadcast %107 : vector<4x10x1xf32> to vector<4x10x10xf32>
    %109 = arith.mulf %104, %108 : vector<4x10x10xf32>
    %110 = arith.truncf %109 : vector<4x10x10xf32> to vector<4x10x10xbf16>
    "tpu.trace_start"() <{level = 10 : i32, message = "hst,htd->hsd"}> : () -> ()
    %cst_32 = arith.constant dense<0.000000e+00> : vector<4x10x16xf32>
    %111 = tpu.matmul %110, %94, %cst_32 {dimension_numbers = #tpu.dot_dimension_numbers<[2], [1], [1], [2], [0, 0, 0, 1, 1, 2], [0], [0]>} : vector<4x10x10xbf16>, vector<4x10x16xbf16>, vector<4x10x16xf32> -> vector<4x10x16xf32>
    "tpu.trace_stop"() : () -> ()
    %112 = arith.truncf %111 : vector<4x10x16xf32> to vector<4x10x16xbf16>
    %c0_33 = arith.constant 0 : index
    %c0_34 = arith.constant 0 : index
    %c0_35 = arith.constant 0 : index
    %c0_36 = arith.constant 0 : index
    %113 = vector.load %arg9[%c0_33, %c0_34, %c0_35, %c0_36] : memref<2x4x16x64xbf16, #tpu.memory_space<vmem>>, vector<1x4x16x64xbf16>
    %114 = vector.shape_cast %113 : vector<1x4x16x64xbf16> to vector<4x16x64xbf16>
    "tpu.trace_start"() <{level = 10 : i32, message = "hsd,hde->hse"}> : () -> ()
    %cst_37 = arith.constant dense<0.000000e+00> : vector<4x10x64xf32>
    %115 = tpu.matmul %112, %114, %cst_37 {dimension_numbers = #tpu.dot_dimension_numbers<[2], [1], [1], [2], [0, 0, 0, 1, 1, 2], [0], [0]>} : vector<4x10x16xbf16>, vector<4x16x64xbf16>, vector<4x10x64xf32> -> vector<4x10x64xf32>
    "tpu.trace_stop"() : () -> ()
    %116 = vector.extract_strided_slice %115 {offsets = [0, 0, 0], sizes = [1, 10, 64], strides = [1, 1, 1]} : vector<4x10x64xf32> to vector<1x10x64xf32>
    %117 = vector.shape_cast %116 : vector<1x10x64xf32> to vector<10x64xf32>
    %118 = vector.extract_strided_slice %115 {offsets = [1, 0, 0], sizes = [1, 10, 64], strides = [1, 1, 1]} : vector<4x10x64xf32> to vector<1x10x64xf32>
    %119 = vector.shape_cast %118 : vector<1x10x64xf32> to vector<10x64xf32>
    %120 = arith.addf %117, %119 : vector<10x64xf32>
    %121 = vector.extract_strided_slice %115 {offsets = [2, 0, 0], sizes = [1, 10, 64], strides = [1, 1, 1]} : vector<4x10x64xf32> to vector<1x10x64xf32>
    %122 = vector.shape_cast %121 : vector<1x10x64xf32> to vector<10x64xf32>
    %123 = arith.addf %120, %122 : vector<10x64xf32>
    %124 = vector.extract_strided_slice %115 {offsets = [3, 0, 0], sizes = [1, 10, 64], strides = [1, 1, 1]} : vector<4x10x64xf32> to vector<1x10x64xf32>
    %125 = vector.shape_cast %124 : vector<1x10x64xf32> to vector<10x64xf32>
    %126 = arith.addf %123, %125 : vector<10x64xf32>
    %127 = arith.addf %28, %126 : vector<10x64xf32>
    %c10 = arith.constant 10 : index
    %c0_38 = arith.constant 0 : index
    %128 = vector.load %arg2[%c10, %c0_38] : memref<16x64xf32, #tpu.memory_space<vmem>>, vector<1x64xf32>
    %129 = vector.broadcast %128 : vector<1x64xf32> to vector<10x64xf32>
    %130 = arith.addf %127, %129 : vector<10x64xf32>
    %c6 = arith.constant 6 : index
    %c0_39 = arith.constant 0 : index
    %131 = vector.load %arg2[%c6, %c0_39] : memref<16x64xf32, #tpu.memory_space<vmem>>, vector<1x64xf32>
    %c8 = arith.constant 8 : index
    %c0_40 = arith.constant 0 : index
    %132 = vector.load %arg2[%c8, %c0_40] : memref<16x64xf32, #tpu.memory_space<vmem>>, vector<1x64xf32>
    %cst_41 = arith.constant dense<0.000000e+00> : vector<10xf32>
    %133 = vector.multi_reduction <add>, %130, %cst_41 [1] : vector<10x64xf32> to vector<10xf32>
    %134 = vector.shape_cast %133 : vector<10xf32> to vector<10x1xf32>
    %cst_42 = arith.constant 6.400000e+01 : f32
    %135 = vector.broadcast %cst_42 : f32 to vector<10x1xf32>
    %136 = arith.divf %134, %135 : vector<10x1xf32>
    %137 = vector.broadcast %136 : vector<10x1xf32> to vector<10x64xf32>
    %138 = arith.subf %130, %137 : vector<10x64xf32>
    %139 = arith.mulf %138, %138 : vector<10x64xf32>
    %cst_43 = arith.constant dense<0.000000e+00> : vector<10xf32>
    %140 = vector.multi_reduction <add>, %139, %cst_43 [1] : vector<10x64xf32> to vector<10xf32>
    %141 = vector.shape_cast %140 : vector<10xf32> to vector<10x1xf32>
    %cst_44 = arith.constant 6.400000e+01 : f32
    %142 = vector.broadcast %cst_44 : f32 to vector<10x1xf32>
    %143 = arith.divf %141, %142 : vector<10x1xf32>
    %144 = vector.broadcast %136 : vector<10x1xf32> to vector<10x64xf32>
    %145 = arith.subf %130, %144 : vector<10x64xf32>
    %cst_45 = arith.constant 9.99999974E-6 : f32
    %146 = vector.broadcast %cst_45 : f32 to vector<10x1xf32>
    %147 = arith.addf %143, %146 : vector<10x1xf32>
    %148 = math.rsqrt %147 : vector<10x1xf32>
    %149 = vector.broadcast %148 : vector<10x1xf32> to vector<10x64xf32>
    %150 = arith.mulf %145, %149 : vector<10x64xf32>
    %151 = vector.broadcast %131 : vector<1x64xf32> to vector<10x64xf32>
    %152 = arith.mulf %150, %151 : vector<10x64xf32>
    %153 = vector.broadcast %132 : vector<1x64xf32> to vector<10x64xf32>
    %154 = arith.addf %152, %153 : vector<10x64xf32>
    %155 = arith.truncf %154 : vector<10x64xf32> to vector<10x64xbf16>
    %c0_46 = arith.constant 0 : index
    %c0_47 = arith.constant 0 : index
    %c0_48 = arith.constant 0 : index
    %156 = vector.load %arg10[%c0_46, %c0_47, %c0_48] : memref<2x64x128xbf16, #tpu.memory_space<vmem>>, vector<1x64x128xbf16>
    %157 = vector.shape_cast %156 : vector<1x64x128xbf16> to vector<64x128xbf16>
    %cst_49 = arith.constant dense<0.000000e+00> : vector<10x128xf32>
    %158 = tpu.matmul %155, %157, %cst_49 {dimension_numbers = #tpu.dot_dimension_numbers<[1], [0], [0], [1], [0, 0, 1, 1], [], []>} : vector<10x64xbf16>, vector<64x128xbf16>, vector<10x128xf32> -> vector<10x128xf32>
    %c0_50 = arith.constant 0 : index
    %c0_51 = arith.constant 0 : index
    %159 = vector.load %arg6[%c0_50, %c0_51] : memref<2x128xf32, #tpu.memory_space<vmem>>, vector<1x128xf32>
    %160 = vector.broadcast %159 : vector<1x128xf32> to vector<10x128xf32>
    %161 = arith.addf %158, %160 : vector<10x128xf32>
    %cst_52 = arith.constant 1.702000e+00 : f32
    %162 = vector.broadcast %cst_52 : f32 to vector<10x128xf32>
    %163 = arith.mulf %162, %161 : vector<10x128xf32>
    %164 = arith.negf %163 : vector<10x128xf32>
    %165 = math.exp %164 : vector<10x128xf32>
    %cst_53 = arith.constant 1.000000e+00 : f32
    %166 = vector.broadcast %cst_53 : f32 to vector<10x128xf32>
    %167 = arith.addf %166, %165 : vector<10x128xf32>
    %168 = arith.divf %166, %167 : vector<10x128xf32>
    %169 = arith.mulf %161, %168 : vector<10x128xf32>
    %170 = arith.truncf %169 : vector<10x128xf32> to vector<10x128xbf16>
    %c0_54 = arith.constant 0 : index
    %c0_55 = arith.constant 0 : index
    %c0_56 = arith.constant 0 : index
    %171 = vector.load %arg11[%c0_54, %c0_55, %c0_56] : memref<2x128x64xbf16, #tpu.memory_space<vmem>>, vector<1x128x64xbf16>
    %172 = vector.shape_cast %171 : vector<1x128x64xbf16> to vector<128x64xbf16>
    %cst_57 = arith.constant dense<0.000000e+00> : vector<10x64xf32>
    %173 = tpu.matmul %170, %172, %cst_57 {dimension_numbers = #tpu.dot_dimension_numbers<[1], [0], [0], [1], [0, 0, 1, 1], [], []>} : vector<10x128xbf16>, vector<128x64xbf16>, vector<10x64xf32> -> vector<10x64xf32>
    %c12 = arith.constant 12 : index
    %c0_58 = arith.constant 0 : index
    %174 = vector.load %arg2[%c12, %c0_58] : memref<16x64xf32, #tpu.memory_space<vmem>>, vector<1x64xf32>
    %175 = vector.broadcast %174 : vector<1x64xf32> to vector<10x64xf32>
    %176 = arith.addf %173, %175 : vector<10x64xf32>
    %177 = arith.addf %130, %176 : vector<10x64xf32>
    %c3 = arith.constant 3 : index
    %c0_59 = arith.constant 0 : index
    %178 = vector.load %arg2[%c3, %c0_59] : memref<16x64xf32, #tpu.memory_space<vmem>>, vector<1x64xf32>
    %c5 = arith.constant 5 : index
    %c0_60 = arith.constant 0 : index
    %179 = vector.load %arg2[%c5, %c0_60] : memref<16x64xf32, #tpu.memory_space<vmem>>, vector<1x64xf32>
    %cst_61 = arith.constant dense<0.000000e+00> : vector<10xf32>
    %180 = vector.multi_reduction <add>, %177, %cst_61 [1] : vector<10x64xf32> to vector<10xf32>
    %181 = vector.shape_cast %180 : vector<10xf32> to vector<10x1xf32>
    %cst_62 = arith.constant 6.400000e+01 : f32
    %182 = vector.broadcast %cst_62 : f32 to vector<10x1xf32>
    %183 = arith.divf %181, %182 : vector<10x1xf32>
    %184 = vector.broadcast %183 : vector<10x1xf32> to vector<10x64xf32>
    %185 = arith.subf %177, %184 : vector<10x64xf32>
    %186 = arith.mulf %185, %185 : vector<10x64xf32>
    %cst_63 = arith.constant dense<0.000000e+00> : vector<10xf32>
    %187 = vector.multi_reduction <add>, %186, %cst_63 [1] : vector<10x64xf32> to vector<10xf32>
    %188 = vector.shape_cast %187 : vector<10xf32> to vector<10x1xf32>
    %cst_64 = arith.constant 6.400000e+01 : f32
    %189 = vector.broadcast %cst_64 : f32 to vector<10x1xf32>
    %190 = arith.divf %188, %189 : vector<10x1xf32>
    %191 = vector.broadcast %183 : vector<10x1xf32> to vector<10x64xf32>
    %192 = arith.subf %177, %191 : vector<10x64xf32>
    %cst_65 = arith.constant 9.99999974E-6 : f32
    %193 = vector.broadcast %cst_65 : f32 to vector<10x1xf32>
    %194 = arith.addf %190, %193 : vector<10x1xf32>
    %195 = math.rsqrt %194 : vector<10x1xf32>
    %196 = vector.broadcast %195 : vector<10x1xf32> to vector<10x64xf32>
    %197 = arith.mulf %192, %196 : vector<10x64xf32>
    %198 = vector.broadcast %178 : vector<1x64xf32> to vector<10x64xf32>
    %199 = arith.mulf %197, %198 : vector<10x64xf32>
    %200 = vector.broadcast %179 : vector<1x64xf32> to vector<10x64xf32>
    %201 = arith.addf %199, %200 : vector<10x64xf32>
    %202 = arith.truncf %201 : vector<10x64xf32> to vector<10x64xbf16>
    %c1_66 = arith.constant 1 : index
    %c0_67 = arith.constant 0 : index
    %c0_68 = arith.constant 0 : index
    %203 = vector.load %arg8[%c1_66, %c0_67, %c0_68] : memref<2x64x192xbf16, #tpu.memory_space<vmem>>, vector<1x64x192xbf16>
    %204 = vector.shape_cast %203 : vector<1x64x192xbf16> to vector<64x192xbf16>
    %cst_69 = arith.constant dense<0.000000e+00> : vector<10x192xf32>
    %205 = tpu.matmul %202, %204, %cst_69 {dimension_numbers = #tpu.dot_dimension_numbers<[1], [0], [0], [1], [0, 0, 1, 1], [], []>} : vector<10x64xbf16>, vector<64x192xbf16>, vector<10x192xf32> -> vector<10x192xf32>
    %c1_70 = arith.constant 1 : index
    %c0_71 = arith.constant 0 : index
    %206 = vector.load %arg5[%c1_70, %c0_71] : memref<2x192xf32, #tpu.memory_space<vmem>>, vector<1x192xf32>
    %207 = vector.broadcast %206 : vector<1x192xf32> to vector<10x192xf32>
    %208 = arith.addf %205, %207 : vector<10x192xf32>
    %209 = vector.extract_strided_slice %208 {offsets = [0, 0], sizes = [10, 64], strides = [1, 1]} : vector<10x192xf32> to vector<10x64xf32>
    %cst_72 = arith.constant 2.500000e-01 : f32
    %210 = vector.broadcast %cst_72 : f32 to vector<10x64xf32>
    %211 = arith.mulf %209, %210 : vector<10x64xf32>
    %212 = vector.extract_strided_slice %208 {offsets = [0, 64], sizes = [10, 64], strides = [1, 1]} : vector<10x192xf32> to vector<10x64xf32>
    %213 = vector.extract_strided_slice %208 {offsets = [0, 128], sizes = [10, 64], strides = [1, 1]} : vector<10x192xf32> to vector<10x64xf32>
    %214 = vector.extract_strided_slice %211 {offsets = [0, 0], sizes = [10, 16], strides = [1, 1]} : vector<10x64xf32> to vector<10x16xf32>
    %215 = vector.extract_strided_slice %211 {offsets = [0, 16], sizes = [10, 16], strides = [1, 1]} : vector<10x64xf32> to vector<10x16xf32>
    %216 = vector.extract_strided_slice %211 {offsets = [0, 32], sizes = [10, 16], strides = [1, 1]} : vector<10x64xf32> to vector<10x16xf32>
    %217 = vector.extract_strided_slice %211 {offsets = [0, 48], sizes = [10, 16], strides = [1, 1]} : vector<10x64xf32> to vector<10x16xf32>
    %218 = vector.shape_cast %214 : vector<10x16xf32> to vector<1x10x16xf32>
    %219 = vector.shape_cast %215 : vector<10x16xf32> to vector<1x10x16xf32>
    %220 = vector.shape_cast %216 : vector<10x16xf32> to vector<1x10x16xf32>
    %221 = vector.shape_cast %217 : vector<10x16xf32> to vector<1x10x16xf32>
    %222 = tpu.concatenate %218, %219, %220, %221 in 0 : vector<1x10x16xf32>, vector<1x10x16xf32>, vector<1x10x16xf32>, vector<1x10x16xf32> -> vector<4x10x16xf32>
    %223 = arith.truncf %222 : vector<4x10x16xf32> to vector<4x10x16xbf16>
    %224 = vector.extract_strided_slice %212 {offsets = [0, 0], sizes = [10, 16], strides = [1, 1]} : vector<10x64xf32> to vector<10x16xf32>
    %225 = vector.extract_strided_slice %212 {offsets = [0, 16], sizes = [10, 16], strides = [1, 1]} : vector<10x64xf32> to vector<10x16xf32>
    %226 = vector.extract_strided_slice %212 {offsets = [0, 32], sizes = [10, 16], strides = [1, 1]} : vector<10x64xf32> to vector<10x16xf32>
    %227 = vector.extract_strided_slice %212 {offsets = [0, 48], sizes = [10, 16], strides = [1, 1]} : vector<10x64xf32> to vector<10x16xf32>
    %228 = vector.shape_cast %224 : vector<10x16xf32> to vector<1x10x16xf32>
    %229 = vector.shape_cast %225 : vector<10x16xf32> to vector<1x10x16xf32>
    %230 = vector.shape_cast %226 : vector<10x16xf32> to vector<1x10x16xf32>
    %231 = vector.shape_cast %227 : vector<10x16xf32> to vector<1x10x16xf32>
    %232 = tpu.concatenate %228, %229, %230, %231 in 0 : vector<1x10x16xf32>, vector<1x10x16xf32>, vector<1x10x16xf32>, vector<1x10x16xf32> -> vector<4x10x16xf32>
    %233 = arith.truncf %232 : vector<4x10x16xf32> to vector<4x10x16xbf16>
    %234 = vector.extract_strided_slice %213 {offsets = [0, 0], sizes = [10, 16], strides = [1, 1]} : vector<10x64xf32> to vector<10x16xf32>
    %235 = vector.extract_strided_slice %213 {offsets = [0, 16], sizes = [10, 16], strides = [1, 1]} : vector<10x64xf32> to vector<10x16xf32>
    %236 = vector.extract_strided_slice %213 {offsets = [0, 32], sizes = [10, 16], strides = [1, 1]} : vector<10x64xf32> to vector<10x16xf32>
    %237 = vector.extract_strided_slice %213 {offsets = [0, 48], sizes = [10, 16], strides = [1, 1]} : vector<10x64xf32> to vector<10x16xf32>
    %238 = vector.shape_cast %234 : vector<10x16xf32> to vector<1x10x16xf32>
    %239 = vector.shape_cast %235 : vector<10x16xf32> to vector<1x10x16xf32>
    %240 = vector.shape_cast %236 : vector<10x16xf32> to vector<1x10x16xf32>
    %241 = vector.shape_cast %237 : vector<10x16xf32> to vector<1x10x16xf32>
    %242 = tpu.concatenate %238, %239, %240, %241 in 0 : vector<1x10x16xf32>, vector<1x10x16xf32>, vector<1x10x16xf32>, vector<1x10x16xf32> -> vector<4x10x16xf32>
    %243 = arith.truncf %242 : vector<4x10x16xf32> to vector<4x10x16xbf16>
    "tpu.trace_start"() <{level = 10 : i32, message = "hsd,htd->hst"}> : () -> ()
    %cst_73 = arith.constant dense<0.000000e+00> : vector<4x10x10xf32>
    %244 = tpu.matmul %223, %233, %cst_73 {dimension_numbers = #tpu.dot_dimension_numbers<[2], [2], [1], [1], [0, 0, 0, 1, 1, 1], [0], [0]>} : vector<4x10x16xbf16>, vector<4x10x16xbf16>, vector<4x10x10xf32> -> vector<4x10x10xf32>
    "tpu.trace_stop"() : () -> ()
    %c0_74 = arith.constant 0 : index
    %c0_75 = arith.constant 0 : index
    %245 = vector.load %arg3[%c0_74, %c0_75] : memref<10x10xf32, #tpu.memory_space<vmem>>, vector<10x10xf32>
    %246 = vector.shape_cast %245 : vector<10x10xf32> to vector<1x10x10xf32>
    %247 = vector.broadcast %246 : vector<1x10x10xf32> to vector<4x10x10xf32>
    %248 = arith.addf %244, %247 : vector<4x10x10xf32>
    %cst_76 = arith.constant dense<0xFF800000> : vector<4x10xf32>
    %249 = vector.multi_reduction <maximumf>, %248, %cst_76 [2] : vector<4x10x10xf32> to vector<4x10xf32>
    %250 = vector.shape_cast %249 : vector<4x10xf32> to vector<4x10x1xf32>
    %251 = vector.broadcast %250 : vector<4x10x1xf32> to vector<4x10x10xf32>
    %252 = arith.subf %248, %251 : vector<4x10x10xf32>
    %253 = math.exp %252 : vector<4x10x10xf32>
    %cst_77 = arith.constant dense<0.000000e+00> : vector<4x10xf32>
    %254 = vector.multi_reduction <add>, %253, %cst_77 [2] : vector<4x10x10xf32> to vector<4x10xf32>
    %255 = vector.shape_cast %254 : vector<4x10xf32> to vector<4x10x1xf32>
    %256 = tpu.reciprocal %255 {approx = true} : vector<4x10x1xf32> -> vector<4x10x1xf32>
    %257 = vector.broadcast %256 : vector<4x10x1xf32> to vector<4x10x10xf32>
    %258 = arith.mulf %253, %257 : vector<4x10x10xf32>
    %259 = arith.truncf %258 : vector<4x10x10xf32> to vector<4x10x10xbf16>
    "tpu.trace_start"() <{level = 10 : i32, message = "hst,htd->hsd"}> : () -> ()
    %cst_78 = arith.constant dense<0.000000e+00> : vector<4x10x16xf32>
    %260 = tpu.matmul %259, %243, %cst_78 {dimension_numbers = #tpu.dot_dimension_numbers<[2], [1], [1], [2], [0, 0, 0, 1, 1, 2], [0], [0]>} : vector<4x10x10xbf16>, vector<4x10x16xbf16>, vector<4x10x16xf32> -> vector<4x10x16xf32>
    "tpu.trace_stop"() : () -> ()
    %261 = arith.truncf %260 : vector<4x10x16xf32> to vector<4x10x16xbf16>
    %c1_79 = arith.constant 1 : index
    %c0_80 = arith.constant 0 : index
    %c0_81 = arith.constant 0 : index
    %c0_82 = arith.constant 0 : index
    %262 = vector.load %arg9[%c1_79, %c0_80, %c0_81, %c0_82] : memref<2x4x16x64xbf16, #tpu.memory_space<vmem>>, vector<1x4x16x64xbf16>
    %263 = vector.shape_cast %262 : vector<1x4x16x64xbf16> to vector<4x16x64xbf16>
    "tpu.trace_start"() <{level = 10 : i32, message = "hsd,hde->hse"}> : () -> ()
    %cst_83 = arith.constant dense<0.000000e+00> : vector<4x10x64xf32>
    %264 = tpu.matmul %261, %263, %cst_83 {dimension_numbers = #tpu.dot_dimension_numbers<[2], [1], [1], [2], [0, 0, 0, 1, 1, 2], [0], [0]>} : vector<4x10x16xbf16>, vector<4x16x64xbf16>, vector<4x10x64xf32> -> vector<4x10x64xf32>
    "tpu.trace_stop"() : () -> ()
    %265 = vector.extract_strided_slice %264 {offsets = [0, 0, 0], sizes = [1, 10, 64], strides = [1, 1, 1]} : vector<4x10x64xf32> to vector<1x10x64xf32>
    %266 = vector.shape_cast %265 : vector<1x10x64xf32> to vector<10x64xf32>
    %267 = vector.extract_strided_slice %264 {offsets = [1, 0, 0], sizes = [1, 10, 64], strides = [1, 1, 1]} : vector<4x10x64xf32> to vector<1x10x64xf32>
    %268 = vector.shape_cast %267 : vector<1x10x64xf32> to vector<10x64xf32>
    %269 = arith.addf %266, %268 : vector<10x64xf32>
    %270 = vector.extract_strided_slice %264 {offsets = [2, 0, 0], sizes = [1, 10, 64], strides = [1, 1, 1]} : vector<4x10x64xf32> to vector<1x10x64xf32>
    %271 = vector.shape_cast %270 : vector<1x10x64xf32> to vector<10x64xf32>
    %272 = arith.addf %269, %271 : vector<10x64xf32>
    %273 = vector.extract_strided_slice %264 {offsets = [3, 0, 0], sizes = [1, 10, 64], strides = [1, 1, 1]} : vector<4x10x64xf32> to vector<1x10x64xf32>
    %274 = vector.shape_cast %273 : vector<1x10x64xf32> to vector<10x64xf32>
    %275 = arith.addf %272, %274 : vector<10x64xf32>
    %276 = arith.addf %177, %275 : vector<10x64xf32>
    %c11 = arith.constant 11 : index
    %c0_84 = arith.constant 0 : index
    %277 = vector.load %arg2[%c11, %c0_84] : memref<16x64xf32, #tpu.memory_space<vmem>>, vector<1x64xf32>
    %278 = vector.broadcast %277 : vector<1x64xf32> to vector<10x64xf32>
    %279 = arith.addf %276, %278 : vector<10x64xf32>
    %c7 = arith.constant 7 : index
    %c0_85 = arith.constant 0 : index
    %280 = vector.load %arg2[%c7, %c0_85] : memref<16x64xf32, #tpu.memory_space<vmem>>, vector<1x64xf32>
    %c9 = arith.constant 9 : index
    %c0_86 = arith.constant 0 : index
    %281 = vector.load %arg2[%c9, %c0_86] : memref<16x64xf32, #tpu.memory_space<vmem>>, vector<1x64xf32>
    %cst_87 = arith.constant dense<0.000000e+00> : vector<10xf32>
    %282 = vector.multi_reduction <add>, %279, %cst_87 [1] : vector<10x64xf32> to vector<10xf32>
    %283 = vector.shape_cast %282 : vector<10xf32> to vector<10x1xf32>
    %cst_88 = arith.constant 6.400000e+01 : f32
    %284 = vector.broadcast %cst_88 : f32 to vector<10x1xf32>
    %285 = arith.divf %283, %284 : vector<10x1xf32>
    %286 = vector.broadcast %285 : vector<10x1xf32> to vector<10x64xf32>
    %287 = arith.subf %279, %286 : vector<10x64xf32>
    %288 = arith.mulf %287, %287 : vector<10x64xf32>
    %cst_89 = arith.constant dense<0.000000e+00> : vector<10xf32>
    %289 = vector.multi_reduction <add>, %288, %cst_89 [1] : vector<10x64xf32> to vector<10xf32>
    %290 = vector.shape_cast %289 : vector<10xf32> to vector<10x1xf32>
    %cst_90 = arith.constant 6.400000e+01 : f32
    %291 = vector.broadcast %cst_90 : f32 to vector<10x1xf32>
    %292 = arith.divf %290, %291 : vector<10x1xf32>
    %293 = vector.broadcast %285 : vector<10x1xf32> to vector<10x64xf32>
    %294 = arith.subf %279, %293 : vector<10x64xf32>
    %cst_91 = arith.constant 9.99999974E-6 : f32
    %295 = vector.broadcast %cst_91 : f32 to vector<10x1xf32>
    %296 = arith.addf %292, %295 : vector<10x1xf32>
    %297 = math.rsqrt %296 : vector<10x1xf32>
    %298 = vector.broadcast %297 : vector<10x1xf32> to vector<10x64xf32>
    %299 = arith.mulf %294, %298 : vector<10x64xf32>
    %300 = vector.broadcast %280 : vector<1x64xf32> to vector<10x64xf32>
    %301 = arith.mulf %299, %300 : vector<10x64xf32>
    %302 = vector.broadcast %281 : vector<1x64xf32> to vector<10x64xf32>
    %303 = arith.addf %301, %302 : vector<10x64xf32>
    %304 = arith.truncf %303 : vector<10x64xf32> to vector<10x64xbf16>
    %c1_92 = arith.constant 1 : index
    %c0_93 = arith.constant 0 : index
    %c0_94 = arith.constant 0 : index
    %305 = vector.load %arg10[%c1_92, %c0_93, %c0_94] : memref<2x64x128xbf16, #tpu.memory_space<vmem>>, vector<1x64x128xbf16>
    %306 = vector.shape_cast %305 : vector<1x64x128xbf16> to vector<64x128xbf16>
    %cst_95 = arith.constant dense<0.000000e+00> : vector<10x128xf32>
    %307 = tpu.matmul %304, %306, %cst_95 {dimension_numbers = #tpu.dot_dimension_numbers<[1], [0], [0], [1], [0, 0, 1, 1], [], []>} : vector<10x64xbf16>, vector<64x128xbf16>, vector<10x128xf32> -> vector<10x128xf32>
    %c1_96 = arith.constant 1 : index
    %c0_97 = arith.constant 0 : index
    %308 = vector.load %arg6[%c1_96, %c0_97] : memref<2x128xf32, #tpu.memory_space<vmem>>, vector<1x128xf32>
    %309 = vector.broadcast %308 : vector<1x128xf32> to vector<10x128xf32>
    %310 = arith.addf %307, %309 : vector<10x128xf32>
    %cst_98 = arith.constant 1.702000e+00 : f32
    %311 = vector.broadcast %cst_98 : f32 to vector<10x128xf32>
    %312 = arith.mulf %311, %310 : vector<10x128xf32>
    %313 = arith.negf %312 : vector<10x128xf32>
    %314 = math.exp %313 : vector<10x128xf32>
    %cst_99 = arith.constant 1.000000e+00 : f32
    %315 = vector.broadcast %cst_99 : f32 to vector<10x128xf32>
    %316 = arith.addf %315, %314 : vector<10x128xf32>
    %317 = arith.divf %315, %316 : vector<10x128xf32>
    %318 = arith.mulf %310, %317 : vector<10x128xf32>
    %319 = arith.truncf %318 : vector<10x128xf32> to vector<10x128xbf16>
    %c1_100 = arith.constant 1 : index
    %c0_101 = arith.constant 0 : index
    %c0_102 = arith.constant 0 : index
    %320 = vector.load %arg11[%c1_100, %c0_101, %c0_102] : memref<2x128x64xbf16, #tpu.memory_space<vmem>>, vector<1x128x64xbf16>
    %321 = vector.shape_cast %320 : vector<1x128x64xbf16> to vector<128x64xbf16>
    %cst_103 = arith.constant dense<0.000000e+00> : vector<10x64xf32>
    %322 = tpu.matmul %319, %321, %cst_103 {dimension_numbers = #tpu.dot_dimension_numbers<[1], [0], [0], [1], [0, 0, 1, 1], [], []>} : vector<10x128xbf16>, vector<128x64xbf16>, vector<10x64xf32> -> vector<10x64xf32>
    %c13 = arith.constant 13 : index
    %c0_104 = arith.constant 0 : index
    %323 = vector.load %arg2[%c13, %c0_104] : memref<16x64xf32, #tpu.memory_space<vmem>>, vector<1x64xf32>
    %324 = vector.broadcast %323 : vector<1x64xf32> to vector<10x64xf32>
    %325 = arith.addf %322, %324 : vector<10x64xf32>
    %326 = arith.addf %279, %325 : vector<10x64xf32>
    %c0_105 = arith.constant 0 : index
    %c0_106 = arith.constant 0 : index
    %327 = vector.load %arg4[%c0_105, %c0_106] : memref<2x10xf32, #tpu.memory_space<vmem>>, vector<2x10xf32>
    %cst_107 = arith.constant dense<0.000000e+00> : vector<2x64xf32>
    %328 = tpu.matmul %327, %326, %cst_107 {dimension_numbers = #tpu.dot_dimension_numbers<[1], [0], [0], [1], [0, 0, 1, 1], [], []>} : vector<2x10xf32>, vector<10x64xf32>, vector<2x64xf32> -> vector<2x64xf32>
    %c14 = arith.constant 14 : index
    %c0_108 = arith.constant 0 : index
    %329 = vector.load %arg2[%c14, %c0_108] : memref<16x64xf32, #tpu.memory_space<vmem>>, vector<1x64xf32>
    %c15 = arith.constant 15 : index
    %c0_109 = arith.constant 0 : index
    %330 = vector.load %arg2[%c15, %c0_109] : memref<16x64xf32, #tpu.memory_space<vmem>>, vector<1x64xf32>
    %cst_110 = arith.constant dense<0.000000e+00> : vector<2xf32>
    %331 = vector.multi_reduction <add>, %328, %cst_110 [1] : vector<2x64xf32> to vector<2xf32>
    %332 = vector.shape_cast %331 : vector<2xf32> to vector<2x1xf32>
    %cst_111 = arith.constant 6.400000e+01 : f32
    %333 = vector.broadcast %cst_111 : f32 to vector<2x1xf32>
    %334 = arith.divf %332, %333 : vector<2x1xf32>
    %335 = vector.broadcast %334 : vector<2x1xf32> to vector<2x64xf32>
    %336 = arith.subf %328, %335 : vector<2x64xf32>
    %337 = arith.mulf %336, %336 : vector<2x64xf32>
    %cst_112 = arith.constant dense<0.000000e+00> : vector<2xf32>
    %338 = vector.multi_reduction <add>, %337, %cst_112 [1] : vector<2x64xf32> to vector<2xf32>
    %339 = vector.shape_cast %338 : vector<2xf32> to vector<2x1xf32>
    %cst_113 = arith.constant 6.400000e+01 : f32
    %340 = vector.broadcast %cst_113 : f32 to vector<2x1xf32>
    %341 = arith.divf %339, %340 : vector<2x1xf32>
    %342 = vector.broadcast %334 : vector<2x1xf32> to vector<2x64xf32>
    %343 = arith.subf %328, %342 : vector<2x64xf32>
    %cst_114 = arith.constant 9.99999974E-6 : f32
    %344 = vector.broadcast %cst_114 : f32 to vector<2x1xf32>
    %345 = arith.addf %341, %344 : vector<2x1xf32>
    %346 = math.rsqrt %345 : vector<2x1xf32>
    %347 = vector.broadcast %346 : vector<2x1xf32> to vector<2x64xf32>
    %348 = arith.mulf %343, %347 : vector<2x64xf32>
    %349 = vector.broadcast %329 : vector<1x64xf32> to vector<2x64xf32>
    %350 = arith.mulf %348, %349 : vector<2x64xf32>
    %351 = vector.broadcast %330 : vector<1x64xf32> to vector<2x64xf32>
    %352 = arith.addf %350, %351 : vector<2x64xf32>
    %353 = arith.truncf %352 : vector<2x64xf32> to vector<2x64xbf16>
    %c0_115 = arith.constant 0 : index
    %c0_116 = arith.constant 0 : index
    %354 = vector.load %arg12[%c0_115, %c0_116] : memref<64x512xbf16, #tpu.memory_space<vmem>>, vector<64x512xbf16>
    %cst_117 = arith.constant dense<0.000000e+00> : vector<2x512xf32>
    %355 = tpu.matmul %353, %354, %cst_117 {dimension_numbers = #tpu.dot_dimension_numbers<[1], [0], [0], [1], [0, 0, 1, 1], [], []>} : vector<2x64xbf16>, vector<64x512xbf16>, vector<2x512xf32> -> vector<2x512xf32>
    %c0_118 = arith.constant 0 : index
    %c0_119 = arith.constant 0 : index
    %356 = vector.load %arg13[%c0_118, %c0_119] : memref<2x512xf32, #tpu.memory_space<vmem>>, vector<2x512xf32>
    tpu.vector_store %arg13[%c0_118, %c0_119], %355 {strides = array<i32>} : memref<2x512xf32, #tpu.memory_space<vmem>>, vector<2x512xf32>,
    return
  }
}

</mosaic_0001>

<llo_original>
// kernel: tpu_custom_call.1
$region0: #{tpu_custom_call.1}
  #allocation0 [shape = 'u32[]', space=smem, size = 0x4, offset = 0x4, fixed_abs, tag = 'smem constant byte address 0x4 - core index']
  #allocation1 [shape = 'u32[144,128]{1,0:T(1,128)}', space=vmem, size = 0x12000, scoped, tag = 'internal scratch']
  %s0 = inlined_call_operand.vmem [shape: bf16[10,768], index: 0, kind: input, shape index: {}]
  %s1 = inlined_call_operand.vmem [shape: f32[10,64], index: 1, kind: input, shape index: {}]
  %s2 = inlined_call_operand.vmem [shape: f32[16,64], index: 2, kind: input, shape index: {}]
  %s3 = inlined_call_operand.vmem [shape: f32[10,10], index: 3, kind: input, shape index: {}]
  %s4 = inlined_call_operand.vmem [shape: f32[2,10], index: 4, kind: input, shape index: {}]
  %s5 = inlined_call_operand.vmem [shape: f32[2,192], index: 5, kind: input, shape index: {}]
  %s6 = inlined_call_operand.vmem [shape: f32[2,128], index: 6, kind: input, shape index: {}]
  %s7 = inlined_call_operand.vmem [shape: bf16[768,64], index: 7, kind: input, shape index: {}]
  %s8 = inlined_call_operand.vmem [shape: bf16[2,64,192], index: 8, kind: input, shape index: {}]
  %s9 = inlined_call_operand.vmem [shape: bf16[2,4,16,64], index: 9, kind: input, shape index: {}]
  %s10 = inlined_call_operand.vmem [shape: bf16[2,64,128], index: 10, kind: input, shape index: {}]
  %s11 = inlined_call_operand.vmem [shape: bf16[2,128,64], index: 11, kind: input, shape index: {}]
  %s12 = inlined_call_operand.vmem [shape: bf16[64,512], index: 12, kind: input, shape index: {}]
  %s13 = inlined_call_operand.hbm [shape: f32[2,512], index: 13, kind: output, shape index: {}]
  %s14 = sld [smem:[#allocation0]]
  $region62: #{tpu_custom_call.1} parent=0
    _
  %s16 = ssub.s32 1, %s14
  %s17 = scalar_select 0, %s16, %s14
  $region1: #{tpu_custom_call.1} parent=0
    #allocation2 [shape = 'u8[4096]{0}', space=vmem, size = 0x1000, scoped, tag = 'output window, operand 0, single buffered']
    #allocation3 [shape = 's32[1]{0}', space=sflag, size = 0x4, scoped, tag = 'scoped memory for tpu_custom_call.1']
    %18 = vsyncpa [#allocation3], 0
    // Predicated region
    $region2: #{tpu_custom_call.1} parent=1 // pred_check
      _
    $region3: #{tpu_custom_call.1} parent=1 // pred_check_branch
      %20 = sbr.rel (0) target = $region5
    $region4: #{tpu_custom_call.1} parent=1 // pred_region
      _
    $region5: #{tpu_custom_call.1} parent=1 // pred_fallthru
      _
    // Predicated region
    $region6: #{tpu_custom_call.1} parent=1 // pred_check
      _
    $region7: #{tpu_custom_call.1} parent=1 // pred_check_branch
      %22 = sbr.rel (0) target = $region9
    $region8: #{tpu_custom_call.1} parent=1 // pred_region
      _
    $region9: #{tpu_custom_call.1} parent=1 // pred_fallthru
      _
    // Predicated region
    $region10: #{tpu_custom_call.1} parent=1 // pred_check
      _
    $region11: #{tpu_custom_call.1} parent=1 // pred_check_branch
      %24 = sbr.rel (0) target = $region13
    $region12: #{tpu_custom_call.1} parent=1 // pred_region
      _
    $region13: #{tpu_custom_call.1} parent=1 // pred_fallthru
      _
    // Predicated region
    $region14: #{tpu_custom_call.1} parent=1 // pred_check
      _
    $region15: #{tpu_custom_call.1} parent=1 // pred_check_branch
      %26 = sbr.rel (0) target = $region17
    $region16: #{tpu_custom_call.1} parent=1 // pred_region
      _
    $region17: #{tpu_custom_call.1} parent=1 // pred_fallthru
      _
    // Predicated region
    $region18: #{tpu_custom_call.1} parent=1 // pred_check
      _
    $region19: #{tpu_custom_call.1} parent=1 // pred_check_branch
      %28 = sbr.rel (0) target = $region21
    $region20: #{tpu_custom_call.1} parent=1 // pred_region
      _
    $region21: #{tpu_custom_call.1} parent=1 // pred_fallthru
      _
    // Predicated region
    $region22: #{tpu_custom_call.1} parent=1 // pred_check
      _
    $region23: #{tpu_custom_call.1} parent=1 // pred_check_branch
      %30 = sbr.rel (0) target = $region25
    $region24: #{tpu_custom_call.1} parent=1 // pred_region
      _
    $region25: #{tpu_custom_call.1} parent=1 // pred_fallthru
      _
    // Predicated region
    $region26: #{tpu_custom_call.1} parent=1 // pred_check
      _
    $region27: #{tpu_custom_call.1} parent=1 // pred_check_branch
      %32 = sbr.rel (0) target = $region29
    $region28: #{tpu_custom_call.1} parent=1 // pred_region
      _
    $region29: #{tpu_custom_call.1} parent=1 // pred_fallthru
      _
    // Predicated region
    $region30: #{tpu_custom_call.1} parent=1 // pred_check
      _
    $region31: #{tpu_custom_call.1} parent=1 // pred_check_branch
      %34 = sbr.rel (0) target = $region33
    $region32: #{tpu_custom_call.1} parent=1 // pred_region
      _
    $region33: #{tpu_custom_call.1} parent=1 // pred_fallthru
      _
    // Predicated region
    $region34: #{tpu_custom_call.1} parent=1 // pred_check
      _
    $region35: #{tpu_custom_call.1} parent=1 // pred_check_branch
      %36 = sbr.rel (0) target = $region37
    $region36: #{tpu_custom_call.1} parent=1 // pred_region
      _
    $region37: #{tpu_custom_call.1} parent=1 // pred_fallthru
      _
    // Predicated region
    $region38: #{tpu_custom_call.1} parent=1 // pred_check
      _
    $region39: #{tpu_custom_call.1} parent=1 // pred_check_branch
      %38 = sbr.rel (0) target = $region41
    $region40: #{tpu_custom_call.1} parent=1 // pred_region
      _
    $region41: #{tpu_custom_call.1} parent=1 // pred_fallthru
      _
    // Predicated region
    $region42: #{tpu_custom_call.1} parent=1 // pred_check
      _
    $region43: #{tpu_custom_call.1} parent=1 // pred_check_branch
      %40 = sbr.rel (0) target = $region45
    $region44: #{tpu_custom_call.1} parent=1 // pred_region
      _
    $region45: #{tpu_custom_call.1} parent=1 // pred_fallthru
      _
    // Predicated region
    $region46: #{tpu_custom_call.1} parent=1 // pred_check
      _
    $region47: #{tpu_custom_call.1} parent=1 // pred_check_branch
      %42 = sbr.rel (0) target = $region49
    $region48: #{tpu_custom_call.1} parent=1 // pred_region
      _
    $region49: #{tpu_custom_call.1} parent=1 // pred_fallthru
      _
    // Predicated region
    $region50: #{tpu_custom_call.1} parent=1 // pred_check
      _
    $region51: #{tpu_custom_call.1} parent=1 // pred_check_branch
      %44 = sbr.rel (0) target = $region53
    $region52: #{tpu_custom_call.1} parent=1 // pred_region
      _
    $region53: #{tpu_custom_call.1} parent=1 // pred_fallthru
      _
    %v46 = vld [vmem:[%s0] sm:$0xff]
    %v47 = vld [vmem:[%s0 + $0x8] sm:$0xff]
    %v48 = vld [vmem:[%s0 + $0x10] sm:$0xff]
    %v49 = vld [vmem:[%s0 + $0x18] sm:$0x11]
    %v50 = vld [vmem:[%s0 + $0x20] sm:$0x11]
    %v51 = vld [vmem:[%s0 + $0x28] sm:$0x11]
    %v52 = vld [vmem:[%s7] sm:$0xf]
    %v53 = vld [vmem:[%s7 + $0x4] sm:$0xf]
    %v54 = vld [vmem:[%s7 + $0x8] sm:$0xf]
    %v55 = vld [vmem:[%s7 + $0xc] sm:$0xf]
    %v56 = vld [vmem:[%s7 + $0x10] sm:$0xf]
    %v57 = vld [vmem:[%s7 + $0x14] sm:$0xf]
    %v58 = vld [vmem:[%s7 + $0x18] sm:$0xf]
    %v59 = vld [vmem:[%s7 + $0x1c] sm:$0xf]
    %v60 = vld [vmem:[%s7 + $0x20] sm:$0xf]
    %v61 = vld [vmem:[%s7 + $0x24] sm:$0xf]
    %v62 = vld [vmem:[%s7 + $0x28] sm:$0xf]
    %v63 = vld [vmem:[%s7 + $0x2c] sm:$0xf]
    %v64 = vld [vmem:[%s7 + $0x30] sm:$0xf]
    %v65 = vld [vmem:[%s7 + $0x34] sm:$0xf]
    %v66 = vld [vmem:[%s7 + $0x38] sm:$0xf]
    %v67 = vld [vmem:[%s7 + $0x3c] sm:$0xf]
    %v68 = vld [vmem:[%s7 + $0x40] sm:$0xf]
    %v69 = vld [vmem:[%s7 + $0x44] sm:$0xf]
    %v70 = vld [vmem:[%s7 + $0x48] sm:$0xf]
    %v71 = vld [vmem:[%s7 + $0x4c] sm:$0xf]
    %v72 = vld [vmem:[%s7 + $0x50] sm:$0xf]
    %v73 = vld [vmem:[%s7 + $0x54] sm:$0xf]
    %v74 = vld [vmem:[%s7 + $0x58] sm:$0xf]
    %v75 = vld [vmem:[%s7 + $0x5c] sm:$0xf]
    %v76 = vld [vmem:[%s7 + $0x60] sm:$0xf]
    %v77 = vld [vmem:[%s7 + $0x64] sm:$0xf]
    %v78 = vld [vmem:[%s7 + $0x68] sm:$0xf]
    %v79 = vld [vmem:[%s7 + $0x6c] sm:$0xf]
    %v80 = vld [vmem:[%s7 + $0x70] sm:$0xf]
    %v81 = vld [vmem:[%s7 + $0x74] sm:$0xf]
    %v82 = vld [vmem:[%s7 + $0x78] sm:$0xf]
    %v83 = vld [vmem:[%s7 + $0x7c] sm:$0xf]
    %v84 = vld [vmem:[%s7 + $0x80] sm:$0xf]
    %v85 = vld [vmem:[%s7 + $0x84] sm:$0xf]
    %v86 = vld [vmem:[%s7 + $0x88] sm:$0xf]
    %v87 = vld [vmem:[%s7 + $0x8c] sm:$0xf]
    %v88 = vld [vmem:[%s7 + $0x90] sm:$0xf]
    %v89 = vld [vmem:[%s7 + $0x94] sm:$0xf]
    %v90 = vld [vmem:[%s7 + $0x98] sm:$0xf]
    %v91 = vld [vmem:[%s7 + $0x9c] sm:$0xf]
    %v92 = vld [vmem:[%s7 + $0xa0] sm:$0xf]
    %v93 = vld [vmem:[%s7 + $0xa4] sm:$0xf]
    %v94 = vld [vmem:[%s7 + $0xa8] sm:$0xf]
    %v95 = vld [vmem:[%s7 + $0xac] sm:$0xf]
    %v96 = vld [vmem:[%s7 + $0xb0] sm:$0xf]
    %v97 = vld [vmem:[%s7 + $0xb4] sm:$0xf]
    %v98 = vld [vmem:[%s7 + $0xb8] sm:$0xf]
    %v99 = vld [vmem:[%s7 + $0xbc] sm:$0xf]
    %v100 = vld [vmem:[%s7 + $0xc0] sm:$0xf]
    %v101 = vld [vmem:[%s7 + $0xc4] sm:$0xf]
    %v102 = vld [vmem:[%s7 + $0xc8] sm:$0xf]
    %v103 = vld [vmem:[%s7 + $0xcc] sm:$0xf]
    %v104 = vld [vmem:[%s7 + $0xd0] sm:$0xf]
    %v105 = vld [vmem:[%s7 + $0xd4] sm:$0xf]
    %v106 = vld [vmem:[%s7 + $0xd8] sm:$0xf]
    %v107 = vld [vmem:[%s7 + $0xdc] sm:$0xf]
    %v108 = vld [vmem:[%s7 + $0xe0] sm:$0xf]
    %v109 = vld [vmem:[%s7 + $0xe4] sm:$0xf]
    %v110 = vld [vmem:[%s7 + $0xe8] sm:$0xf]
    %v111 = vld [vmem:[%s7 + $0xec] sm:$0xf]
    %v112 = vld [vmem:[%s7 + $0xf0] sm:$0xf]
    %v113 = vld [vmem:[%s7 + $0xf4] sm:$0xf]
    %v114 = vld [vmem:[%s7 + $0xf8] sm:$0xf]
    %v115 = vld [vmem:[%s7 + $0xfc] sm:$0xf]
    %v116 = vld [vmem:[%s7 + $0x100] sm:$0xf]
    %v117 = vld [vmem:[%s7 + $0x104] sm:$0xf]
    %v118 = vld [vmem:[%s7 + $0x108] sm:$0xf]
    %v119 = vld [vmem:[%s7 + $0x10c] sm:$0xf]
    %v120 = vld [vmem:[%s7 + $0x110] sm:$0xf]
    %v121 = vld [vmem:[%s7 + $0x114] sm:$0xf]
    %v122 = vld [vmem:[%s7 + $0x118] sm:$0xf]
    %v123 = vld [vmem:[%s7 + $0x11c] sm:$0xf]
    %v124 = vld [vmem:[%s7 + $0x120] sm:$0xf]
    %v125 = vld [vmem:[%s7 + $0x124] sm:$0xf]
    %v126 = vld [vmem:[%s7 + $0x128] sm:$0xf]
    %v127 = vld [vmem:[%s7 + $0x12c] sm:$0xf]
    %v128 = vld [vmem:[%s7 + $0x130] sm:$0xf]
    %v129 = vld [vmem:[%s7 + $0x134] sm:$0xf]
    %v130 = vld [vmem:[%s7 + $0x138] sm:$0xf]
    %v131 = vld [vmem:[%s7 + $0x13c] sm:$0xf]
    %v132 = vld [vmem:[%s7 + $0x140] sm:$0xf]
    %v133 = vld [vmem:[%s7 + $0x144] sm:$0xf]
    %v134 = vld [vmem:[%s7 + $0x148] sm:$0xf]
    %v135 = vld [vmem:[%s7 + $0x14c] sm:$0xf]
    %v136 = vld [vmem:[%s7 + $0x150] sm:$0xf]
    %v137 = vld [vmem:[%s7 + $0x154] sm:$0xf]
    %v138 = vld [vmem:[%s7 + $0x158] sm:$0xf]
    %v139 = vld [vmem:[%s7 + $0x15c] sm:$0xf]
    %v140 = vld [vmem:[%s7 + $0x160] sm:$0xf]
    %v141 = vld [vmem:[%s7 + $0x164] sm:$0xf]
    %v142 = vld [vmem:[%s7 + $0x168] sm:$0xf]
    %v143 = vld [vmem:[%s7 + $0x16c] sm:$0xf]
    %v144 = vld [vmem:[%s7 + $0x170] sm:$0xf]
    %v145 = vld [vmem:[%s7 + $0x174] sm:$0xf]
    %v146 = vld [vmem:[%s7 + $0x178] sm:$0xf]
    %v147 = vld [vmem:[%s7 + $0x17c] sm:$0xf]
    %v148 = vld [vmem:[%s1] sm:$0xff]
    %v149 = vld [vmem:[%s1 + $0x8] sm:$0x3]
    %v156 = vunpack.c.l.b16 %v46
    %v157 = vunpack.c.h.b16 %v46
    %v158 = vunpack.c.l.b16 %v47
    %v159 = vunpack.c.h.b16 %v47
    %v160 = vunpack.c.l.b16 %v48
    %v161 = vunpack.c.h.b16 %v48
    %v162 = vunpack.c.l.b16 %v49
    %v163 = vunpack.c.h.b16 %v49
    %v164 = vunpack.c.l.b16 %v50
    %v165 = vunpack.c.h.b16 %v50
    %v166 = vunpack.c.l.b16 %v51
    %v167 = vunpack.c.h.b16 %v51
    %v168 = vpack.c.b16 %v162, %v156
    %v169 = vpack.c.b16 %v163, %v157
    %v170 = vpack.c.b16 %v164, %v158
    %v171 = vpack.c.b16 %v165, %v159
    %v172 = vpack.c.b16 %v166, %v160
    %v173 = vpack.c.b16 %v167, %v161
    %v276 = vunpack.c.l.b16 %v52
    %v277 = vunpack.c.l.b16 %v53
    %v278 = vunpack.c.l.b16 %v54
    %v279 = vunpack.c.l.b16 %v55
    %v280 = vunpack.c.l.b16 %v56
    %v281 = vunpack.c.l.b16 %v57
    %v282 = vunpack.c.l.b16 %v58
    %v283 = vunpack.c.l.b16 %v59
    %v284 = vunpack.c.l.b16 %v60
    %v285 = vunpack.c.l.b16 %v61
    %v286 = vunpack.c.l.b16 %v62
    %v287 = vunpack.c.l.b16 %v63
    %v288 = vunpack.c.l.b16 %v64
    %v289 = vunpack.c.l.b16 %v65
    %v290 = vunpack.c.l.b16 %v66
    %v291 = vunpack.c.l.b16 %v67
    %v292 = vunpack.c.l.b16 %v68
    %v293 = vunpack.c.l.b16 %v69
    %v294 = vunpack.c.l.b16 %v70
    %v295 = vunpack.c.l.b16 %v71
    %v296 = vunpack.c.l.b16 %v72
    %v297 = vunpack.c.l.b16 %v73
    %v298 = vunpack.c.l.b16 %v74
    %v299 = vunpack.c.l.b16 %v75
    %v300 = vunpack.c.l.b16 %v76
    %v301 = vunpack.c.l.b16 %v77
    %v302 = vunpack.c.l.b16 %v78
    %v303 = vunpack.c.l.b16 %v79
    %v304 = vunpack.c.l.b16 %v80
    %v305 = vunpack.c.l.b16 %v81
    %v306 = vunpack.c.l.b16 %v82
    %v307 = vunpack.c.l.b16 %v83
    %v308 = vunpack.c.l.b16 %v84
    %v309 = vunpack.c.l.b16 %v85
    %v310 = vunpack.c.l.b16 %v86
    %v311 = vunpack.c.l.b16 %v87
    %v312 = vunpack.c.l.b16 %v88
    %v313 = vunpack.c.l.b16 %v89
    %v314 = vunpack.c.l.b16 %v90
    %v315 = vunpack.c.l.b16 %v91
    %v316 = vunpack.c.l.b16 %v92
    %v317 = vunpack.c.l.b16 %v93
    %v318 = vunpack.c.l.b16 %v94
    %v319 = vunpack.c.l.b16 %v95
    %v320 = vunpack.c.l.b16 %v96
    %v321 = vunpack.c.l.b16 %v97
    %v322 = vunpack.c.l.b16 %v98
    %v323 = vunpack.c.l.b16 %v99
    %v324 = vunpack.c.l.b16 %v100
    %v325 = vunpack.c.l.b16 %v101
    %v326 = vunpack.c.l.b16 %v102
    %v327 = vunpack.c.l.b16 %v103
    %v328 = vunpack.c.l.b16 %v104
    %v329 = vunpack.c.l.b16 %v105
    %v330 = vunpack.c.l.b16 %v106
    %v331 = vunpack.c.l.b16 %v107
    %v332 = vunpack.c.l.b16 %v108
    %v333 = vunpack.c.l.b16 %v109
    %v334 = vunpack.c.l.b16 %v110
    %v335 = vunpack.c.l.b16 %v111
    %v336 = vunpack.c.l.b16 %v112
    %v337 = vunpack.c.l.b16 %v113
    %v338 = vunpack.c.l.b16 %v114
    %v339 = vunpack.c.l.b16 %v115
    %v340 = vunpack.c.l.b16 %v116
    %v341 = vunpack.c.l.b16 %v117
    %v342 = vunpack.c.l.b16 %v118
    %v343 = vunpack.c.l.b16 %v119
    %v344 = vunpack.c.l.b16 %v120
    %v345 = vunpack.c.l.b16 %v121
    %v346 = vunpack.c.l.b16 %v122
    %v347 = vunpack.c.l.b16 %v123
    %v348 = vunpack.c.l.b16 %v124
    %v349 = vunpack.c.l.b16 %v125
    %v350 = vunpack.c.l.b16 %v126
    %v351 = vunpack.c.l.b16 %v127
    %v352 = vunpack.c.l.b16 %v128
    %v353 = vunpack.c.l.b16 %v129
    %v354 = vunpack.c.l.b16 %v130
    %v355 = vunpack.c.l.b16 %v131
    %v356 = vunpack.c.l.b16 %v132
    %v357 = vunpack.c.l.b16 %v133
    %v358 = vunpack.c.l.b16 %v134
    %v359 = vunpack.c.l.b16 %v135
    %v360 = vunpack.c.l.b16 %v136
    %v361 = vunpack.c.l.b16 %v137
    %v362 = vunpack.c.l.b16 %v138
    %v363 = vunpack.c.l.b16 %v139
    %v364 = vunpack.c.l.b16 %v140
    %v365 = vunpack.c.l.b16 %v141
    %v366 = vunpack.c.l.b16 %v142
    %v367 = vunpack.c.l.b16 %v143
    %v368 = vunpack.c.l.b16 %v144
    %v369 = vunpack.c.l.b16 %v145
    %v370 = vunpack.c.l.b16 %v146
    %v371 = vunpack.c.l.b16 %v147
    %v372 = vpack.c.b16 %v277, %v276
    %v373 = vpack.c.b16 %v279, %v278
    %v374 = vpack.c.b16 %v281, %v280
    %v375 = vpack.c.b16 %v283, %v282
    %v376 = vpack.c.b16 %v285, %v284
    %v377 = vpack.c.b16 %v287, %v286
    %v378 = vpack.c.b16 %v289, %v288
    %v379 = vpack.c.b16 %v291, %v290
    %v380 = vpack.c.b16 %v293, %v292
    %v381 = vpack.c.b16 %v295, %v294
    %v382 = vpack.c.b16 %v297, %v296
    %v383 = vpack.c.b16 %v299, %v298
    %v384 = vpack.c.b16 %v301, %v300
    %v385 = vpack.c.b16 %v303, %v302
    %v386 = vpack.c.b16 %v305, %v304
    %v387 = vpack.c.b16 %v307, %v306
    %v388 = vpack.c.b16 %v309, %v308
    %v389 = vpack.c.b16 %v311, %v310
    %v390 = vpack.c.b16 %v313, %v312
    %v391 = vpack.c.b16 %v315, %v314
    %v392 = vpack.c.b16 %v317, %v316
    %v393 = vpack.c.b16 %v319, %v318
    %v394 = vpack.c.b16 %v321, %v320
    %v395 = vpack.c.b16 %v323, %v322
    %v396 = vpack.c.b16 %v325, %v324
    %v397 = vpack.c.b16 %v327, %v326
    %v398 = vpack.c.b16 %v329, %v328
    %v399 = vpack.c.b16 %v331, %v330
    %v400 = vpack.c.b16 %v333, %v332
    %v401 = vpack.c.b16 %v335, %v334
    %v402 = vpack.c.b16 %v337, %v336
    %v403 = vpack.c.b16 %v339, %v338
    %v404 = vpack.c.b16 %v341, %v340
    %v405 = vpack.c.b16 %v343, %v342
    %v406 = vpack.c.b16 %v345, %v344
    %v407 = vpack.c.b16 %v347, %v346
    %v408 = vpack.c.b16 %v349, %v348
    %v409 = vpack.c.b16 %v351, %v350
    %v410 = vpack.c.b16 %v353, %v352
    %v411 = vpack.c.b16 %v355, %v354
    %v412 = vpack.c.b16 %v357, %v356
    %v413 = vpack.c.b16 %v359, %v358
    %v414 = vpack.c.b16 %v361, %v360
    %v415 = vpack.c.b16 %v363, %v362
    %v416 = vpack.c.b16 %v365, %v364
    %v417 = vpack.c.b16 %v367, %v366
    %v418 = vpack.c.b16 %v369, %v368
    %v419 = vpack.c.b16 %v371, %v370
    %468 = vmatprep.subr.bf16.mxu0 0
    %469 = vmatpush1.bf16.msra.mxu0 %v379
    %470 = vmatprep.subr.bf16.mxu0 0
    %471 = vmatpush1.bf16.msra.mxu0 %v378
    %472 = vmatprep.subr.bf16.mxu0 0
    %473 = vmatpush1.bf16.msra.mxu0 %v377
    %474 = vmatprep.subr.bf16.mxu0 0
    %475 = vmatpush1.bf16.msra.mxu0 %v376
    %476 = vmatprep.subr.bf16.mxu0 0
    %477 = vmatpush1.bf16.msra.mxu0 %v375
    %478 = vmatprep.subr.bf16.mxu0 0
    %479 = vmatpush1.bf16.msra.mxu0 %v374
    %480 = vmatprep.subr.bf16.mxu0 0
    %481 = vmatpush1.bf16.msra.mxu0 %v373
    %482 = vmatprep.subr.bf16.mxu0 0
    %483 = vmatpush1.bf16.msra.mxu0 %v372
    %484 = vmatprep.subr.bf16.mxu0 0
    %485 = vmatpush2.bf16.msra.mxu0 %v387
    %486 = vmatprep.subr.bf16.mxu0 0
    %487 = vmatpush2.bf16.msra.mxu0 %v386
    %488 = vmatprep.subr.bf16.mxu0 0
    %489 = vmatpush2.bf16.msra.mxu0 %v385
    %490 = vmatprep.subr.bf16.mxu0 0
    %491 = vmatpush2.bf16.msra.mxu0 %v384
    %492 = vmatprep.subr.bf16.mxu0 0
    %493 = vmatpush2.bf16.msra.mxu0 %v383
    %494 = vmatprep.subr.bf16.mxu0 0
    %495 = vmatpush2.bf16.msra.mxu0 %v382
    %496 = vmatprep.subr.bf16.mxu0 0
    %497 = vmatpush2.bf16.msra.mxu0 %v381
    %498 = vmatprep.subr.bf16.mxu0 0
    %499 = vmatpush2.bf16.msra.mxu0 %v380
    %500 = vmatprep.mubr.bf16.mxu0 %v169
    %501 = vmatmul.mubr.bf16.gmra.mxu0 %v168
    %v502 = vpop.f32.mrf.mxu0
    %v503 = vadd.f32 %v148, %v502
    %v504 = vpop.f32.mrf.mxu0
    %v505 = vpop.f32.mrf.mxu0
    %v506 = vadd.f32 %v149, %v505
    %v507 = vpop.f32.mrf.mxu0
    %508 = vdwg.mxu0
    %509 = vmatprep.subr.bf16.mxu0 0
    %510 = vmatpush1.bf16.msra.mxu0 %v395
    %511 = vmatprep.subr.bf16.mxu0 0
    %512 = vmatpush1.bf16.msra.mxu0 %v394
    %513 = vmatprep.subr.bf16.mxu0 0
    %514 = vmatpush1.bf16.msra.mxu0 %v393
    %515 = vmatprep.subr.bf16.mxu0 0
    %516 = vmatpush1.bf16.msra.mxu0 %v392
    %517 = vmatprep.subr.bf16.mxu0 0
    %518 = vmatpush1.bf16.msra.mxu0 %v391
    %519 = vmatprep.subr.bf16.mxu0 0
    %520 = vmatpush1.bf16.msra.mxu0 %v390
    %521 = vmatprep.subr.bf16.mxu0 0
    %522 = vmatpush1.bf16.msra.mxu0 %v389
    %523 = vmatprep.subr.bf16.mxu0 0
    %524 = vmatpush1.bf16.msra.mxu0 %v388
    %525 = vmatprep.subr.bf16.mxu0 0
    %526 = vmatpush2.bf16.msra.mxu0 %v403
    %527 = vmatprep.subr.bf16.mxu0 0
    %528 = vmatpush2.bf16.msra.mxu0 %v402
    %529 = vmatprep.subr.bf16.mxu0 0
    %530 = vmatpush2.bf16.msra.mxu0 %v401
    %531 = vmatprep.subr.bf16.mxu0 0
    %532 = vmatpush2.bf16.msra.mxu0 %v400
    %533 = vmatprep.subr.bf16.mxu0 0
    %534 = vmatpush2.bf16.msra.mxu0 %v399
    %535 = vmatprep.subr.bf16.mxu0 0
    %536 = vmatpush2.bf16.msra.mxu0 %v398
    %537 = vmatprep.subr.bf16.mxu0 0
    %538 = vmatpush2.bf16.msra.mxu0 %v397
    %539 = vmatprep.subr.bf16.mxu0 0
    %540 = vmatpush2.bf16.msra.mxu0 %v396
    %541 = vmatprep.mubr.bf16.mxu0 %v171
    %542 = vmatmul.mubr.bf16.gmra.mxu0 %v170
    %v543 = vpop.f32.mrf.mxu0
    %v544 = vadd.f32 %v503, %v543
    %v545 = vpop.f32.mrf.mxu0
    %v546 = vpop.f32.mrf.mxu0
    %v547 = vadd.f32 %v506, %v546
    %v548 = vpop.f32.mrf.mxu0
    %549 = vdwg.mxu0
    %550 = vmatprep.subr.bf16.mxu0 0
    %551 = vmatpush1.bf16.msra.mxu0 %v411
    %552 = vmatprep.subr.bf16.mxu0 0
    %553 = vmatpush1.bf16.msra.mxu0 %v410
    %554 = vmatprep.subr.bf16.mxu0 0
    %555 = vmatpush1.bf16.msra.mxu0 %v409
    %556 = vmatprep.subr.bf16.mxu0 0
    %557 = vmatpush1.bf16.msra.mxu0 %v408
    %558 = vmatprep.subr.bf16.mxu0 0
    %559 = vmatpush1.bf16.msra.mxu0 %v407
    %560 = vmatprep.subr.bf16.mxu0 0
    %561 = vmatpush1.bf16.msra.mxu0 %v406
    %562 = vmatprep.subr.bf16.mxu0 0
    %563 = vmatpush1.bf16.msra.mxu0 %v405
    %564 = vmatprep.subr.bf16.mxu0 0
    %565 = vmatpush1.bf16.msra.mxu0 %v404
    %566 = vmatprep.subr.bf16.mxu0 0
    %567 = vmatpush2.bf16.msra.mxu0 %v419
    %568 = vmatprep.subr.bf16.mxu0 0
    %569 = vmatpush2.bf16.msra.mxu0 %v418
    %570 = vmatprep.subr.bf16.mxu0 0
    %571 = vmatpush2.bf16.msra.mxu0 %v417
    %572 = vmatprep.subr.bf16.mxu0 0
    %573 = vmatpush2.bf16.msra.mxu0 %v416
    %574 = vmatprep.subr.bf16.mxu0 0
    %575 = vmatpush2.bf16.msra.mxu0 %v415
    %576 = vmatprep.subr.bf16.mxu0 0
    %577 = vmatpush2.bf16.msra.mxu0 %v414
    %578 = vmatprep.subr.bf16.mxu0 0
    %579 = vmatpush2.bf16.msra.mxu0 %v413
    %580 = vmatprep.subr.bf16.mxu0 0
    %581 = vmatpush2.bf16.msra.mxu0 %v412
    %582 = vmatprep.mubr.bf16.mxu0 %v173
    %583 = vmatmul.mubr.bf16.gmra.mxu0 %v172
    %v584 = vpop.f32.mrf.mxu0
    %v585 = vadd.f32 %v544, %v584
    %v586 = vpop.f32.mrf.mxu0
    %v587 = vpop.f32.mrf.mxu0
    %v588 = vadd.f32 %v547, %v587
    %v589 = vpop.f32.mrf.mxu0
    %590 = vdwg.mxu0
    %v591 = vld [vmem:[%s2] sm:$0x1]
    %v592 = vld [vmem:[%s2 + $0x1] sm:$0x1]
    %vm593 = vcmask 523264
    %v594 = vsel %vm593, %v585, 0.0
    %595 = vadd.xlane.f32.xlu0 %v594
    %v596 = vpop.xlane.xlu0 %595
    %vm597 = vcmask 517120
    %v598 = vsel %vm597, %v588, 0.0
    %599 = vadd.xlane.f32.xlu0 %v598
    %v600 = vpop.xlane.xlu0 %599
    %v601 = vrcp.pop 64.0
    %v602 = vmul.f32 %v596, %v601
    %v603 = vmul.f32 %v600, %v601
    %v604 = vsub.f32 %v585, %v602
    %v605 = vsub.f32 %v588, %v603
    %v606 = vmul.f32 %v604, %v604
    %v607 = vmul.f32 %v605, %v605
    %v608 = vsel %vm593, %v606, 0.0
    %609 = vadd.xlane.f32.xlu0 %v608
    %v610 = vpop.xlane.xlu0 %609
    %v611 = vsel %vm597, %v607, 0.0
    %612 = vadd.xlane.f32.xlu0 %v611
    %v613 = vpop.xlane.xlu0 %612
    %v614 = vmul.f32 %v610, %v601
    %v615 = vmul.f32 %v613, %v601
    %v616 = vadd.f32 %v614, 1e-05
    %v617 = vadd.f32 %v615, 1e-05
    %v618 = vrsqrt.pop %v616
    %v619 = vrsqrt.pop %v617
    %v620 = vmul.f32 %v604, %v618
    %v621 = vmul.f32 %v605, %v619
    %v622 = vlaneseq
    %v623 = vshrl.u32 %v622, 7
    %v624 = vsub.s32 0, %v623
    %v625 = vrot.slane %v591, %v624
    %v626 = vmul.f32 %v620, %v625
    %v627 = vmul.f32 %v621, %v625
    %v628 = vlaneseq
    %v629 = vshrl.u32 %v628, 7
    %v630 = vsub.s32 0, %v629
    %v631 = vrot.slane %v592, %v630
    %v632 = vadd.f32 %v626, %v631
    %v633 = vadd.f32 %v627, %v631
    %v634 = vld [vmem:[%s2 + $0x2] sm:$0x1]
    %v635 = vld [vmem:[%s2 + $0x4] sm:$0x1]
    %v636 = vsel %vm593, %v632, 0.0
    %637 = vadd.xlane.f32.xlu0 %v636
    %v638 = vpop.xlane.xlu0 %637
    %v639 = vsel %vm597, %v633, 0.0
    %640 = vadd.xlane.f32.xlu0 %v639
    %v641 = vpop.xlane.xlu0 %640
    %v642 = vmul.f32 %v638, %v601
    %v643 = vmul.f32 %v641, %v601
    %v644 = vsub.f32 %v632, %v642
    %v645 = vsub.f32 %v633, %v643
    %v646 = vmul.f32 %v644, %v644
    %v647 = vmul.f32 %v645, %v645
    %v648 = vsel %vm593, %v646, 0.0
    %649 = vadd.xlane.f32.xlu0 %v648
    %v650 = vpop.xlane.xlu0 %649
    %v651 = vsel %vm597, %v647, 0.0
    %652 = vadd.xlane.f32.xlu0 %v651
    %v653 = vpop.xlane.xlu0 %652
    %v654 = vmul.f32 %v650, %v601
    %v655 = vmul.f32 %v653, %v601
    %v656 = vadd.f32 %v654, 1e-05
    %v657 = vadd.f32 %v655, 1e-05
    %v658 = vrsqrt.pop %v656
    %v659 = vrsqrt.pop %v657
    %v660 = vmul.f32 %v644, %v658
    %v661 = vmul.f32 %v645, %v659
    %v662 = vlaneseq
    %v663 = vshrl.u32 %v662, 7
    %v664 = vsub.s32 0, %v663
    %v665 = vrot.slane %v634, %v664
    %v666 = vmul.f32 %v660, %v665
    %v667 = vmul.f32 %v661, %v665
    %v668 = vlaneseq
    %v669 = vshrl.u32 %v668, 7
    %v670 = vsub.s32 0, %v669
    %v671 = vrot.slane %v635, %v670
    %v672 = vadd.f32 %v666, %v671
    %v673 = vadd.f32 %v667, %v671
    %v674 = vpack.c.bf16 %v673, %v672
    %v675 = vld [vmem:[%s8] sm:$0xff]
    %v676 = vld [vmem:[%s8 + $0x8] sm:$0xff]
    %v677 = vld [vmem:[%s8 + $0x10] sm:$0xff]
    %v678 = vld [vmem:[%s8 + $0x18] sm:$0xff]
    %v679 = vld [vmem:[%s8 + $0x20] sm:$0xff]
    %v680 = vld [vmem:[%s8 + $0x28] sm:$0xff]
    %v681 = vld [vmem:[%s8 + $0x30] sm:$0xff]
    %v682 = vld [vmem:[%s8 + $0x38] sm:$0xff]
    %v683 = vld [vmem:[%s5] ss:$2 sm:$0x3]
    %v685 = vlaneseq
    %v686 = vshrl.u32 %v685, 7
    %v687 = vsub.s32 0, %v686
    %v688 = vrot.slane %v683, %v687
    %v689 = vlaneseq
    %v690 = vshrl.u32 %v689, 7
    %v691 = vsub.s32 1, %v690
    %v692 = vrot.slane %v683, %v691
    %v703 = vunpack.c.l.b16 %v675
    %v704 = vunpack.c.h.b16 %v675
    %v705 = vunpack.c.l.b16 %v676
    %v706 = vunpack.c.h.b16 %v676
    %v707 = vunpack.c.l.b16 %v677
    %v708 = vunpack.c.h.b16 %v677
    %v709 = vunpack.c.l.b16 %v678
    %v710 = vunpack.c.h.b16 %v678
    %v711 = vunpack.c.l.b16 %v679
    %v712 = vunpack.c.h.b16 %v679
    %v713 = vunpack.c.l.b16 %v680
    %v714 = vunpack.c.h.b16 %v680
    %v715 = vunpack.c.l.b16 %v681
    %v716 = vunpack.c.h.b16 %v681
    %v717 = vunpack.c.l.b16 %v682
    %v718 = vunpack.c.h.b16 %v682
    %v719 = vpack.c.b16 %v705, %v703
    %v720 = vpack.c.b16 %v706, %v704
    %v721 = vpack.c.b16 %v709, %v707
    %v722 = vpack.c.b16 %v710, %v708
    %v723 = vpack.c.b16 %v713, %v711
    %v724 = vpack.c.b16 %v714, %v712
    %v725 = vpack.c.b16 %v717, %v715
    %v726 = vpack.c.b16 %v718, %v716
    %v736 = vsel %vm593, %v674, 0
    %738 = vmatprep.subr.bf16.mxu0 0
    %739 = vmatpush1.bf16.msra.mxu0 0
    %740 = vmatprep.subr.bf16.mxu0 0
    %741 = vmatpush1.bf16.msra.mxu0 0
    %742 = vmatprep.subr.bf16.mxu0 0
    %743 = vmatpush1.bf16.msra.mxu0 0
    %744 = vmatprep.subr.bf16.mxu0 0
    %745 = vmatpush1.bf16.msra.mxu0 0
    %746 = vmatprep.subr.bf16.mxu0 %v726
    %747 = vmatpush1.bf16.msra.mxu0 %v725
    %748 = vmatprep.subr.bf16.mxu0 %v724
    %749 = vmatpush1.bf16.msra.mxu0 %v723
    %750 = vmatprep.subr.bf16.mxu0 %v722
    %751 = vmatpush1.bf16.msra.mxu0 %v721
    %752 = vmatprep.subr.bf16.mxu0 %v720
    %753 = vmatpush1.bf16.msra.mxu0 %v719
    %754 = vmatprep.subr.bf16.mxu0 0
    %755 = vmatpush2.bf16.msra.mxu0 0
    %756 = vmatprep.subr.bf16.mxu0 0
    %757 = vmatpush2.bf16.msra.mxu0 0
    %758 = vmatprep.subr.bf16.mxu0 0
    %759 = vmatpush2.bf16.msra.mxu0 0
    %760 = vmatprep.subr.bf16.mxu0 0
    %761 = vmatpush2.bf16.msra.mxu0 0
    %762 = vmatprep.subr.bf16.mxu0 0
    %763 = vmatpush2.bf16.msra.mxu0 0
    %764 = vmatprep.subr.bf16.mxu0 0
    %765 = vmatpush2.bf16.msra.mxu0 0
    %766 = vmatprep.subr.bf16.mxu0 0
    %767 = vmatpush2.bf16.msra.mxu0 0
    %768 = vmatprep.subr.bf16.mxu0 0
    %769 = vmatpush2.bf16.msra.mxu0 0
    %770 = vmatprep.mubr.bf16.mxu0 0
    %771 = vmatmul.mubr.bf16.gmra.mxu0 %v736
    %v772 = vpop.f32.mrf.mxu0
    %v773 = vadd.f32 %v688, %v772
    %v774 = vpop.f32.mrf.mxu0
    %v775 = vadd.f32 %v692, %v774
    %v776 = vpop.f32.mrf.mxu0
    %v777 = vadd.f32 %v688, %v776
    %v778 = vpop.f32.mrf.mxu0
    %v779 = vadd.f32 %v692, %v778
    %780 = vdwg.mxu0
    %v781 = vmul.f32 %v773, 0.25
    %v782 = vmul.f32 %v777, 0.25
    %785 = vrot.lane.b32.xlu0 %v781, 112
    %v786 = vpop.permute.xlu0 %785
    %787 = vrot.lane.b32.xlu0 %v782, 112
    %v788 = vpop.permute.xlu0 %787
    %791 = vrot.lane.b32.xlu0 %v781, 96
    %v792 = vpop.permute.xlu0 %791
    %793 = vrot.lane.b32.xlu0 %v782, 96
    %v794 = vpop.permute.xlu0 %793
    %797 = vrot.lane.b32.xlu0 %v781, 80
    %v798 = vpop.permute.xlu0 %797
    %799 = vrot.lane.b32.xlu0 %v782, 80
    %v800 = vpop.permute.xlu0 %799
    %v803 = vpack.c.bf16 %v782, %v781
    %v804 = vpack.c.bf16 %v788, %v786
    %v805 = vpack.c.bf16 %v794, %v792
    %v806 = vpack.c.bf16 %v800, %v798
    %809 = vrot.lane.b32.xlu0 %v773, 112
    %v810 = vpop.permute.xlu0 %809
    %811 = vrot.lane.b32.xlu0 %v777, 112
    %v812 = vpop.permute.xlu0 %811
    %815 = vrot.lane.b32.xlu0 %v773, 96
    %v816 = vpop.permute.xlu0 %815
    %817 = vrot.lane.b32.xlu0 %v777, 96
    %v818 = vpop.permute.xlu0 %817
    %821 = vrot.lane.b32.xlu0 %v773, 80
    %v822 = vpop.permute.xlu0 %821
    %823 = vrot.lane.b32.xlu0 %v777, 80
    %v824 = vpop.permute.xlu0 %823
    %v827 = vpack.c.bf16 %v777, %v773
    %v828 = vpack.c.bf16 %v812, %v810
    %v829 = vpack.c.bf16 %v818, %v816
    %v830 = vpack.c.bf16 %v824, %v822
    %833 = vrot.lane.b32.xlu0 %v775, 112
    %v834 = vpop.permute.xlu0 %833
    %835 = vrot.lane.b32.xlu0 %v779, 112
    %v836 = vpop.permute.xlu0 %835
    %839 = vrot.lane.b32.xlu0 %v775, 96
    %v840 = vpop.permute.xlu0 %839
    %841 = vrot.lane.b32.xlu0 %v779, 96
    %v842 = vpop.permute.xlu0 %841
    %845 = vrot.lane.b32.xlu0 %v775, 80
    %v846 = vpop.permute.xlu0 %845
    %847 = vrot.lane.b32.xlu0 %v779, 80
    %v848 = vpop.permute.xlu0 %847
    %v851 = vpack.c.bf16 %v779, %v775
    %v852 = vpack.c.bf16 %v836, %v834
    %v853 = vpack.c.bf16 %v842, %v840
    %v854 = vpack.c.bf16 %v848, %v846
    %v855 = vld [vmem:[%s3] sm:$0xff]
    %v856 = vld [vmem:[%s3 + $0x8] sm:$0x3]
    %858 = vrot.lane.b32.xlu0 %v827, 64
    %v859 = vpop.permute.xlu0 %858
    %vm860 = vcmask 130048
    %v862 = vsel %vm860, %v803, 0
    %v865 = vsel %vm860, %v859, 0
    %867 = vmatprep.subr.bf16.mxu0 0
    %868 = vmatpush1.bf16.xpose.msra.mxu0 0
    %869 = vmatprep.subr.bf16.mxu0 0
    %870 = vmatpush1.bf16.xpose.msra.mxu0 0
    %871 = vmatprep.subr.bf16.mxu0 0
    %872 = vmatpush1.bf16.xpose.msra.mxu0 0
    %873 = vmatprep.subr.bf16.mxu0 0
    %874 = vmatpush1.bf16.xpose.msra.mxu0 0
    %875 = vmatprep.subr.bf16.mxu0 0
    %876 = vmatpush1.bf16.xpose.msra.mxu0 0
    %877 = vmatprep.subr.bf16.mxu0 0
    %878 = vmatpush1.bf16.xpose.msra.mxu0 0
    %879 = vmatprep.subr.bf16.mxu0 0
    %880 = vmatpush1.bf16.xpose.msra.mxu0 0
    %881 = vmatprep.subr.bf16.mxu0 0
    %882 = vmatpush1.bf16.xpose.msra.mxu0 %v865
    %883 = vmatprep.subr.bf16.mxu0 0
    %884 = vmatpush2.bf16.xpose.msra.mxu0 0
    %885 = vmatprep.subr.bf16.mxu0 0
    %886 = vmatpush2.bf16.xpose.msra.mxu0 0
    %887 = vmatprep.subr.bf16.mxu0 0
    %888 = vmatpush2.bf16.xpose.msra.mxu0 0
    %889 = vmatprep.subr.bf16.mxu0 0
    %890 = vmatpush2.bf16.xpose.msra.mxu0 0
    %891 = vmatprep.subr.bf16.mxu0 0
    %892 = vmatpush2.bf16.xpose.msra.mxu0 0
    %893 = vmatprep.subr.bf16.mxu0 0
    %894 = vmatpush2.bf16.xpose.msra.mxu0 0
    %895 = vmatprep.subr.bf16.mxu0 0
    %896 = vmatpush2.bf16.xpose.msra.mxu0 0
    %897 = vmatprep.subr.bf16.mxu0 0
    %898 = vmatpush2.bf16.xpose.msra.mxu0 0
    %899 = vmatprep.mubr.bf16.mxu0 0
    %900 = vmatmul.mubr.bf16.gmra.mxu0 %v862
    %v901 = vpop.f32.mrf.mxu0
    %v902 = vadd.f32 %v855, %v901
    %v903 = vpop.f32.mrf.mxu0
    %v904 = vpop.f32.mrf.mxu0
    %v905 = vadd.f32 %v856, %v904
    %v906 = vpop.f32.mrf.mxu0
    %907 = vdwg.mxu0
    %909 = vrot.lane.b32.xlu0 %v828, 64
    %v910 = vpop.permute.xlu0 %909
    %v912 = vsel %vm860, %v804, 0
    %v915 = vsel %vm860, %v910, 0
    %917 = vmatprep.subr.bf16.mxu0 0
    %918 = vmatpush1.bf16.xpose.msra.mxu0 0
    %919 = vmatprep.subr.bf16.mxu0 0
    %920 = vmatpush1.bf16.xpose.msra.mxu0 0
    %921 = vmatprep.subr.bf16.mxu0 0
    %922 = vmatpush1.bf16.xpose.msra.mxu0 0
    %923 = vmatprep.subr.bf16.mxu0 0
    %924 = vmatpush1.bf16.xpose.msra.mxu0 0
    %925 = vmatprep.subr.bf16.mxu0 0
    %926 = vmatpush1.bf16.xpose.msra.mxu0 0
    %927 = vmatprep.subr.bf16.mxu0 0
    %928 = vmatpush1.bf16.xpose.msra.mxu0 0
    %929 = vmatprep.subr.bf16.mxu0 0
    %930 = vmatpush1.bf16.xpose.msra.mxu0 0
    %931 = vmatprep.subr.bf16.mxu0 0
    %932 = vmatpush1.bf16.xpose.msra.mxu0 %v915
    %933 = vmatprep.subr.bf16.mxu0 0
    %934 = vmatpush2.bf16.xpose.msra.mxu0 0
    %935 = vmatprep.subr.bf16.mxu0 0
    %936 = vmatpush2.bf16.xpose.msra.mxu0 0
    %937 = vmatprep.subr.bf16.mxu0 0
    %938 = vmatpush2.bf16.xpose.msra.mxu0 0
    %939 = vmatprep.subr.bf16.mxu0 0
    %940 = vmatpush2.bf16.xpose.msra.mxu0 0
    %941 = vmatprep.subr.bf16.mxu0 0
    %942 = vmatpush2.bf16.xpose.msra.mxu0 0
    %943 = vmatprep.subr.bf16.mxu0 0
    %944 = vmatpush2.bf16.xpose.msra.mxu0 0
    %945 = vmatprep.subr.bf16.mxu0 0
    %946 = vmatpush2.bf16.xpose.msra.mxu0 0
    %947 = vmatprep.subr.bf16.mxu0 0
    %948 = vmatpush2.bf16.xpose.msra.mxu0 0
    %949 = vmatprep.mubr.bf16.mxu0 0
    %950 = vmatmul.mubr.bf16.gmra.mxu0 %v912
    %v951 = vpop.f32.mrf.mxu0
    %v952 = vadd.f32 %v855, %v951
    %v953 = vpop.f32.mrf.mxu0
    %v954 = vpop.f32.mrf.mxu0
    %v955 = vadd.f32 %v856, %v954
    %v956 = vpop.f32.mrf.mxu0
    %957 = vdwg.mxu0
    %959 = vrot.lane.b32.xlu0 %v829, 64
    %v960 = vpop.permute.xlu0 %959
    %v962 = vsel %vm860, %v805, 0
    %v965 = vsel %vm860, %v960, 0
    %967 = vmatprep.subr.bf16.mxu0 0
    %968 = vmatpush1.bf16.xpose.msra.mxu0 0
    %969 = vmatprep.subr.bf16.mxu0 0
    %970 = vmatpush1.bf16.xpose.msra.mxu0 0
    %971 = vmatprep.subr.bf16.mxu0 0
    %972 = vmatpush1.bf16.xpose.msra.mxu0 0
    %973 = vmatprep.subr.bf16.mxu0 0
    %974 = vmatpush1.bf16.xpose.msra.mxu0 0
    %975 = vmatprep.subr.bf16.mxu0 0
    %976 = vmatpush1.bf16.xpose.msra.mxu0 0
    %977 = vmatprep.subr.bf16.mxu0 0
    %978 = vmatpush1.bf16.xpose.msra.mxu0 0
    %979 = vmatprep.subr.bf16.mxu0 0
    %980 = vmatpush1.bf16.xpose.msra.mxu0 0
    %981 = vmatprep.subr.bf16.mxu0 0
    %982 = vmatpush1.bf16.xpose.msra.mxu0 %v965
    %983 = vmatprep.subr.bf16.mxu0 0
    %984 = vmatpush2.bf16.xpose.msra.mxu0 0
    %985 = vmatprep.subr.bf16.mxu0 0
    %986 = vmatpush2.bf16.xpose.msra.mxu0 0
    %987 = vmatprep.subr.bf16.mxu0 0
    %988 = vmatpush2.bf16.xpose.msra.mxu0 0
    %989 = vmatprep.subr.bf16.mxu0 0
    %990 = vmatpush2.bf16.xpose.msra.mxu0 0
    %991 = vmatprep.subr.bf16.mxu0 0
    %992 = vmatpush2.bf16.xpose.msra.mxu0 0
    %993 = vmatprep.subr.bf16.mxu0 0
    %994 = vmatpush2.bf16.xpose.msra.mxu0 0
    %995 = vmatprep.subr.bf16.mxu0 0
    %996 = vmatpush2.bf16.xpose.msra.mxu0 0
    %997 = vmatprep.subr.bf16.mxu0 0
    %998 = vmatpush2.bf16.xpose.msra.mxu0 0
    %999 = vmatprep.mubr.bf16.mxu0 0
    %1000 = vmatmul.mubr.bf16.gmra.mxu0 %v962
    %v1001 = vpop.f32.mrf.mxu0
    %v1002 = vadd.f32 %v855, %v1001
    %v1003 = vpop.f32.mrf.mxu0
    %v1004 = vpop.f32.mrf.mxu0
    %v1005 = vadd.f32 %v856, %v1004
    %v1006 = vpop.f32.mrf.mxu0
    %1007 = vdwg.mxu0
    %1009 = vrot.lane.b32.xlu0 %v830, 64
    %v1010 = vpop.permute.xlu0 %1009
    %v1012 = vsel %vm860, %v806, 0
    %v1015 = vsel %vm860, %v1010, 0
    %1017 = vmatprep.subr.bf16.mxu0 0
    %1018 = vmatpush1.bf16.xpose.msra.mxu0 0
    %1019 = vmatprep.subr.bf16.mxu0 0
    %1020 = vmatpush1.bf16.xpose.msra.mxu0 0
    %1021 = vmatprep.subr.bf16.mxu0 0
    %1022 = vmatpush1.bf16.xpose.msra.mxu0 0
    %1023 = vmatprep.subr.bf16.mxu0 0
    %1024 = vmatpush1.bf16.xpose.msra.mxu0 0
    %1025 = vmatprep.subr.bf16.mxu0 0
    %1026 = vmatpush1.bf16.xpose.msra.mxu0 0
    %1027 = vmatprep.subr.bf16.mxu0 0
    %1028 = vmatpush1.bf16.xpose.msra.mxu0 0
    %1029 = vmatprep.subr.bf16.mxu0 0
    %1030 = vmatpush1.bf16.xpose.msra.mxu0 0
    %1031 = vmatprep.subr.bf16.mxu0 0
    %1032 = vmatpush1.bf16.xpose.msra.mxu0 %v1015
    %1033 = vmatprep.subr.bf16.mxu0 0
    %1034 = vmatpush2.bf16.xpose.msra.mxu0 0
    %1035 = vmatprep.subr.bf16.mxu0 0
    %1036 = vmatpush2.bf16.xpose.msra.mxu0 0
    %1037 = vmatprep.subr.bf16.mxu0 0
    %1038 = vmatpush2.bf16.xpose.msra.mxu0 0
    %1039 = vmatprep.subr.bf16.mxu0 0
    %1040 = vmatpush2.bf16.xpose.msra.mxu0 0
    %1041 = vmatprep.subr.bf16.mxu0 0
    %1042 = vmatpush2.bf16.xpose.msra.mxu0 0
    %1043 = vmatprep.subr.bf16.mxu0 0
    %1044 = vmatpush2.bf16.xpose.msra.mxu0 0
    %1045 = vmatprep.subr.bf16.mxu0 0
    %1046 = vmatpush2.bf16.xpose.msra.mxu0 0
    %1047 = vmatprep.subr.bf16.mxu0 0
    %1048 = vmatpush2.bf16.xpose.msra.mxu0 0
    %1049 = vmatprep.mubr.bf16.mxu0 0
    %1050 = vmatmul.mubr.bf16.gmra.mxu0 %v1012
    %v1051 = vpop.f32.mrf.mxu0
    %v1052 = vadd.f32 %v855, %v1051
    %v1053 = vpop.f32.mrf.mxu0
    %v1054 = vpop.f32.mrf.mxu0
    %v1055 = vadd.f32 %v856, %v1054
    %v1056 = vpop.f32.mrf.mxu0
    %1057 = vdwg.mxu0
    %vm1058 = vcmask 80896
    %v1059 = vsel %vm1058, %v902, -inf
    %1060 = vmax.xlane.f32.xlu0 %v1059
    %v1061 = vpop.xlane.xlu0 %1060
    %vm1062 = vcmask 74752
    %v1063 = vsel %vm1062, %v905, -inf
    %1064 = vmax.xlane.f32.xlu0 %v1063
    %v1065 = vpop.xlane.xlu0 %1064
    %v1066 = vsel %vm1058, %v952, -inf
    %1067 = vmax.xlane.f32.xlu0 %v1066
    %v1068 = vpop.xlane.xlu0 %1067
    %v1069 = vsel %vm1062, %v955, -inf
    %1070 = vmax.xlane.f32.xlu0 %v1069
    %v1071 = vpop.xlane.xlu0 %1070
    %v1072 = vsel %vm1058, %v1002, -inf
    %1073 = vmax.xlane.f32.xlu0 %v1072
    %v1074 = vpop.xlane.xlu0 %1073
    %v1075 = vsel %vm1062, %v1005, -inf
    %1076 = vmax.xlane.f32.xlu0 %v1075
    %v1077 = vpop.xlane.xlu0 %1076
    %v1078 = vsel %vm1058, %v1052, -inf
    %1079 = vmax.xlane.f32.xlu0 %v1078
    %v1080 = vpop.xlane.xlu0 %1079
    %v1081 = vsel %vm1062, %v1055, -inf
    %1082 = vmax.xlane.f32.xlu0 %v1081
    %v1083 = vpop.xlane.xlu0 %1082
    %v1084 = vsub.f32 %v902, %v1061
    %v1085 = vsub.f32 %v905, %v1065
    %v1086 = vsub.f32 %v952, %v1068
    %v1087 = vsub.f32 %v955, %v1071
    %v1088 = vsub.f32 %v1002, %v1074
    %v1089 = vsub.f32 %v1005, %v1077
    %v1090 = vsub.f32 %v1052, %v1080
    %v1091 = vsub.f32 %v1055, %v1083
    %v1092 = vmul.f32 %v1084, 1.442695
    %v1093 = vpow.pop %v1092
    %v1094 = vmul.f32 %v1085, 1.442695
    %v1095 = vpow.pop %v1094
    %v1096 = vmul.f32 %v1086, 1.442695
    %v1097 = vpow.pop %v1096
    %v1098 = vmul.f32 %v1087, 1.442695
    %v1099 = vpow.pop %v1098
    %v1100 = vmul.f32 %v1088, 1.442695
    %v1101 = vpow.pop %v1100
    %v1102 = vmul.f32 %v1089, 1.442695
    %v1103 = vpow.pop %v1102
    %v1104 = vmul.f32 %v1090, 1.442695
    %v1105 = vpow.pop %v1104
    %v1106 = vmul.f32 %v1091, 1.442695
    %v1107 = vpow.pop %v1106
    %v1108 = vsel %vm1058, %v1093, 0.0
    %1109 = vadd.xlane.f32.xlu0 %v1108
    %v1110 = vpop.xlane.xlu0 %1109
    %v1111 = vsel %vm1062, %v1095, 0.0
    %1112 = vadd.xlane.f32.xlu0 %v1111
    %v1113 = vpop.xlane.xlu0 %1112
    %v1114 = vsel %vm1058, %v1097, 0.0
    %1115 = vadd.xlane.f32.xlu0 %v1114
    %v1116 = vpop.xlane.xlu0 %1115
    %v1117 = vsel %vm1062, %v1099, 0.0
    %1118 = vadd.xlane.f32.xlu0 %v1117
    %v1119 = vpop.xlane.xlu0 %1118
    %v1120 = vsel %vm1058, %v1101, 0.0
    %1121 = vadd.xlane.f32.xlu0 %v1120
    %v1122 = vpop.xlane.xlu0 %1121
    %v1123 = vsel %vm1062, %v1103, 0.0
    %1124 = vadd.xlane.f32.xlu0 %v1123
    %v1125 = vpop.xlane.xlu0 %1124
    %v1126 = vsel %vm1058, %v1105, 0.0
    %1127 = vadd.xlane.f32.xlu0 %v1126
    %v1128 = vpop.xlane.xlu0 %1127
    %v1129 = vsel %vm1062, %v1107, 0.0
    %1130 = vadd.xlane.f32.xlu0 %v1129
    %v1131 = vpop.xlane.xlu0 %1130
    %v1132 = vrcp.pop %v1110
    %v1133 = vrcp.pop %v1113
    %v1134 = vrcp.pop %v1116
    %v1135 = vrcp.pop %v1119
    %v1136 = vrcp.pop %v1122
    %v1137 = vrcp.pop %v1125
    %v1138 = vrcp.pop %v1128
    %v1139 = vrcp.pop %v1131
    %v1140 = vmul.f32 %v1093, %v1132
    %v1141 = vmul.f32 %v1095, %v1133
    %v1142 = vmul.f32 %v1097, %v1134
    %v1143 = vmul.f32 %v1099, %v1135
    %v1144 = vmul.f32 %v1101, %v1136
    %v1145 = vmul.f32 %v1103, %v1137
    %v1146 = vmul.f32 %v1105, %v1138
    %v1147 = vmul.f32 %v1107, %v1139
    %v1148 = vpack.c.bf16 %v1141, %v1140
    %v1149 = vpack.c.bf16 %v1143, %v1142
    %v1150 = vpack.c.bf16 %v1145, %v1144
    %v1151 = vpack.c.bf16 %v1147, %v1146
    %v1153 = vsel %vm1058, %v1148, 0
    %vm1155 = vcmask 1044480
    %v1157 = vsel %vm1155, %v851, 0
    %1159 = vmatprep.subr.bf16.mxu0 0
    %1160 = vmatpush1.bf16.msra.mxu0 0
    %1161 = vmatprep.subr.bf16.mxu0 0
    %1162 = vmatpush1.bf16.msra.mxu0 0
    %1163 = vmatprep.subr.bf16.mxu0 0
    %1164 = vmatpush1.bf16.msra.mxu0 0
    %1165 = vmatprep.subr.bf16.mxu0 0
    %1166 = vmatpush1.bf16.msra.mxu0 0
    %1167 = vmatprep.subr.bf16.mxu0 0
    %1168 = vmatpush1.bf16.msra.mxu0 0
    %1169 = vmatprep.subr.bf16.mxu0 0
    %1170 = vmatpush1.bf16.msra.mxu0 0
    %1171 = vmatprep.subr.bf16.mxu0 0
    %1172 = vmatpush1.bf16.msra.mxu0 0
    %1173 = vmatprep.subr.bf16.mxu0 0
    %1174 = vmatpush1.bf16.msra.mxu0 %v1157
    %1175 = vmatprep.subr.bf16.mxu0 0
    %1176 = vmatpush2.bf16.msra.mxu0 0
    %1177 = vmatprep.subr.bf16.mxu0 0
    %1178 = vmatpush2.bf16.msra.mxu0 0
    %1179 = vmatprep.subr.bf16.mxu0 0
    %1180 = vmatpush2.bf16.msra.mxu0 0
    %1181 = vmatprep.subr.bf16.mxu0 0
    %1182 = vmatpush2.bf16.msra.mxu0 0
    %1183 = vmatprep.subr.bf16.mxu0 0
    %1184 = vmatpush2.bf16.msra.mxu0 0
    %1185 = vmatprep.subr.bf16.mxu0 0
    %1186 = vmatpush2.bf16.msra.mxu0 0
    %1187 = vmatprep.subr.bf16.mxu0 0
    %1188 = vmatpush2.bf16.msra.mxu0 0
    %1189 = vmatprep.subr.bf16.mxu0 0
    %1190 = vmatpush2.bf16.msra.mxu0 0
    %1191 = vmatprep.mubr.bf16.mxu0 0
    %1192 = vmatmul.mubr.bf16.gmra.mxu0 %v1153
    %v1193 = vpop.f32.mrf.mxu0
    %v1194 = vadd.f32 0.0, %v1193
    %v1195 = vpop.f32.mrf.mxu0
    %v1196 = vpop.f32.mrf.mxu0
    %v1197 = vadd.f32 0.0, %v1196
    %v1198 = vpop.f32.mrf.mxu0
    %1199 = vdwg.mxu0
    %v1201 = vsel %vm1058, %v1149, 0
    %v1204 = vsel %vm1155, %v852, 0
    %1206 = vmatprep.subr.bf16.mxu0 0
    %1207 = vmatpush1.bf16.msra.mxu0 0
    %1208 = vmatprep.subr.bf16.mxu0 0
    %1209 = vmatpush1.bf16.msra.mxu0 0
    %1210 = vmatprep.subr.bf16.mxu0 0
    %1211 = vmatpush1.bf16.msra.mxu0 0
    %1212 = vmatprep.subr.bf16.mxu0 0
    %1213 = vmatpush1.bf16.msra.mxu0 0
    %1214 = vmatprep.subr.bf16.mxu0 0
    %1215 = vmatpush1.bf16.msra.mxu0 0
    %1216 = vmatprep.subr.bf16.mxu0 0
    %1217 = vmatpush1.bf16.msra.mxu0 0
    %1218 = vmatprep.subr.bf16.mxu0 0
    %1219 = vmatpush1.bf16.msra.mxu0 0
    %1220 = vmatprep.subr.bf16.mxu0 0
    %1221 = vmatpush1.bf16.msra.mxu0 %v1204
    %1222 = vmatprep.subr.bf16.mxu0 0
    %1223 = vmatpush2.bf16.msra.mxu0 0
    %1224 = vmatprep.subr.bf16.mxu0 0
    %1225 = vmatpush2.bf16.msra.mxu0 0
    %1226 = vmatprep.subr.bf16.mxu0 0
    %1227 = vmatpush2.bf16.msra.mxu0 0
    %1228 = vmatprep.subr.bf16.mxu0 0
    %1229 = vmatpush2.bf16.msra.mxu0 0
    %1230 = vmatprep.subr.bf16.mxu0 0
    %1231 = vmatpush2.bf16.msra.mxu0 0
    %1232 = vmatprep.subr.bf16.mxu0 0
    %1233 = vmatpush2.bf16.msra.mxu0 0
    %1234 = vmatprep.subr.bf16.mxu0 0
    %1235 = vmatpush2.bf16.msra.mxu0 0
    %1236 = vmatprep.subr.bf16.mxu0 0
    %1237 = vmatpush2.bf16.msra.mxu0 0
    %1238 = vmatprep.mubr.bf16.mxu0 0
    %1239 = vmatmul.mubr.bf16.gmra.mxu0 %v1201
    %v1240 = vpop.f32.mrf.mxu0
    %v1241 = vadd.f32 0.0, %v1240
    %v1242 = vpop.f32.mrf.mxu0
    %v1243 = vpop.f32.mrf.mxu0
    %v1244 = vadd.f32 0.0, %v1243
    %v1245 = vpop.f32.mrf.mxu0
    %1246 = vdwg.mxu0
    %v1248 = vsel %vm1058, %v1150, 0
    %v1251 = vsel %vm1155, %v853, 0
    %1253 = vmatprep.subr.bf16.mxu0 0
    %1254 = vmatpush1.bf16.msra.mxu0 0
    %1255 = vmatprep.subr.bf16.mxu0 0
    %1256 = vmatpush1.bf16.msra.mxu0 0
    %1257 = vmatprep.subr.bf16.mxu0 0
    %1258 = vmatpush1.bf16.msra.mxu0 0
    %1259 = vmatprep.subr.bf16.mxu0 0
    %1260 = vmatpush1.bf16.msra.mxu0 0
    %1261 = vmatprep.subr.bf16.mxu0 0
    %1262 = vmatpush1.bf16.msra.mxu0 0
    %1263 = vmatprep.subr.bf16.mxu0 0
    %1264 = vmatpush1.bf16.msra.mxu0 0
    %1265 = vmatprep.subr.bf16.mxu0 0
    %1266 = vmatpush1.bf16.msra.mxu0 0
    %1267 = vmatprep.subr.bf16.mxu0 0
    %1268 = vmatpush1.bf16.msra.mxu0 %v1251
    %1269 = vmatprep.subr.bf16.mxu0 0
    %1270 = vmatpush2.bf16.msra.mxu0 0
    %1271 = vmatprep.subr.bf16.mxu0 0
    %1272 = vmatpush2.bf16.msra.mxu0 0
    %1273 = vmatprep.subr.bf16.mxu0 0
    %1274 = vmatpush2.bf16.msra.mxu0 0
    %1275 = vmatprep.subr.bf16.mxu0 0
    %1276 = vmatpush2.bf16.msra.mxu0 0
    %1277 = vmatprep.subr.bf16.mxu0 0
    %1278 = vmatpush2.bf16.msra.mxu0 0
    %1279 = vmatprep.subr.bf16.mxu0 0
    %1280 = vmatpush2.bf16.msra.mxu0 0
    %1281 = vmatprep.subr.bf16.mxu0 0
    %1282 = vmatpush2.bf16.msra.mxu0 0
    %1283 = vmatprep.subr.bf16.mxu0 0
    %1284 = vmatpush2.bf16.msra.mxu0 0
    %1285 = vmatprep.mubr.bf16.mxu0 0
    %1286 = vmatmul.mubr.bf16.gmra.mxu0 %v1248
    %v1287 = vpop.f32.mrf.mxu0
    %v1288 = vadd.f32 0.0, %v1287
    %v1289 = vpop.f32.mrf.mxu0
    %v1290 = vpop.f32.mrf.mxu0
    %v1291 = vadd.f32 0.0, %v1290
    %v1292 = vpop.f32.mrf.mxu0
    %1293 = vdwg.mxu0
    %v1295 = vsel %vm1058, %v1151, 0
    %v1298 = vsel %vm1155, %v854, 0
    %1300 = vmatprep.subr.bf16.mxu0 0
    %1301 = vmatpush1.bf16.msra.mxu0 0
    %1302 = vmatprep.subr.bf16.mxu0 0
    %1303 = vmatpush1.bf16.msra.mxu0 0
    %1304 = vmatprep.subr.bf16.mxu0 0
    %1305 = vmatpush1.bf16.msra.mxu0 0
    %1306 = vmatprep.subr.bf16.mxu0 0
    %1307 = vmatpush1.bf16.msra.mxu0 0
    %1308 = vmatprep.subr.bf16.mxu0 0
    %1309 = vmatpush1.bf16.msra.mxu0 0
    %1310 = vmatprep.subr.bf16.mxu0 0
    %1311 = vmatpush1.bf16.msra.mxu0 0
    %1312 = vmatprep.subr.bf16.mxu0 0
    %1313 = vmatpush1.bf16.msra.mxu0 0
    %1314 = vmatprep.subr.bf16.mxu0 0
    %1315 = vmatpush1.bf16.msra.mxu0 %v1298
    %1316 = vmatprep.subr.bf16.mxu0 0
    %1317 = vmatpush2.bf16.msra.mxu0 0
    %1318 = vmatprep.subr.bf16.mxu0 0
    %1319 = vmatpush2.bf16.msra.mxu0 0
    %1320 = vmatprep.subr.bf16.mxu0 0
    %1321 = vmatpush2.bf16.msra.mxu0 0
    %1322 = vmatprep.subr.bf16.mxu0 0
    %1323 = vmatpush2.bf16.msra.mxu0 0
    %1324 = vmatprep.subr.bf16.mxu0 0
    %1325 = vmatpush2.bf16.msra.mxu0 0
    %1326 = vmatprep.subr.bf16.mxu0 0
    %1327 = vmatpush2.bf16.msra.mxu0 0
    %1328 = vmatprep.subr.bf16.mxu0 0
    %1329 = vmatpush2.bf16.msra.mxu0 0
    %1330 = vmatprep.subr.bf16.mxu0 0
    %1331 = vmatpush2.bf16.msra.mxu0 0
    %1332 = vmatprep.mubr.bf16.mxu0 0
    %1333 = vmatmul.mubr.bf16.gmra.mxu0 %v1295
    %v1334 = vpop.f32.mrf.mxu0
    %v1335 = vadd.f32 0.0, %v1334
    %v1336 = vpop.f32.mrf.mxu0
    %v1337 = vpop.f32.mrf.mxu0
    %v1338 = vadd.f32 0.0, %v1337
    %v1339 = vpop.f32.mrf.mxu0
    %1340 = vdwg.mxu0
    %v1341 = vpack.c.bf16 %v1197, %v1194
    %v1342 = vpack.c.bf16 %v1244, %v1241
    %v1343 = vpack.c.bf16 %v1291, %v1288
    %v1344 = vpack.c.bf16 %v1338, %v1335
    %v1345 = vld [vmem:[%s9] sm:$0xf]
    %v1346 = vld [vmem:[%s9 + $0x4] sm:$0xf]
    %v1347 = vld [vmem:[%s9 + $0x8] sm:$0xf]
    %v1348 = vld [vmem:[%s9 + $0xc] sm:$0xf]
    %v1349 = vld [vmem:[%s9 + $0x10] sm:$0xf]
    %v1350 = vld [vmem:[%s9 + $0x14] sm:$0xf]
    %v1351 = vld [vmem:[%s9 + $0x18] sm:$0xf]
    %v1352 = vld [vmem:[%s9 + $0x1c] sm:$0xf]
    %v1355 = vunpack.c.l.b16 %v1345
    %v1356 = vunpack.c.l.b16 %v1346
    %v1357 = vpack.c.b16 %v1356, %v1355
    %v1360 = vsel %vm860, %v1341, 0
    %1362 = vmatprep.subr.bf16.mxu0 0
    %1363 = vmatpush1.bf16.msra.mxu0 0
    %1364 = vmatprep.subr.bf16.mxu0 0
    %1365 = vmatpush1.bf16.msra.mxu0 0
    %1366 = vmatprep.subr.bf16.mxu0 0
    %1367 = vmatpush1.bf16.msra.mxu0 0
    %1368 = vmatprep.subr.bf16.mxu0 0
    %1369 = vmatpush1.bf16.msra.mxu0 0
    %1370 = vmatprep.subr.bf16.mxu0 0
    %1371 = vmatpush1.bf16.msra.mxu0 0
    %1372 = vmatprep.subr.bf16.mxu0 0
    %1373 = vmatpush1.bf16.msra.mxu0 0
    %1374 = vmatprep.subr.bf16.mxu0 0
    %1375 = vmatpush1.bf16.msra.mxu0 0
    %1376 = vmatprep.subr.bf16.mxu0 0
    %1377 = vmatpush1.bf16.msra.mxu0 %v1357
    %1378 = vmatprep.subr.bf16.mxu0 0
    %1379 = vmatpush2.bf16.msra.mxu0 0
    %1380 = vmatprep.subr.bf16.mxu0 0
    %1381 = vmatpush2.bf16.msra.mxu0 0
    %1382 = vmatprep.subr.bf16.mxu0 0
    %1383 = vmatpush2.bf16.msra.mxu0 0
    %1384 = vmatprep.subr.bf16.mxu0 0
    %1385 = vmatpush2.bf16.msra.mxu0 0
    %1386 = vmatprep.subr.bf16.mxu0 0
    %1387 = vmatpush2.bf16.msra.mxu0 0
    %1388 = vmatprep.subr.bf16.mxu0 0
    %1389 = vmatpush2.bf16.msra.mxu0 0
    %1390 = vmatprep.subr.bf16.mxu0 0
    %1391 = vmatpush2.bf16.msra.mxu0 0
    %1392 = vmatprep.subr.bf16.mxu0 0
    %1393 = vmatpush2.bf16.msra.mxu0 0
    %1394 = vmatprep.mubr.bf16.mxu0 0
    %1395 = vmatmul.mubr.bf16.gmra.mxu0 %v1360
    %v1396 = vpop.f32.mrf.mxu0
    %v1397 = vadd.f32 0.0, %v1396
    %v1398 = vpop.f32.mrf.mxu0
    %v1399 = vpop.f32.mrf.mxu0
    %v1400 = vadd.f32 0.0, %v1399
    %v1401 = vpop.f32.mrf.mxu0
    %1402 = vdwg.mxu0
    %v1405 = vunpack.c.l.b16 %v1347
    %v1406 = vunpack.c.l.b16 %v1348
    %v1407 = vpack.c.b16 %v1406, %v1405
    %v1410 = vsel %vm860, %v1342, 0
    %1412 = vmatprep.subr.bf16.mxu0 0
    %1413 = vmatpush1.bf16.msra.mxu0 0
    %1414 = vmatprep.subr.bf16.mxu0 0
    %1415 = vmatpush1.bf16.msra.mxu0 0
    %1416 = vmatprep.subr.bf16.mxu0 0
    %1417 = vmatpush1.bf16.msra.mxu0 0
    %1418 = vmatprep.subr.bf16.mxu0 0
    %1419 = vmatpush1.bf16.msra.mxu0 0
    %1420 = vmatprep.subr.bf16.mxu0 0
    %1421 = vmatpush1.bf16.msra.mxu0 0
    %1422 = vmatprep.subr.bf16.mxu0 0
    %1423 = vmatpush1.bf16.msra.mxu0 0
    %1424 = vmatprep.subr.bf16.mxu0 0
    %1425 = vmatpush1.bf16.msra.mxu0 0
    %1426 = vmatprep.subr.bf16.mxu0 0
    %1427 = vmatpush1.bf16.msra.mxu0 %v1407
    %1428 = vmatprep.subr.bf16.mxu0 0
    %1429 = vmatpush2.bf16.msra.mxu0 0
    %1430 = vmatprep.subr.bf16.mxu0 0
    %1431 = vmatpush2.bf16.msra.mxu0 0
    %1432 = vmatprep.subr.bf16.mxu0 0
    %1433 = vmatpush2.bf16.msra.mxu0 0
    %1434 = vmatprep.subr.bf16.mxu0 0
    %1435 = vmatpush2.bf16.msra.mxu0 0
    %1436 = vmatprep.subr.bf16.mxu0 0
    %1437 = vmatpush2.bf16.msra.mxu0 0
    %1438 = vmatprep.subr.bf16.mxu0 0
    %1439 = vmatpush2.bf16.msra.mxu0 0
    %1440 = vmatprep.subr.bf16.mxu0 0
    %1441 = vmatpush2.bf16.msra.mxu0 0
    %1442 = vmatprep.subr.bf16.mxu0 0
    %1443 = vmatpush2.bf16.msra.mxu0 0
    %1444 = vmatprep.mubr.bf16.mxu0 0
    %1445 = vmatmul.mubr.bf16.gmra.mxu0 %v1410
    %v1446 = vpop.f32.mrf.mxu0
    %v1447 = vadd.f32 0.0, %v1446
    %v1448 = vpop.f32.mrf.mxu0
    %v1449 = vpop.f32.mrf.mxu0
    %v1450 = vadd.f32 0.0, %v1449
    %v1451 = vpop.f32.mrf.mxu0
    %1452 = vdwg.mxu0
    %v1455 = vunpack.c.l.b16 %v1349
    %v1456 = vunpack.c.l.b16 %v1350
    %v1457 = vpack.c.b16 %v1456, %v1455
    %v1460 = vsel %vm860, %v1343, 0
    %1462 = vmatprep.subr.bf16.mxu0 0
    %1463 = vmatpush1.bf16.msra.mxu0 0
    %1464 = vmatprep.subr.bf16.mxu0 0
    %1465 = vmatpush1.bf16.msra.mxu0 0
    %1466 = vmatprep.subr.bf16.mxu0 0
    %1467 = vmatpush1.bf16.msra.mxu0 0
    %1468 = vmatprep.subr.bf16.mxu0 0
    %1469 = vmatpush1.bf16.msra.mxu0 0
    %1470 = vmatprep.subr.bf16.mxu0 0
    %1471 = vmatpush1.bf16.msra.mxu0 0
    %1472 = vmatprep.subr.bf16.mxu0 0
    %1473 = vmatpush1.bf16.msra.mxu0 0
    %1474 = vmatprep.subr.bf16.mxu0 0
    %1475 = vmatpush1.bf16.msra.mxu0 0
    %1476 = vmatprep.subr.bf16.mxu0 0
    %1477 = vmatpush1.bf16.msra.mxu0 %v1457
    %1478 = vmatprep.subr.bf16.mxu0 0
    %1479 = vmatpush2.bf16.msra.mxu0 0
    %1480 = vmatprep.subr.bf16.mxu0 0
    %1481 = vmatpush2.bf16.msra.mxu0 0
    %1482 = vmatprep.subr.bf16.mxu0 0
    %1483 = vmatpush2.bf16.msra.mxu0 0
    %1484 = vmatprep.subr.bf16.mxu0 0
    %1485 = vmatpush2.bf16.msra.mxu0 0
    %1486 = vmatprep.subr.bf16.mxu0 0
    %1487 = vmatpush2.bf16.msra.mxu0 0
    %1488 = vmatprep.subr.bf16.mxu0 0
    %1489 = vmatpush2.bf16.msra.mxu0 0
    %1490 = vmatprep.subr.bf16.mxu0 0
    %1491 = vmatpush2.bf16.msra.mxu0 0
    %1492 = vmatprep.subr.bf16.mxu0 0
    %1493 = vmatpush2.bf16.msra.mxu0 0
    %1494 = vmatprep.mubr.bf16.mxu0 0
    %1495 = vmatmul.mubr.bf16.gmra.mxu0 %v1460
    %v1496 = vpop.f32.mrf.mxu0
    %v1497 = vadd.f32 0.0, %v1496
    %v1498 = vpop.f32.mrf.mxu0
    %v1499 = vpop.f32.mrf.mxu0
    %v1500 = vadd.f32 0.0, %v1499
    %v1501 = vpop.f32.mrf.mxu0
    %1502 = vdwg.mxu0
    %v1505 = vunpack.c.l.b16 %v1351
    %v1506 = vunpack.c.l.b16 %v1352
    %v1507 = vpack.c.b16 %v1506, %v1505
    %v1510 = vsel %vm860, %v1344, 0
    %1512 = vmatprep.subr.bf16.mxu0 0
    %1513 = vmatpush1.bf16.msra.mxu0 0
    %1514 = vmatprep.subr.bf16.mxu0 0
    %1515 = vmatpush1.bf16.msra.mxu0 0
    %1516 = vmatprep.subr.bf16.mxu0 0
    %1517 = vmatpush1.bf16.msra.mxu0 0
    %1518 = vmatprep.subr.bf16.mxu0 0
    %1519 = vmatpush1.bf16.msra.mxu0 0
    %1520 = vmatprep.subr.bf16.mxu0 0
    %1521 = vmatpush1.bf16.msra.mxu0 0
    %1522 = vmatprep.subr.bf16.mxu0 0
    %1523 = vmatpush1.bf16.msra.mxu0 0
    %1524 = vmatprep.subr.bf16.mxu0 0
    %1525 = vmatpush1.bf16.msra.mxu0 0
    %1526 = vmatprep.subr.bf16.mxu0 0
    %1527 = vmatpush1.bf16.msra.mxu0 %v1507
    %1528 = vmatprep.subr.bf16.mxu0 0
    %1529 = vmatpush2.bf16.msra.mxu0 0
    %1530 = vmatprep.subr.bf16.mxu0 0
    %1531 = vmatpush2.bf16.msra.mxu0 0
    %1532 = vmatprep.subr.bf16.mxu0 0
    %1533 = vmatpush2.bf16.msra.mxu0 0
    %1534 = vmatprep.subr.bf16.mxu0 0
    %1535 = vmatpush2.bf16.msra.mxu0 0
    %1536 = vmatprep.subr.bf16.mxu0 0
    %1537 = vmatpush2.bf16.msra.mxu0 0
    %1538 = vmatprep.subr.bf16.mxu0 0
    %1539 = vmatpush2.bf16.msra.mxu0 0
    %1540 = vmatprep.subr.bf16.mxu0 0
    %1541 = vmatpush2.bf16.msra.mxu0 0
    %1542 = vmatprep.subr.bf16.mxu0 0
    %1543 = vmatpush2.bf16.msra.mxu0 0
    %1544 = vmatprep.mubr.bf16.mxu0 0
    %1545 = vmatmul.mubr.bf16.gmra.mxu0 %v1510
    %v1546 = vpop.f32.mrf.mxu0
    %v1547 = vadd.f32 0.0, %v1546
    %v1548 = vpop.f32.mrf.mxu0
    %v1549 = vpop.f32.mrf.mxu0
    %v1550 = vadd.f32 0.0, %v1549
    %v1551 = vpop.f32.mrf.mxu0
    %1552 = vdwg.mxu0
    %v1553 = vadd.f32 %v1397, %v1447
    %v1554 = vadd.f32 %v1400, %v1450
    %v1555 = vadd.f32 %v1553, %v1497
    %v1556 = vadd.f32 %v1554, %v1500
    %v1557 = vadd.f32 %v1555, %v1547
    %v1558 = vadd.f32 %v1556, %v1550
    %v1559 = vadd.f32 %v632, %v1557
    %v1560 = vadd.f32 %v633, %v1558
    %v1561 = vld [vmem:[%s2 + $0xa] sm:$0x1]
    %v1562 = vlaneseq
    %v1563 = vshrl.u32 %v1562, 7
    %v1564 = vsub.s32 0, %v1563
    %v1565 = vrot.slane %v1561, %v1564
    %v1566 = vadd.f32 %v1559, %v1565
    %v1567 = vadd.f32 %v1560, %v1565
    %v1568 = vld [vmem:[%s2 + $0x6] sm:$0x1]
    %v1569 = vld [vmem:[%s2 + $0x8] sm:$0x1]
    %v1570 = vsel %vm593, %v1566, 0.0
    %1571 = vadd.xlane.f32.xlu0 %v1570
    %v1572 = vpop.xlane.xlu0 %1571
    %v1573 = vsel %vm597, %v1567, 0.0
    %1574 = vadd.xlane.f32.xlu0 %v1573
    %v1575 = vpop.xlane.xlu0 %1574
    %v1576 = vmul.f32 %v1572, %v601
    %v1577 = vmul.f32 %v1575, %v601
    %v1578 = vsub.f32 %v1566, %v1576
    %v1579 = vsub.f32 %v1567, %v1577
    %v1580 = vmul.f32 %v1578, %v1578
    %v1581 = vmul.f32 %v1579, %v1579
    %v1582 = vsel %vm593, %v1580, 0.0
    %1583 = vadd.xlane.f32.xlu0 %v1582
    %v1584 = vpop.xlane.xlu0 %1583
    %v1585 = vsel %vm597, %v1581, 0.0
    %1586 = vadd.xlane.f32.xlu0 %v1585
    %v1587 = vpop.xlane.xlu0 %1586
    %v1588 = vmul.f32 %v1584, %v601
    %v1589 = vmul.f32 %v1587, %v601
    %v1590 = vadd.f32 %v1588, 1e-05
    %v1591 = vadd.f32 %v1589, 1e-05
    %v1592 = vrsqrt.pop %v1590
    %v1593 = vrsqrt.pop %v1591
    %v1594 = vmul.f32 %v1578, %v1592
    %v1595 = vmul.f32 %v1579, %v1593
    %v1596 = vlaneseq
    %v1597 = vshrl.u32 %v1596, 7
    %v1598 = vsub.s32 0, %v1597
    %v1599 = vrot.slane %v1568, %v1598
    %v1600 = vmul.f32 %v1594, %v1599
    %v1601 = vmul.f32 %v1595, %v1599
    %v1602 = vlaneseq
    %v1603 = vshrl.u32 %v1602, 7
    %v1604 = vsub.s32 0, %v1603
    %v1605 = vrot.slane %v1569, %v1604
    %v1606 = vadd.f32 %v1600, %v1605
    %v1607 = vadd.f32 %v1601, %v1605
    %v1608 = vpack.c.bf16 %v1607, %v1606
    %v1609 = vld [vmem:[%s10] sm:$0xf]
    %v1610 = vld [vmem:[%s10 + $0x4] sm:$0xf]
    %v1611 = vld [vmem:[%s10 + $0x8] sm:$0xf]
    %v1612 = vld [vmem:[%s10 + $0xc] sm:$0xf]
    %v1613 = vld [vmem:[%s10 + $0x10] sm:$0xf]
    %v1614 = vld [vmem:[%s10 + $0x14] sm:$0xf]
    %v1615 = vld [vmem:[%s10 + $0x18] sm:$0xf]
    %v1616 = vld [vmem:[%s10 + $0x1c] sm:$0xf]
    %v1617 = vld [vmem:[%s6] sm:$0x1]
    %v1618 = vlaneseq
    %v1619 = vshrl.u32 %v1618, 7
    %v1620 = vsub.s32 0, %v1619
    %v1621 = vrot.slane %v1617, %v1620
    %v1630 = vunpack.c.l.b16 %v1609
    %v1631 = vunpack.c.l.b16 %v1610
    %v1632 = vunpack.c.l.b16 %v1611
    %v1633 = vunpack.c.l.b16 %v1612
    %v1634 = vunpack.c.l.b16 %v1613
    %v1635 = vunpack.c.l.b16 %v1614
    %v1636 = vunpack.c.l.b16 %v1615
    %v1637 = vunpack.c.l.b16 %v1616
    %v1638 = vpack.c.b16 %v1631, %v1630
    %v1639 = vpack.c.b16 %v1633, %v1632
    %v1640 = vpack.c.b16 %v1635, %v1634
    %v1641 = vpack.c.b16 %v1637, %v1636
    %v1647 = vsel %vm593, %v1608, 0
    %1649 = vmatprep.subr.bf16.mxu0 0
    %1650 = vmatpush1.bf16.msra.mxu0 0
    %1651 = vmatprep.subr.bf16.mxu0 0
    %1652 = vmatpush1.bf16.msra.mxu0 0
    %1653 = vmatprep.subr.bf16.mxu0 0
    %1654 = vmatpush1.bf16.msra.mxu0 0
    %1655 = vmatprep.subr.bf16.mxu0 0
    %1656 = vmatpush1.bf16.msra.mxu0 0
    %1657 = vmatprep.subr.bf16.mxu0 0
    %1658 = vmatpush1.bf16.msra.mxu0 %v1641
    %1659 = vmatprep.subr.bf16.mxu0 0
    %1660 = vmatpush1.bf16.msra.mxu0 %v1640
    %1661 = vmatprep.subr.bf16.mxu0 0
    %1662 = vmatpush1.bf16.msra.mxu0 %v1639
    %1663 = vmatprep.subr.bf16.mxu0 0
    %1664 = vmatpush1.bf16.msra.mxu0 %v1638
    %1665 = vmatprep.subr.bf16.mxu0 0
    %1666 = vmatpush2.bf16.msra.mxu0 0
    %1667 = vmatprep.subr.bf16.mxu0 0
    %1668 = vmatpush2.bf16.msra.mxu0 0
    %1669 = vmatprep.subr.bf16.mxu0 0
    %1670 = vmatpush2.bf16.msra.mxu0 0
    %1671 = vmatprep.subr.bf16.mxu0 0
    %1672 = vmatpush2.bf16.msra.mxu0 0
    %1673 = vmatprep.subr.bf16.mxu0 0
    %1674 = vmatpush2.bf16.msra.mxu0 0
    %1675 = vmatprep.subr.bf16.mxu0 0
    %1676 = vmatpush2.bf16.msra.mxu0 0
    %1677 = vmatprep.subr.bf16.mxu0 0
    %1678 = vmatpush2.bf16.msra.mxu0 0
    %1679 = vmatprep.subr.bf16.mxu0 0
    %1680 = vmatpush2.bf16.msra.mxu0 0
    %1681 = vmatprep.mubr.bf16.mxu0 0
    %1682 = vmatmul.mubr.bf16.gmra.mxu0 %v1647
    %v1683 = vpop.f32.mrf.mxu0
    %v1684 = vadd.f32 %v1621, %v1683
    %v1685 = vpop.f32.mrf.mxu0
    %v1686 = vpop.f32.mrf.mxu0
    %v1687 = vadd.f32 %v1621, %v1686
    %v1688 = vpop.f32.mrf.mxu0
    %1689 = vdwg.mxu0
    %v1690 = vmul.f32 %v1684, 1.702
    %v1691 = vmul.f32 %v1687, 1.702
    %v1692 = vxor.u32 %v1690, 2147483648
    %v1693 = vxor.u32 %v1691, 2147483648
    %v1694 = vmul.f32 %v1692, 1.442695
    %v1695 = vpow.pop %v1694
    %v1696 = vmul.f32 %v1693, 1.442695
    %v1697 = vpow.pop %v1696
    %v1698 = vadd.f32 %v1695, 1.0
    %v1699 = vadd.f32 %v1697, 1.0
    %v1700 = vrcp.pop %v1698
    %v1701 = vmul.f32 1.0, %v1700
    %v1702 = vrcp.pop %v1699
    %v1703 = vmul.f32 1.0, %v1702
    %v1704 = vmul.f32 %v1684, %v1701
    %v1705 = vmul.f32 %v1687, %v1703
    %v1706 = vpack.c.bf16 %v1705, %v1704
    %v1707 = vld [vmem:[%s11] sm:$0xf]
    %v1708 = vld [vmem:[%s11 + $0x4] sm:$0xf]
    %v1709 = vld [vmem:[%s11 + $0x8] sm:$0xf]
    %v1710 = vld [vmem:[%s11 + $0xc] sm:$0xf]
    %v1711 = vld [vmem:[%s11 + $0x10] sm:$0xf]
    %v1712 = vld [vmem:[%s11 + $0x14] sm:$0xf]
    %v1713 = vld [vmem:[%s11 + $0x18] sm:$0xf]
    %v1714 = vld [vmem:[%s11 + $0x1c] sm:$0xf]
    %v1715 = vld [vmem:[%s11 + $0x20] sm:$0xf]
    %v1716 = vld [vmem:[%s11 + $0x24] sm:$0xf]
    %v1717 = vld [vmem:[%s11 + $0x28] sm:$0xf]
    %v1718 = vld [vmem:[%s11 + $0x2c] sm:$0xf]
    %v1719 = vld [vmem:[%s11 + $0x30] sm:$0xf]
    %v1720 = vld [vmem:[%s11 + $0x34] sm:$0xf]
    %v1721 = vld [vmem:[%s11 + $0x38] sm:$0xf]
    %v1722 = vld [vmem:[%s11 + $0x3c] sm:$0xf]
    %v1723 = vld [vmem:[%s2 + $0xc] sm:$0x1]
    %v1724 = vlaneseq
    %v1725 = vshrl.u32 %v1724, 7
    %v1726 = vsub.s32 0, %v1725
    %v1727 = vrot.slane %v1723, %v1726
    %v1744 = vunpack.c.l.b16 %v1707
    %v1745 = vunpack.c.l.b16 %v1708
    %v1746 = vunpack.c.l.b16 %v1709
    %v1747 = vunpack.c.l.b16 %v1710
    %v1748 = vunpack.c.l.b16 %v1711
    %v1749 = vunpack.c.l.b16 %v1712
    %v1750 = vunpack.c.l.b16 %v1713
    %v1751 = vunpack.c.l.b16 %v1714
    %v1752 = vunpack.c.l.b16 %v1715
    %v1753 = vunpack.c.l.b16 %v1716
    %v1754 = vunpack.c.l.b16 %v1717
    %v1755 = vunpack.c.l.b16 %v1718
    %v1756 = vunpack.c.l.b16 %v1719
    %v1757 = vunpack.c.l.b16 %v1720
    %v1758 = vunpack.c.l.b16 %v1721
    %v1759 = vunpack.c.l.b16 %v1722
    %v1760 = vpack.c.b16 %v1745, %v1744
    %v1761 = vpack.c.b16 %v1747, %v1746
    %v1762 = vpack.c.b16 %v1749, %v1748
    %v1763 = vpack.c.b16 %v1751, %v1750
    %v1764 = vpack.c.b16 %v1753, %v1752
    %v1765 = vpack.c.b16 %v1755, %v1754
    %v1766 = vpack.c.b16 %v1757, %v1756
    %v1767 = vpack.c.b16 %v1759, %v1758
    %1776 = vmatprep.subr.bf16.mxu0 0
    %1777 = vmatpush1.bf16.msra.mxu0 %v1767
    %1778 = vmatprep.subr.bf16.mxu0 0
    %1779 = vmatpush1.bf16.msra.mxu0 %v1766
    %1780 = vmatprep.subr.bf16.mxu0 0
    %1781 = vmatpush1.bf16.msra.mxu0 %v1765
    %1782 = vmatprep.subr.bf16.mxu0 0
    %1783 = vmatpush1.bf16.msra.mxu0 %v1764
    %1784 = vmatprep.subr.bf16.mxu0 0
    %1785 = vmatpush1.bf16.msra.mxu0 %v1763
    %1786 = vmatprep.subr.bf16.mxu0 0
    %1787 = vmatpush1.bf16.msra.mxu0 %v1762
    %1788 = vmatprep.subr.bf16.mxu0 0
    %1789 = vmatpush1.bf16.msra.mxu0 %v1761
    %1790 = vmatprep.subr.bf16.mxu0 0
    %1791 = vmatpush1.bf16.msra.mxu0 %v1760
    %1792 = vmatprep.subr.bf16.mxu0 0
    %1793 = vmatpush2.bf16.msra.mxu0 0
    %1794 = vmatprep.subr.bf16.mxu0 0
    %1795 = vmatpush2.bf16.msra.mxu0 0
    %1796 = vmatprep.subr.bf16.mxu0 0
    %1797 = vmatpush2.bf16.msra.mxu0 0
    %1798 = vmatprep.subr.bf16.mxu0 0
    %1799 = vmatpush2.bf16.msra.mxu0 0
    %1800 = vmatprep.subr.bf16.mxu0 0
    %1801 = vmatpush2.bf16.msra.mxu0 0
    %1802 = vmatprep.subr.bf16.mxu0 0
    %1803 = vmatpush2.bf16.msra.mxu0 0
    %1804 = vmatprep.subr.bf16.mxu0 0
    %1805 = vmatpush2.bf16.msra.mxu0 0
    %1806 = vmatprep.subr.bf16.mxu0 0
    %1807 = vmatpush2.bf16.msra.mxu0 0
    %1808 = vmatprep.mubr.bf16.mxu0 0
    %1809 = vmatmul.mubr.bf16.gmra.mxu0 %v1706
    %v1810 = vpop.f32.mrf.mxu0
    %v1811 = vadd.f32 %v1727, %v1810
    %v1812 = vpop.f32.mrf.mxu0
    %v1813 = vpop.f32.mrf.mxu0
    %v1814 = vadd.f32 %v1727, %v1813
    %v1815 = vpop.f32.mrf.mxu0
    %1816 = vdwg.mxu0
    %v1817 = vadd.f32 %v1566, %v1811
    %v1818 = vadd.f32 %v1567, %v1814
    %v1819 = vld [vmem:[%s2 + $0x3] sm:$0x1]
    %v1820 = vld [vmem:[%s2 + $0x5] sm:$0x1]
    %v1821 = vsel %vm593, %v1817, 0.0
    %1822 = vadd.xlane.f32.xlu0 %v1821
    %v1823 = vpop.xlane.xlu0 %1822
    %v1824 = vsel %vm597, %v1818, 0.0
    %1825 = vadd.xlane.f32.xlu0 %v1824
    %v1826 = vpop.xlane.xlu0 %1825
    %v1827 = vmul.f32 %v1823, %v601
    %v1828 = vmul.f32 %v1826, %v601
    %v1829 = vsub.f32 %v1817, %v1827
    %v1830 = vsub.f32 %v1818, %v1828
    %v1831 = vmul.f32 %v1829, %v1829
    %v1832 = vmul.f32 %v1830, %v1830
    %v1833 = vsel %vm593, %v1831, 0.0
    %1834 = vadd.xlane.f32.xlu0 %v1833
    %v1835 = vpop.xlane.xlu0 %1834
    %v1836 = vsel %vm597, %v1832, 0.0
    %1837 = vadd.xlane.f32.xlu0 %v1836
    %v1838 = vpop.xlane.xlu0 %1837
    %v1839 = vmul.f32 %v1835, %v601
    %v1840 = vmul.f32 %v1838, %v601
    %v1841 = vadd.f32 %v1839, 1e-05
    %v1842 = vadd.f32 %v1840, 1e-05
    %v1843 = vrsqrt.pop %v1841
    %v1844 = vrsqrt.pop %v1842
    %v1845 = vmul.f32 %v1829, %v1843
    %v1846 = vmul.f32 %v1830, %v1844
    %v1847 = vlaneseq
    %v1848 = vshrl.u32 %v1847, 7
    %v1849 = vsub.s32 0, %v1848
    %v1850 = vrot.slane %v1819, %v1849
    %v1851 = vmul.f32 %v1845, %v1850
    %v1852 = vmul.f32 %v1846, %v1850
    %v1853 = vlaneseq
    %v1854 = vshrl.u32 %v1853, 7
    %v1855 = vsub.s32 0, %v1854
    %v1856 = vrot.slane %v1820, %v1855
    %v1857 = vadd.f32 %v1851, %v1856
    %v1858 = vadd.f32 %v1852, %v1856
    %v1859 = vpack.c.bf16 %v1858, %v1857
    %s1860 = scalar_lea.vmem %s8, 64
    %v1861 = vld [vmem:[%s1860] sm:$0xff]
    %v1862 = vld [vmem:[%s1860 + $0x8] sm:$0xff]
    %v1863 = vld [vmem:[%s1860 + $0x10] sm:$0xff]
    %v1864 = vld [vmem:[%s1860 + $0x18] sm:$0xff]
    %v1865 = vld [vmem:[%s1860 + $0x20] sm:$0xff]
    %v1866 = vld [vmem:[%s1860 + $0x28] sm:$0xff]
    %v1867 = vld [vmem:[%s1860 + $0x30] sm:$0xff]
    %v1868 = vld [vmem:[%s1860 + $0x38] sm:$0xff]
    %s1869 = scalar_lea.vmem %s5, 1
    %v1870 = vld [vmem:[%s1869] ss:$2 sm:$0x3]
    %v1872 = vlaneseq
    %v1873 = vshrl.u32 %v1872, 7
    %v1874 = vsub.s32 0, %v1873
    %v1875 = vrot.slane %v1870, %v1874
    %v1876 = vlaneseq
    %v1877 = vshrl.u32 %v1876, 7
    %v1878 = vsub.s32 1, %v1877
    %v1879 = vrot.slane %v1870, %v1878
    %v1890 = vunpack.c.l.b16 %v1861
    %v1891 = vunpack.c.h.b16 %v1861
    %v1892 = vunpack.c.l.b16 %v1862
    %v1893 = vunpack.c.h.b16 %v1862
    %v1894 = vunpack.c.l.b16 %v1863
    %v1895 = vunpack.c.h.b16 %v1863
    %v1896 = vunpack.c.l.b16 %v1864
    %v1897 = vunpack.c.h.b16 %v1864
    %v1898 = vunpack.c.l.b16 %v1865
    %v1899 = vunpack.c.h.b16 %v1865
    %v1900 = vunpack.c.l.b16 %v1866
    %v1901 = vunpack.c.h.b16 %v1866
    %v1902 = vunpack.c.l.b16 %v1867
    %v1903 = vunpack.c.h.b16 %v1867
    %v1904 = vunpack.c.l.b16 %v1868
    %v1905 = vunpack.c.h.b16 %v1868
    %v1906 = vpack.c.b16 %v1892, %v1890
    %v1907 = vpack.c.b16 %v1893, %v1891
    %v1908 = vpack.c.b16 %v1896, %v1894
    %v1909 = vpack.c.b16 %v1897, %v1895
    %v1910 = vpack.c.b16 %v1900, %v1898
    %v1911 = vpack.c.b16 %v1901, %v1899
    %v1912 = vpack.c.b16 %v1904, %v1902
    %v1913 = vpack.c.b16 %v1905, %v1903
    %v1923 = vsel %vm593, %v1859, 0
    %1925 = vmatprep.subr.bf16.mxu0 0
    %1926 = vmatpush1.bf16.msra.mxu0 0
    %1927 = vmatprep.subr.bf16.mxu0 0
    %1928 = vmatpush1.bf16.msra.mxu0 0
    %1929 = vmatprep.subr.bf16.mxu0 0
    %1930 = vmatpush1.bf16.msra.mxu0 0
    %1931 = vmatprep.subr.bf16.mxu0 0
    %1932 = vmatpush1.bf16.msra.mxu0 0
    %1933 = vmatprep.subr.bf16.mxu0 %v1913
    %1934 = vmatpush1.bf16.msra.mxu0 %v1912
    %1935 = vmatprep.subr.bf16.mxu0 %v1911
    %1936 = vmatpush1.bf16.msra.mxu0 %v1910
    %1937 = vmatprep.subr.bf16.mxu0 %v1909
    %1938 = vmatpush1.bf16.msra.mxu0 %v1908
    %1939 = vmatprep.subr.bf16.mxu0 %v1907
    %1940 = vmatpush1.bf16.msra.mxu0 %v1906
    %1941 = vmatprep.subr.bf16.mxu0 0
    %1942 = vmatpush2.bf16.msra.mxu0 0
    %1943 = vmatprep.subr.bf16.mxu0 0
    %1944 = vmatpush2.bf16.msra.mxu0 0
    %1945 = vmatprep.subr.bf16.mxu0 0
    %1946 = vmatpush2.bf16.msra.mxu0 0
    %1947 = vmatprep.subr.bf16.mxu0 0
    %1948 = vmatpush2.bf16.msra.mxu0 0
    %1949 = vmatprep.subr.bf16.mxu0 0
    %1950 = vmatpush2.bf16.msra.mxu0 0
    %1951 = vmatprep.subr.bf16.mxu0 0
    %1952 = vmatpush2.bf16.msra.mxu0 0
    %1953 = vmatprep.subr.bf16.mxu0 0
    %1954 = vmatpush2.bf16.msra.mxu0 0
    %1955 = vmatprep.subr.bf16.mxu0 0
    %1956 = vmatpush2.bf16.msra.mxu0 0
    %1957 = vmatprep.mubr.bf16.mxu0 0
    %1958 = vmatmul.mubr.bf16.gmra.mxu0 %v1923
    %v1959 = vpop.f32.mrf.mxu0
    %v1960 = vadd.f32 %v1875, %v1959
    %v1961 = vpop.f32.mrf.mxu0
    %v1962 = vadd.f32 %v1879, %v1961
    %v1963 = vpop.f32.mrf.mxu0
    %v1964 = vadd.f32 %v1875, %v1963
    %v1965 = vpop.f32.mrf.mxu0
    %v1966 = vadd.f32 %v1879, %v1965
    %1967 = vdwg.mxu0
    %v1968 = vmul.f32 %v1960, 0.25
    %v1969 = vmul.f32 %v1964, 0.25
    %1972 = vrot.lane.b32.xlu0 %v1968, 112
    %v1973 = vpop.permute.xlu0 %1972
    %1974 = vrot.lane.b32.xlu0 %v1969, 112
    %v1975 = vpop.permute.xlu0 %1974
    %1978 = vrot.lane.b32.xlu0 %v1968, 96
    %v1979 = vpop.permute.xlu0 %1978
    %1980 = vrot.lane.b32.xlu0 %v1969, 96
    %v1981 = vpop.permute.xlu0 %1980
    %1984 = vrot.lane.b32.xlu0 %v1968, 80
    %v1985 = vpop.permute.xlu0 %1984
    %1986 = vrot.lane.b32.xlu0 %v1969, 80
    %v1987 = vpop.permute.xlu0 %1986
    %v1990 = vpack.c.bf16 %v1969, %v1968
    %v1991 = vpack.c.bf16 %v1975, %v1973
    %v1992 = vpack.c.bf16 %v1981, %v1979
    %v1993 = vpack.c.bf16 %v1987, %v1985
    %1996 = vrot.lane.b32.xlu0 %v1960, 112
    %v1997 = vpop.permute.xlu0 %1996
    %1998 = vrot.lane.b32.xlu0 %v1964, 112
    %v1999 = vpop.permute.xlu0 %1998
    %2002 = vrot.lane.b32.xlu0 %v1960, 96
    %v2003 = vpop.permute.xlu0 %2002
    %2004 = vrot.lane.b32.xlu0 %v1964, 96
    %v2005 = vpop.permute.xlu0 %2004
    %2008 = vrot.lane.b32.xlu0 %v1960, 80
    %v2009 = vpop.permute.xlu0 %2008
    %2010 = vrot.lane.b32.xlu0 %v1964, 80
    %v2011 = vpop.permute.xlu0 %2010
    %v2014 = vpack.c.bf16 %v1964, %v1960
    %v2015 = vpack.c.bf16 %v1999, %v1997
    %v2016 = vpack.c.bf16 %v2005, %v2003
    %v2017 = vpack.c.bf16 %v2011, %v2009
    %2020 = vrot.lane.b32.xlu0 %v1962, 112
    %v2021 = vpop.permute.xlu0 %2020
    %2022 = vrot.lane.b32.xlu0 %v1966, 112
    %v2023 = vpop.permute.xlu0 %2022
    %2026 = vrot.lane.b32.xlu0 %v1962, 96
    %v2027 = vpop.permute.xlu0 %2026
    %2028 = vrot.lane.b32.xlu0 %v1966, 96
    %v2029 = vpop.permute.xlu0 %2028
    %2032 = vrot.lane.b32.xlu0 %v1962, 80
    %v2033 = vpop.permute.xlu0 %2032
    %2034 = vrot.lane.b32.xlu0 %v1966, 80
    %v2035 = vpop.permute.xlu0 %2034
    %v2038 = vpack.c.bf16 %v1966, %v1962
    %v2039 = vpack.c.bf16 %v2023, %v2021
    %v2040 = vpack.c.bf16 %v2029, %v2027
    %v2041 = vpack.c.bf16 %v2035, %v2033
    %v2042 = vld [vmem:[%s3] sm:$0xff]
    %v2043 = vld [vmem:[%s3 + $0x8] sm:$0x3]
    %2045 = vrot.lane.b32.xlu0 %v2014, 64
    %v2046 = vpop.permute.xlu0 %2045
    %v2048 = vsel %vm860, %v1990, 0
    %v2051 = vsel %vm860, %v2046, 0
    %2053 = vmatprep.subr.bf16.mxu0 0
    %2054 = vmatpush1.bf16.xpose.msra.mxu0 0
    %2055 = vmatprep.subr.bf16.mxu0 0
    %2056 = vmatpush1.bf16.xpose.msra.mxu0 0
    %2057 = vmatprep.subr.bf16.mxu0 0
    %2058 = vmatpush1.bf16.xpose.msra.mxu0 0
    %2059 = vmatprep.subr.bf16.mxu0 0
    %2060 = vmatpush1.bf16.xpose.msra.mxu0 0
    %2061 = vmatprep.subr.bf16.mxu0 0
    %2062 = vmatpush1.bf16.xpose.msra.mxu0 0
    %2063 = vmatprep.subr.bf16.mxu0 0
    %2064 = vmatpush1.bf16.xpose.msra.mxu0 0
    %2065 = vmatprep.subr.bf16.mxu0 0
    %2066 = vmatpush1.bf16.xpose.msra.mxu0 0
    %2067 = vmatprep.subr.bf16.mxu0 0
    %2068 = vmatpush1.bf16.xpose.msra.mxu0 %v2051
    %2069 = vmatprep.subr.bf16.mxu0 0
    %2070 = vmatpush2.bf16.xpose.msra.mxu0 0
    %2071 = vmatprep.subr.bf16.mxu0 0
    %2072 = vmatpush2.bf16.xpose.msra.mxu0 0
    %2073 = vmatprep.subr.bf16.mxu0 0
    %2074 = vmatpush2.bf16.xpose.msra.mxu0 0
    %2075 = vmatprep.subr.bf16.mxu0 0
    %2076 = vmatpush2.bf16.xpose.msra.mxu0 0
    %2077 = vmatprep.subr.bf16.mxu0 0
    %2078 = vmatpush2.bf16.xpose.msra.mxu0 0
    %2079 = vmatprep.subr.bf16.mxu0 0
    %2080 = vmatpush2.bf16.xpose.msra.mxu0 0
    %2081 = vmatprep.subr.bf16.mxu0 0
    %2082 = vmatpush2.bf16.xpose.msra.mxu0 0
    %2083 = vmatprep.subr.bf16.mxu0 0
    %2084 = vmatpush2.bf16.xpose.msra.mxu0 0
    %2085 = vmatprep.mubr.bf16.mxu0 0
    %2086 = vmatmul.mubr.bf16.gmra.mxu0 %v2048
    %v2087 = vpop.f32.mrf.mxu0
    %v2088 = vadd.f32 %v2042, %v2087
    %v2089 = vpop.f32.mrf.mxu0
    %v2090 = vpop.f32.mrf.mxu0
    %v2091 = vadd.f32 %v2043, %v2090
    %v2092 = vpop.f32.mrf.mxu0
    %2093 = vdwg.mxu0
    %2095 = vrot.lane.b32.xlu0 %v2015, 64
    %v2096 = vpop.permute.xlu0 %2095
    %v2098 = vsel %vm860, %v1991, 0
    %v2101 = vsel %vm860, %v2096, 0
    %2103 = vmatprep.subr.bf16.mxu0 0
    %2104 = vmatpush1.bf16.xpose.msra.mxu0 0
    %2105 = vmatprep.subr.bf16.mxu0 0
    %2106 = vmatpush1.bf16.xpose.msra.mxu0 0
    %2107 = vmatprep.subr.bf16.mxu0 0
    %2108 = vmatpush1.bf16.xpose.msra.mxu0 0
    %2109 = vmatprep.subr.bf16.mxu0 0
    %2110 = vmatpush1.bf16.xpose.msra.mxu0 0
    %2111 = vmatprep.subr.bf16.mxu0 0
    %2112 = vmatpush1.bf16.xpose.msra.mxu0 0
    %2113 = vmatprep.subr.bf16.mxu0 0
    %2114 = vmatpush1.bf16.xpose.msra.mxu0 0
    %2115 = vmatprep.subr.bf16.mxu0 0
    %2116 = vmatpush1.bf16.xpose.msra.mxu0 0
    %2117 = vmatprep.subr.bf16.mxu0 0
    %2118 = vmatpush1.bf16.xpose.msra.mxu0 %v2101
    %2119 = vmatprep.subr.bf16.mxu0 0
    %2120 = vmatpush2.bf16.xpose.msra.mxu0 0
    %2121 = vmatprep.subr.bf16.mxu0 0
    %2122 = vmatpush2.bf16.xpose.msra.mxu0 0
    %2123 = vmatprep.subr.bf16.mxu0 0
    %2124 = vmatpush2.bf16.xpose.msra.mxu0 0
    %2125 = vmatprep.subr.bf16.mxu0 0
    %2126 = vmatpush2.bf16.xpose.msra.mxu0 0
    %2127 = vmatprep.subr.bf16.mxu0 0
    %2128 = vmatpush2.bf16.xpose.msra.mxu0 0
    %2129 = vmatprep.subr.bf16.mxu0 0
    %2130 = vmatpush2.bf16.xpose.msra.mxu0 0
    %2131 = vmatprep.subr.bf16.mxu0 0
    %2132 = vmatpush2.bf16.xpose.msra.mxu0 0
    %2133 = vmatprep.subr.bf16.mxu0 0
    %2134 = vmatpush2.bf16.xpose.msra.mxu0 0
    %2135 = vmatprep.mubr.bf16.mxu0 0
    %2136 = vmatmul.mubr.bf16.gmra.mxu0 %v2098
    %v2137 = vpop.f32.mrf.mxu0
    %v2138 = vadd.f32 %v2042, %v2137
    %v2139 = vpop.f32.mrf.mxu0
    %v2140 = vpop.f32.mrf.mxu0
    %v2141 = vadd.f32 %v2043, %v2140
    %v2142 = vpop.f32.mrf.mxu0
    %2143 = vdwg.mxu0
    %2145 = vrot.lane.b32.xlu0 %v2016, 64
    %v2146 = vpop.permute.xlu0 %2145
    %v2148 = vsel %vm860, %v1992, 0
    %v2151 = vsel %vm860, %v2146, 0
    %2153 = vmatprep.subr.bf16.mxu0 0
    %2154 = vmatpush1.bf16.xpose.msra.mxu0 0
    %2155 = vmatprep.subr.bf16.mxu0 0
    %2156 = vmatpush1.bf16.xpose.msra.mxu0 0
    %2157 = vmatprep.subr.bf16.mxu0 0
    %2158 = vmatpush1.bf16.xpose.msra.mxu0 0
    %2159 = vmatprep.subr.bf16.mxu0 0
    %2160 = vmatpush1.bf16.xpose.msra.mxu0 0
    %2161 = vmatprep.subr.bf16.mxu0 0
    %2162 = vmatpush1.bf16.xpose.msra.mxu0 0
    %2163 = vmatprep.subr.bf16.mxu0 0
    %2164 = vmatpush1.bf16.xpose.msra.mxu0 0
    %2165 = vmatprep.subr.bf16.mxu0 0
    %2166 = vmatpush1.bf16.xpose.msra.mxu0 0
    %2167 = vmatprep.subr.bf16.mxu0 0
    %2168 = vmatpush1.bf16.xpose.msra.mxu0 %v2151
    %2169 = vmatprep.subr.bf16.mxu0 0
    %2170 = vmatpush2.bf16.xpose.msra.mxu0 0
    %2171 = vmatprep.subr.bf16.mxu0 0
    %2172 = vmatpush2.bf16.xpose.msra.mxu0 0
    %2173 = vmatprep.subr.bf16.mxu0 0
    %2174 = vmatpush2.bf16.xpose.msra.mxu0 0
    %2175 = vmatprep.subr.bf16.mxu0 0
    %2176 = vmatpush2.bf16.xpose.msra.mxu0 0
    %2177 = vmatprep.subr.bf16.mxu0 0
    %2178 = vmatpush2.bf16.xpose.msra.mxu0 0
    %2179 = vmatprep.subr.bf16.mxu0 0
    %2180 = vmatpush2.bf16.xpose.msra.mxu0 0
    %2181 = vmatprep.subr.bf16.mxu0 0
    %2182 = vmatpush2.bf16.xpose.msra.mxu0 0
    %2183 = vmatprep.subr.bf16.mxu0 0
    %2184 = vmatpush2.bf16.xpose.msra.mxu0 0
    %2185 = vmatprep.mubr.bf16.mxu0 0
    %2186 = vmatmul.mubr.bf16.gmra.mxu0 %v2148
    %v2187 = vpop.f32.mrf.mxu0
    %v2188 = vadd.f32 %v2042, %v2187
    %v2189 = vpop.f32.mrf.mxu0
    %v2190 = vpop.f32.mrf.mxu0
    %v2191 = vadd.f32 %v2043, %v2190
    %v2192 = vpop.f32.mrf.mxu0
    %2193 = vdwg.mxu0
    %2195 = vrot.lane.b32.xlu0 %v2017, 64
    %v2196 = vpop.permute.xlu0 %2195
    %v2198 = vsel %vm860, %v1993, 0
    %v2201 = vsel %vm860, %v2196, 0
    %2203 = vmatprep.subr.bf16.mxu0 0
    %2204 = vmatpush1.bf16.xpose.msra.mxu0 0
    %2205 = vmatprep.subr.bf16.mxu0 0
    %2206 = vmatpush1.bf16.xpose.msra.mxu0 0
    %2207 = vmatprep.subr.bf16.mxu0 0
    %2208 = vmatpush1.bf16.xpose.msra.mxu0 0
    %2209 = vmatprep.subr.bf16.mxu0 0
    %2210 = vmatpush1.bf16.xpose.msra.mxu0 0
    %2211 = vmatprep.subr.bf16.mxu0 0
    %2212 = vmatpush1.bf16.xpose.msra.mxu0 0
    %2213 = vmatprep.subr.bf16.mxu0 0
    %2214 = vmatpush1.bf16.xpose.msra.mxu0 0
    %2215 = vmatprep.subr.bf16.mxu0 0
    %2216 = vmatpush1.bf16.xpose.msra.mxu0 0
    %2217 = vmatprep.subr.bf16.mxu0 0
    %2218 = vmatpush1.bf16.xpose.msra.mxu0 %v2201
    %2219 = vmatprep.subr.bf16.mxu0 0
    %2220 = vmatpush2.bf16.xpose.msra.mxu0 0
    %2221 = vmatprep.subr.bf16.mxu0 0
    %2222 = vmatpush2.bf16.xpose.msra.mxu0 0
    %2223 = vmatprep.subr.bf16.mxu0 0
    %2224 = vmatpush2.bf16.xpose.msra.mxu0 0
    %2225 = vmatprep.subr.bf16.mxu0 0
    %2226 = vmatpush2.bf16.xpose.msra.mxu0 0
    %2227 = vmatprep.subr.bf16.mxu0 0
    %2228 = vmatpush2.bf16.xpose.msra.mxu0 0
    %2229 = vmatprep.subr.bf16.mxu0 0
    %2230 = vmatpush2.bf16.xpose.msra.mxu0 0
    %2231 = vmatprep.subr.bf16.mxu0 0
    %2232 = vmatpush2.bf16.xpose.msra.mxu0 0
    %2233 = vmatprep.subr.bf16.mxu0 0
    %2234 = vmatpush2.bf16.xpose.msra.mxu0 0
    %2235 = vmatprep.mubr.bf16.mxu0 0
    %2236 = vmatmul.mubr.bf16.gmra.mxu0 %v2198
    %v2237 = vpop.f32.mrf.mxu0
    %v2238 = vadd.f32 %v2042, %v2237
    %v2239 = vpop.f32.mrf.mxu0
    %v2240 = vpop.f32.mrf.mxu0
    %v2241 = vadd.f32 %v2043, %v2240
    %v2242 = vpop.f32.mrf.mxu0
    %2243 = vdwg.mxu0
    %v2244 = vsel %vm1058, %v2088, -inf
    %2245 = vmax.xlane.f32.xlu0 %v2244
    %v2246 = vpop.xlane.xlu0 %2245
    %v2247 = vsel %vm1062, %v2091, -inf
    %2248 = vmax.xlane.f32.xlu0 %v2247
    %v2249 = vpop.xlane.xlu0 %2248
    %v2250 = vsel %vm1058, %v2138, -inf
    %2251 = vmax.xlane.f32.xlu0 %v2250
    %v2252 = vpop.xlane.xlu0 %2251
    %v2253 = vsel %vm1062, %v2141, -inf
    %2254 = vmax.xlane.f32.xlu0 %v2253
    %v2255 = vpop.xlane.xlu0 %2254
    %v2256 = vsel %vm1058, %v2188, -inf
    %2257 = vmax.xlane.f32.xlu0 %v2256
    %v2258 = vpop.xlane.xlu0 %2257
    %v2259 = vsel %vm1062, %v2191, -inf
    %2260 = vmax.xlane.f32.xlu0 %v2259
    %v2261 = vpop.xlane.xlu0 %2260
    %v2262 = vsel %vm1058, %v2238, -inf
    %2263 = vmax.xlane.f32.xlu0 %v2262
    %v2264 = vpop.xlane.xlu0 %2263
    %v2265 = vsel %vm1062, %v2241, -inf
    %2266 = vmax.xlane.f32.xlu0 %v2265
    %v2267 = vpop.xlane.xlu0 %2266
    %v2268 = vsub.f32 %v2088, %v2246
    %v2269 = vsub.f32 %v2091, %v2249
    %v2270 = vsub.f32 %v2138, %v2252
    %v2271 = vsub.f32 %v2141, %v2255
    %v2272 = vsub.f32 %v2188, %v2258
    %v2273 = vsub.f32 %v2191, %v2261
    %v2274 = vsub.f32 %v2238, %v2264
    %v2275 = vsub.f32 %v2241, %v2267
    %v2276 = vmul.f32 %v2268, 1.442695
    %v2277 = vpow.pop %v2276
    %v2278 = vmul.f32 %v2269, 1.442695
    %v2279 = vpow.pop %v2278
    %v2280 = vmul.f32 %v2270, 1.442695
    %v2281 = vpow.pop %v2280
    %v2282 = vmul.f32 %v2271, 1.442695
    %v2283 = vpow.pop %v2282
    %v2284 = vmul.f32 %v2272, 1.442695
    %v2285 = vpow.pop %v2284
    %v2286 = vmul.f32 %v2273, 1.442695
    %v2287 = vpow.pop %v2286
    %v2288 = vmul.f32 %v2274, 1.442695
    %v2289 = vpow.pop %v2288
    %v2290 = vmul.f32 %v2275, 1.442695
    %v2291 = vpow.pop %v2290
    %v2292 = vsel %vm1058, %v2277, 0.0
    %2293 = vadd.xlane.f32.xlu0 %v2292
    %v2294 = vpop.xlane.xlu0 %2293
    %v2295 = vsel %vm1062, %v2279, 0.0
    %2296 = vadd.xlane.f32.xlu0 %v2295
    %v2297 = vpop.xlane.xlu0 %2296
    %v2298 = vsel %vm1058, %v2281, 0.0
    %2299 = vadd.xlane.f32.xlu0 %v2298
    %v2300 = vpop.xlane.xlu0 %2299
    %v2301 = vsel %vm1062, %v2283, 0.0
    %2302 = vadd.xlane.f32.xlu0 %v2301
    %v2303 = vpop.xlane.xlu0 %2302
    %v2304 = vsel %vm1058, %v2285, 0.0
    %2305 = vadd.xlane.f32.xlu0 %v2304
    %v2306 = vpop.xlane.xlu0 %2305
    %v2307 = vsel %vm1062, %v2287, 0.0
    %2308 = vadd.xlane.f32.xlu0 %v2307
    %v2309 = vpop.xlane.xlu0 %2308
    %v2310 = vsel %vm1058, %v2289, 0.0
    %2311 = vadd.xlane.f32.xlu0 %v2310
    %v2312 = vpop.xlane.xlu0 %2311
    %v2313 = vsel %vm1062, %v2291, 0.0
    %2314 = vadd.xlane.f32.xlu0 %v2313
    %v2315 = vpop.xlane.xlu0 %2314
    %v2316 = vrcp.pop %v2294
    %v2317 = vrcp.pop %v2297
    %v2318 = vrcp.pop %v2300
    %v2319 = vrcp.pop %v2303
    %v2320 = vrcp.pop %v2306
    %v2321 = vrcp.pop %v2309
    %v2322 = vrcp.pop %v2312
    %v2323 = vrcp.pop %v2315
    %v2324 = vmul.f32 %v2277, %v2316
    %v2325 = vmul.f32 %v2279, %v2317
    %v2326 = vmul.f32 %v2281, %v2318
    %v2327 = vmul.f32 %v2283, %v2319
    %v2328 = vmul.f32 %v2285, %v2320
    %v2329 = vmul.f32 %v2287, %v2321
    %v2330 = vmul.f32 %v2289, %v2322
    %v2331 = vmul.f32 %v2291, %v2323
    %v2332 = vpack.c.bf16 %v2325, %v2324
    %v2333 = vpack.c.bf16 %v2327, %v2326
    %v2334 = vpack.c.bf16 %v2329, %v2328
    %v2335 = vpack.c.bf16 %v2331, %v2330
    %v2337 = vsel %vm1058, %v2332, 0
    %v2340 = vsel %vm1155, %v2038, 0
    %2342 = vmatprep.subr.bf16.mxu0 0
    %2343 = vmatpush1.bf16.msra.mxu0 0
    %2344 = vmatprep.subr.bf16.mxu0 0
    %2345 = vmatpush1.bf16.msra.mxu0 0
    %2346 = vmatprep.subr.bf16.mxu0 0
    %2347 = vmatpush1.bf16.msra.mxu0 0
    %2348 = vmatprep.subr.bf16.mxu0 0
    %2349 = vmatpush1.bf16.msra.mxu0 0
    %2350 = vmatprep.subr.bf16.mxu0 0
    %2351 = vmatpush1.bf16.msra.mxu0 0
    %2352 = vmatprep.subr.bf16.mxu0 0
    %2353 = vmatpush1.bf16.msra.mxu0 0
    %2354 = vmatprep.subr.bf16.mxu0 0
    %2355 = vmatpush1.bf16.msra.mxu0 0
    %2356 = vmatprep.subr.bf16.mxu0 0
    %2357 = vmatpush1.bf16.msra.mxu0 %v2340
    %2358 = vmatprep.subr.bf16.mxu0 0
    %2359 = vmatpush2.bf16.msra.mxu0 0
    %2360 = vmatprep.subr.bf16.mxu0 0
    %2361 = vmatpush2.bf16.msra.mxu0 0
    %2362 = vmatprep.subr.bf16.mxu0 0
    %2363 = vmatpush2.bf16.msra.mxu0 0
    %2364 = vmatprep.subr.bf16.mxu0 0
    %2365 = vmatpush2.bf16.msra.mxu0 0
    %2366 = vmatprep.subr.bf16.mxu0 0
    %2367 = vmatpush2.bf16.msra.mxu0 0
    %2368 = vmatprep.subr.bf16.mxu0 0
    %2369 = vmatpush2.bf16.msra.mxu0 0
    %2370 = vmatprep.subr.bf16.mxu0 0
    %2371 = vmatpush2.bf16.msra.mxu0 0
    %2372 = vmatprep.subr.bf16.mxu0 0
    %2373 = vmatpush2.bf16.msra.mxu0 0
    %2374 = vmatprep.mubr.bf16.mxu0 0
    %2375 = vmatmul.mubr.bf16.gmra.mxu0 %v2337
    %v2376 = vpop.f32.mrf.mxu0
    %v2377 = vadd.f32 0.0, %v2376
    %v2378 = vpop.f32.mrf.mxu0
    %v2379 = vpop.f32.mrf.mxu0
    %v2380 = vadd.f32 0.0, %v2379
    %v2381 = vpop.f32.mrf.mxu0
    %2382 = vdwg.mxu0
    %v2384 = vsel %vm1058, %v2333, 0
    %v2387 = vsel %vm1155, %v2039, 0
    %2389 = vmatprep.subr.bf16.mxu0 0
    %2390 = vmatpush1.bf16.msra.mxu0 0
    %2391 = vmatprep.subr.bf16.mxu0 0
    %2392 = vmatpush1.bf16.msra.mxu0 0
    %2393 = vmatprep.subr.bf16.mxu0 0
    %2394 = vmatpush1.bf16.msra.mxu0 0
    %2395 = vmatprep.subr.bf16.mxu0 0
    %2396 = vmatpush1.bf16.msra.mxu0 0
    %2397 = vmatprep.subr.bf16.mxu0 0
    %2398 = vmatpush1.bf16.msra.mxu0 0
    %2399 = vmatprep.subr.bf16.mxu0 0
    %2400 = vmatpush1.bf16.msra.mxu0 0
    %2401 = vmatprep.subr.bf16.mxu0 0
    %2402 = vmatpush1.bf16.msra.mxu0 0
    %2403 = vmatprep.subr.bf16.mxu0 0
    %2404 = vmatpush1.bf16.msra.mxu0 %v2387
    %2405 = vmatprep.subr.bf16.mxu0 0
    %2406 = vmatpush2.bf16.msra.mxu0 0
    %2407 = vmatprep.subr.bf16.mxu0 0
    %2408 = vmatpush2.bf16.msra.mxu0 0
    %2409 = vmatprep.subr.bf16.mxu0 0
    %2410 = vmatpush2.bf16.msra.mxu0 0
    %2411 = vmatprep.subr.bf16.mxu0 0
    %2412 = vmatpush2.bf16.msra.mxu0 0
    %2413 = vmatprep.subr.bf16.mxu0 0
    %2414 = vmatpush2.bf16.msra.mxu0 0
    %2415 = vmatprep.subr.bf16.mxu0 0
    %2416 = vmatpush2.bf16.msra.mxu0 0
    %2417 = vmatprep.subr.bf16.mxu0 0
    %2418 = vmatpush2.bf16.msra.mxu0 0
    %2419 = vmatprep.subr.bf16.mxu0 0
    %2420 = vmatpush2.bf16.msra.mxu0 0
    %2421 = vmatprep.mubr.bf16.mxu0 0
    %2422 = vmatmul.mubr.bf16.gmra.mxu0 %v2384
    %v2423 = vpop.f32.mrf.mxu0
    %v2424 = vadd.f32 0.0, %v2423
    %v2425 = vpop.f32.mrf.mxu0
    %v2426 = vpop.f32.mrf.mxu0
    %v2427 = vadd.f32 0.0, %v2426
    %v2428 = vpop.f32.mrf.mxu0
    %2429 = vdwg.mxu0
    %v2431 = vsel %vm1058, %v2334, 0
    %v2434 = vsel %vm1155, %v2040, 0
    %2436 = vmatprep.subr.bf16.mxu0 0
    %2437 = vmatpush1.bf16.msra.mxu0 0
    %2438 = vmatprep.subr.bf16.mxu0 0
    %2439 = vmatpush1.bf16.msra.mxu0 0
    %2440 = vmatprep.subr.bf16.mxu0 0
    %2441 = vmatpush1.bf16.msra.mxu0 0
    %2442 = vmatprep.subr.bf16.mxu0 0
    %2443 = vmatpush1.bf16.msra.mxu0 0
    %2444 = vmatprep.subr.bf16.mxu0 0
    %2445 = vmatpush1.bf16.msra.mxu0 0
    %2446 = vmatprep.subr.bf16.mxu0 0
    %2447 = vmatpush1.bf16.msra.mxu0 0
    %2448 = vmatprep.subr.bf16.mxu0 0
    %2449 = vmatpush1.bf16.msra.mxu0 0
    %2450 = vmatprep.subr.bf16.mxu0 0
    %2451 = vmatpush1.bf16.msra.mxu0 %v2434
    %2452 = vmatprep.subr.bf16.mxu0 0
    %2453 = vmatpush2.bf16.msra.mxu0 0
    %2454 = vmatprep.subr.bf16.mxu0 0
    %2455 = vmatpush2.bf16.msra.mxu0 0
    %2456 = vmatprep.subr.bf16.mxu0 0
    %2457 = vmatpush2.bf16.msra.mxu0 0
    %2458 = vmatprep.subr.bf16.mxu0 0
    %2459 = vmatpush2.bf16.msra.mxu0 0
    %2460 = vmatprep.subr.bf16.mxu0 0
    %2461 = vmatpush2.bf16.msra.mxu0 0
    %2462 = vmatprep.subr.bf16.mxu0 0
    %2463 = vmatpush2.bf16.msra.mxu0 0
    %2464 = vmatprep.subr.bf16.mxu0 0
    %2465 = vmatpush2.bf16.msra.mxu0 0
    %2466 = vmatprep.subr.bf16.mxu0 0
    %2467 = vmatpush2.bf16.msra.mxu0 0
    %2468 = vmatprep.mubr.bf16.mxu0 0
    %2469 = vmatmul.mubr.bf16.gmra.mxu0 %v2431
    %v2470 = vpop.f32.mrf.mxu0
    %v2471 = vadd.f32 0.0, %v2470
    %v2472 = vpop.f32.mrf.mxu0
    %v2473 = vpop.f32.mrf.mxu0
    %v2474 = vadd.f32 0.0, %v2473
    %v2475 = vpop.f32.mrf.mxu0
    %2476 = vdwg.mxu0
    %v2478 = vsel %vm1058, %v2335, 0
    %v2481 = vsel %vm1155, %v2041, 0
    %2483 = vmatprep.subr.bf16.mxu0 0
    %2484 = vmatpush1.bf16.msra.mxu0 0
    %2485 = vmatprep.subr.bf16.mxu0 0
    %2486 = vmatpush1.bf16.msra.mxu0 0
    %2487 = vmatprep.subr.bf16.mxu0 0
    %2488 = vmatpush1.bf16.msra.mxu0 0
    %2489 = vmatprep.subr.bf16.mxu0 0
    %2490 = vmatpush1.bf16.msra.mxu0 0
    %2491 = vmatprep.subr.bf16.mxu0 0
    %2492 = vmatpush1.bf16.msra.mxu0 0
    %2493 = vmatprep.subr.bf16.mxu0 0
    %2494 = vmatpush1.bf16.msra.mxu0 0
    %2495 = vmatprep.subr.bf16.mxu0 0
    %2496 = vmatpush1.bf16.msra.mxu0 0
    %2497 = vmatprep.subr.bf16.mxu0 0
    %2498 = vmatpush1.bf16.msra.mxu0 %v2481
    %2499 = vmatprep.subr.bf16.mxu0 0
    %2500 = vmatpush2.bf16.msra.mxu0 0
    %2501 = vmatprep.subr.bf16.mxu0 0
    %2502 = vmatpush2.bf16.msra.mxu0 0
    %2503 = vmatprep.subr.bf16.mxu0 0
    %2504 = vmatpush2.bf16.msra.mxu0 0
    %2505 = vmatprep.subr.bf16.mxu0 0
    %2506 = vmatpush2.bf16.msra.mxu0 0
    %2507 = vmatprep.subr.bf16.mxu0 0
    %2508 = vmatpush2.bf16.msra.mxu0 0
    %2509 = vmatprep.subr.bf16.mxu0 0
    %2510 = vmatpush2.bf16.msra.mxu0 0
    %2511 = vmatprep.subr.bf16.mxu0 0
    %2512 = vmatpush2.bf16.msra.mxu0 0
    %2513 = vmatprep.subr.bf16.mxu0 0
    %2514 = vmatpush2.bf16.msra.mxu0 0
    %2515 = vmatprep.mubr.bf16.mxu0 0
    %2516 = vmatmul.mubr.bf16.gmra.mxu0 %v2478
    %v2517 = vpop.f32.mrf.mxu0
    %v2518 = vadd.f32 0.0, %v2517
    %v2519 = vpop.f32.mrf.mxu0
    %v2520 = vpop.f32.mrf.mxu0
    %v2521 = vadd.f32 0.0, %v2520
    %v2522 = vpop.f32.mrf.mxu0
    %2523 = vdwg.mxu0
    %v2524 = vpack.c.bf16 %v2380, %v2377
    %v2525 = vpack.c.bf16 %v2427, %v2424
    %v2526 = vpack.c.bf16 %v2474, %v2471
    %v2527 = vpack.c.bf16 %v2521, %v2518
    %s2528 = scalar_lea.vmem %s9, 32
    %v2529 = vld [vmem:[%s2528] sm:$0xf]
    %v2530 = vld [vmem:[%s2528 + $0x4] sm:$0xf]
    %v2531 = vld [vmem:[%s2528 + $0x8] sm:$0xf]
    %v2532 = vld [vmem:[%s2528 + $0xc] sm:$0xf]
    %v2533 = vld [vmem:[%s2528 + $0x10] sm:$0xf]
    %v2534 = vld [vmem:[%s2528 + $0x14] sm:$0xf]
    %v2535 = vld [vmem:[%s2528 + $0x18] sm:$0xf]
    %v2536 = vld [vmem:[%s2528 + $0x1c] sm:$0xf]
    %v2539 = vunpack.c.l.b16 %v2529
    %v2540 = vunpack.c.l.b16 %v2530
    %v2541 = vpack.c.b16 %v2540, %v2539
    %v2544 = vsel %vm860, %v2524, 0
    %2546 = vmatprep.subr.bf16.mxu0 0
    %2547 = vmatpush1.bf16.msra.mxu0 0
    %2548 = vmatprep.subr.bf16.mxu0 0
    %2549 = vmatpush1.bf16.msra.mxu0 0
    %2550 = vmatprep.subr.bf16.mxu0 0
    %2551 = vmatpush1.bf16.msra.mxu0 0
    %2552 = vmatprep.subr.bf16.mxu0 0
    %2553 = vmatpush1.bf16.msra.mxu0 0
    %2554 = vmatprep.subr.bf16.mxu0 0
    %2555 = vmatpush1.bf16.msra.mxu0 0
    %2556 = vmatprep.subr.bf16.mxu0 0
    %2557 = vmatpush1.bf16.msra.mxu0 0
    %2558 = vmatprep.subr.bf16.mxu0 0
    %2559 = vmatpush1.bf16.msra.mxu0 0
    %2560 = vmatprep.subr.bf16.mxu0 0
    %2561 = vmatpush1.bf16.msra.mxu0 %v2541
    %2562 = vmatprep.subr.bf16.mxu0 0
    %2563 = vmatpush2.bf16.msra.mxu0 0
    %2564 = vmatprep.subr.bf16.mxu0 0
    %2565 = vmatpush2.bf16.msra.mxu0 0
    %2566 = vmatprep.subr.bf16.mxu0 0
    %2567 = vmatpush2.bf16.msra.mxu0 0
    %2568 = vmatprep.subr.bf16.mxu0 0
    %2569 = vmatpush2.bf16.msra.mxu0 0
    %2570 = vmatprep.subr.bf16.mxu0 0
    %2571 = vmatpush2.bf16.msra.mxu0 0
    %2572 = vmatprep.subr.bf16.mxu0 0
    %2573 = vmatpush2.bf16.msra.mxu0 0
    %2574 = vmatprep.subr.bf16.mxu0 0
    %2575 = vmatpush2.bf16.msra.mxu0 0
    %2576 = vmatprep.subr.bf16.mxu0 0
    %2577 = vmatpush2.bf16.msra.mxu0 0
    %2578 = vmatprep.mubr.bf16.mxu0 0
    %2579 = vmatmul.mubr.bf16.gmra.mxu0 %v2544
    %v2580 = vpop.f32.mrf.mxu0
    %v2581 = vadd.f32 0.0, %v2580
    %v2582 = vpop.f32.mrf.mxu0
    %v2583 = vpop.f32.mrf.mxu0
    %v2584 = vadd.f32 0.0, %v2583
    %v2585 = vpop.f32.mrf.mxu0
    %2586 = vdwg.mxu0
    %v2589 = vunpack.c.l.b16 %v2531
    %v2590 = vunpack.c.l.b16 %v2532
    %v2591 = vpack.c.b16 %v2590, %v2589
    %v2594 = vsel %vm860, %v2525, 0
    %2596 = vmatprep.subr.bf16.mxu0 0
    %2597 = vmatpush1.bf16.msra.mxu0 0
    %2598 = vmatprep.subr.bf16.mxu0 0
    %2599 = vmatpush1.bf16.msra.mxu0 0
    %2600 = vmatprep.subr.bf16.mxu0 0
    %2601 = vmatpush1.bf16.msra.mxu0 0
    %2602 = vmatprep.subr.bf16.mxu0 0
    %2603 = vmatpush1.bf16.msra.mxu0 0
    %2604 = vmatprep.subr.bf16.mxu0 0
    %2605 = vmatpush1.bf16.msra.mxu0 0
    %2606 = vmatprep.subr.bf16.mxu0 0
    %2607 = vmatpush1.bf16.msra.mxu0 0
    %2608 = vmatprep.subr.bf16.mxu0 0
    %2609 = vmatpush1.bf16.msra.mxu0 0
    %2610 = vmatprep.subr.bf16.mxu0 0
    %2611 = vmatpush1.bf16.msra.mxu0 %v2591
    %2612 = vmatprep.subr.bf16.mxu0 0
    %2613 = vmatpush2.bf16.msra.mxu0 0
    %2614 = vmatprep.subr.bf16.mxu0 0
    %2615 = vmatpush2.bf16.msra.mxu0 0
    %2616 = vmatprep.subr.bf16.mxu0 0
    %2617 = vmatpush2.bf16.msra.mxu0 0
    %2618 = vmatprep.subr.bf16.mxu0 0
    %2619 = vmatpush2.bf16.msra.mxu0 0
    %2620 = vmatprep.subr.bf16.mxu0 0
    %2621 = vmatpush2.bf16.msra.mxu0 0
    %2622 = vmatprep.subr.bf16.mxu0 0
    %2623 = vmatpush2.bf16.msra.mxu0 0
    %2624 = vmatprep.subr.bf16.mxu0 0
    %2625 = vmatpush2.bf16.msra.mxu0 0
    %2626 = vmatprep.subr.bf16.mxu0 0
    %2627 = vmatpush2.bf16.msra.mxu0 0
    %2628 = vmatprep.mubr.bf16.mxu0 0
    %2629 = vmatmul.mubr.bf16.gmra.mxu0 %v2594
    %v2630 = vpop.f32.mrf.mxu0
    %v2631 = vadd.f32 0.0, %v2630
    %v2632 = vpop.f32.mrf.mxu0
    %v2633 = vpop.f32.mrf.mxu0
    %v2634 = vadd.f32 0.0, %v2633
    %v2635 = vpop.f32.mrf.mxu0
    %2636 = vdwg.mxu0
    %v2639 = vunpack.c.l.b16 %v2533
    %v2640 = vunpack.c.l.b16 %v2534
    %v2641 = vpack.c.b16 %v2640, %v2639
    %v2644 = vsel %vm860, %v2526, 0
    %2646 = vmatprep.subr.bf16.mxu0 0
    %2647 = vmatpush1.bf16.msra.mxu0 0
    %2648 = vmatprep.subr.bf16.mxu0 0
    %2649 = vmatpush1.bf16.msra.mxu0 0
    %2650 = vmatprep.subr.bf16.mxu0 0
    %2651 = vmatpush1.bf16.msra.mxu0 0
    %2652 = vmatprep.subr.bf16.mxu0 0
    %2653 = vmatpush1.bf16.msra.mxu0 0
    %2654 = vmatprep.subr.bf16.mxu0 0
    %2655 = vmatpush1.bf16.msra.mxu0 0
    %2656 = vmatprep.subr.bf16.mxu0 0
    %2657 = vmatpush1.bf16.msra.mxu0 0
    %2658 = vmatprep.subr.bf16.mxu0 0
    %2659 = vmatpush1.bf16.msra.mxu0 0
    %2660 = vmatprep.subr.bf16.mxu0 0
    %2661 = vmatpush1.bf16.msra.mxu0 %v2641
    %2662 = vmatprep.subr.bf16.mxu0 0
    %2663 = vmatpush2.bf16.msra.mxu0 0
    %2664 = vmatprep.subr.bf16.mxu0 0
    %2665 = vmatpush2.bf16.msra.mxu0 0
    %2666 = vmatprep.subr.bf16.mxu0 0
    %2667 = vmatpush2.bf16.msra.mxu0 0
    %2668 = vmatprep.subr.bf16.mxu0 0
    %2669 = vmatpush2.bf16.msra.mxu0 0
    %2670 = vmatprep.subr.bf16.mxu0 0
    %2671 = vmatpush2.bf16.msra.mxu0 0
    %2672 = vmatprep.subr.bf16.mxu0 0
    %2673 = vmatpush2.bf16.msra.mxu0 0
    %2674 = vmatprep.subr.bf16.mxu0 0
    %2675 = vmatpush2.bf16.msra.mxu0 0
    %2676 = vmatprep.subr.bf16.mxu0 0
    %2677 = vmatpush2.bf16.msra.mxu0 0
    %2678 = vmatprep.mubr.bf16.mxu0 0
    %2679 = vmatmul.mubr.bf16.gmra.mxu0 %v2644
    %v2680 = vpop.f32.mrf.mxu0
    %v2681 = vadd.f32 0.0, %v2680
    %v2682 = vpop.f32.mrf.mxu0
    %v2683 = vpop.f32.mrf.mxu0
    %v2684 = vadd.f32 0.0, %v2683
    %v2685 = vpop.f32.mrf.mxu0
    %2686 = vdwg.mxu0
    %v2689 = vunpack.c.l.b16 %v2535
    %v2690 = vunpack.c.l.b16 %v2536
    %v2691 = vpack.c.b16 %v2690, %v2689
    %v2694 = vsel %vm860, %v2527, 0
    %2696 = vmatprep.subr.bf16.mxu0 0
    %2697 = vmatpush1.bf16.msra.mxu0 0
    %2698 = vmatprep.subr.bf16.mxu0 0
    %2699 = vmatpush1.bf16.msra.mxu0 0
    %2700 = vmatprep.subr.bf16.mxu0 0
    %2701 = vmatpush1.bf16.msra.mxu0 0
    %2702 = vmatprep.subr.bf16.mxu0 0
    %2703 = vmatpush1.bf16.msra.mxu0 0
    %2704 = vmatprep.subr.bf16.mxu0 0
    %2705 = vmatpush1.bf16.msra.mxu0 0
    %2706 = vmatprep.subr.bf16.mxu0 0
    %2707 = vmatpush1.bf16.msra.mxu0 0
    %2708 = vmatprep.subr.bf16.mxu0 0
    %2709 = vmatpush1.bf16.msra.mxu0 0
    %2710 = vmatprep.subr.bf16.mxu0 0
    %2711 = vmatpush1.bf16.msra.mxu0 %v2691
    %2712 = vmatprep.subr.bf16.mxu0 0
    %2713 = vmatpush2.bf16.msra.mxu0 0
    %2714 = vmatprep.subr.bf16.mxu0 0
    %2715 = vmatpush2.bf16.msra.mxu0 0
    %2716 = vmatprep.subr.bf16.mxu0 0
    %2717 = vmatpush2.bf16.msra.mxu0 0
    %2718 = vmatprep.subr.bf16.mxu0 0
    %2719 = vmatpush2.bf16.msra.mxu0 0
    %2720 = vmatprep.subr.bf16.mxu0 0
    %2721 = vmatpush2.bf16.msra.mxu0 0
    %2722 = vmatprep.subr.bf16.mxu0 0
    %2723 = vmatpush2.bf16.msra.mxu0 0
    %2724 = vmatprep.subr.bf16.mxu0 0
    %2725 = vmatpush2.bf16.msra.mxu0 0
    %2726 = vmatprep.subr.bf16.mxu0 0
    %2727 = vmatpush2.bf16.msra.mxu0 0
    %2728 = vmatprep.mubr.bf16.mxu0 0
    %2729 = vmatmul.mubr.bf16.gmra.mxu0 %v2694
    %v2730 = vpop.f32.mrf.mxu0
    %v2731 = vadd.f32 0.0, %v2730
    %v2732 = vpop.f32.mrf.mxu0
    %v2733 = vpop.f32.mrf.mxu0
    %v2734 = vadd.f32 0.0, %v2733
    %v2735 = vpop.f32.mrf.mxu0
    %2736 = vdwg.mxu0
    %v2737 = vadd.f32 %v2581, %v2631
    %v2738 = vadd.f32 %v2584, %v2634
    %v2739 = vadd.f32 %v2737, %v2681
    %v2740 = vadd.f32 %v2738, %v2684
    %v2741 = vadd.f32 %v2739, %v2731
    %v2742 = vadd.f32 %v2740, %v2734
    %v2743 = vadd.f32 %v1817, %v2741
    %v2744 = vadd.f32 %v1818, %v2742
    %v2745 = vld [vmem:[%s2 + $0xb] sm:$0x1]
    %v2746 = vlaneseq
    %v2747 = vshrl.u32 %v2746, 7
    %v2748 = vsub.s32 0, %v2747
    %v2749 = vrot.slane %v2745, %v2748
    %v2750 = vadd.f32 %v2743, %v2749
    %v2751 = vadd.f32 %v2744, %v2749
    %v2752 = vld [vmem:[%s2 + $0x7] sm:$0x1]
    %v2753 = vld [vmem:[%s2 + $0x9] sm:$0x1]
    %v2754 = vsel %vm593, %v2750, 0.0
    %2755 = vadd.xlane.f32.xlu0 %v2754
    %v2756 = vpop.xlane.xlu0 %2755
    %v2757 = vsel %vm597, %v2751, 0.0
    %2758 = vadd.xlane.f32.xlu0 %v2757
    %v2759 = vpop.xlane.xlu0 %2758
    %v2760 = vmul.f32 %v2756, %v601
    %v2761 = vmul.f32 %v2759, %v601
    %v2762 = vsub.f32 %v2750, %v2760
    %v2763 = vsub.f32 %v2751, %v2761
    %v2764 = vmul.f32 %v2762, %v2762
    %v2765 = vmul.f32 %v2763, %v2763
    %v2766 = vsel %vm593, %v2764, 0.0
    %2767 = vadd.xlane.f32.xlu0 %v2766
    %v2768 = vpop.xlane.xlu0 %2767
    %v2769 = vsel %vm597, %v2765, 0.0
    %2770 = vadd.xlane.f32.xlu0 %v2769
    %v2771 = vpop.xlane.xlu0 %2770
    %v2772 = vmul.f32 %v2768, %v601
    %v2773 = vmul.f32 %v2771, %v601
    %v2774 = vadd.f32 %v2772, 1e-05
    %v2775 = vadd.f32 %v2773, 1e-05
    %v2776 = vrsqrt.pop %v2774
    %v2777 = vrsqrt.pop %v2775
    %v2778 = vmul.f32 %v2762, %v2776
    %v2779 = vmul.f32 %v2763, %v2777
    %v2780 = vlaneseq
    %v2781 = vshrl.u32 %v2780, 7
    %v2782 = vsub.s32 0, %v2781
    %v2783 = vrot.slane %v2752, %v2782
    %v2784 = vmul.f32 %v2778, %v2783
    %v2785 = vmul.f32 %v2779, %v2783
    %v2786 = vlaneseq
    %v2787 = vshrl.u32 %v2786, 7
    %v2788 = vsub.s32 0, %v2787
    %v2789 = vrot.slane %v2753, %v2788
    %v2790 = vadd.f32 %v2784, %v2789
    %v2791 = vadd.f32 %v2785, %v2789
    %v2792 = vpack.c.bf16 %v2791, %v2790
    %s2793 = scalar_lea.vmem %s10, 32
    %v2794 = vld [vmem:[%s2793] sm:$0xf]
    %v2795 = vld [vmem:[%s2793 + $0x4] sm:$0xf]
    %v2796 = vld [vmem:[%s2793 + $0x8] sm:$0xf]
    %v2797 = vld [vmem:[%s2793 + $0xc] sm:$0xf]
    %v2798 = vld [vmem:[%s2793 + $0x10] sm:$0xf]
    %v2799 = vld [vmem:[%s2793 + $0x14] sm:$0xf]
    %v2800 = vld [vmem:[%s2793 + $0x18] sm:$0xf]
    %v2801 = vld [vmem:[%s2793 + $0x1c] sm:$0xf]
    %v2802 = vld [vmem:[%s6 + $0x1] sm:$0x1]
    %v2803 = vlaneseq
    %v2804 = vshrl.u32 %v2803, 7
    %v2805 = vsub.s32 0, %v2804
    %v2806 = vrot.slane %v2802, %v2805
    %v2815 = vunpack.c.l.b16 %v2794
    %v2816 = vunpack.c.l.b16 %v2795
    %v2817 = vunpack.c.l.b16 %v2796
    %v2818 = vunpack.c.l.b16 %v2797
    %v2819 = vunpack.c.l.b16 %v2798
    %v2820 = vunpack.c.l.b16 %v2799
    %v2821 = vunpack.c.l.b16 %v2800
    %v2822 = vunpack.c.l.b16 %v2801
    %v2823 = vpack.c.b16 %v2816, %v2815
    %v2824 = vpack.c.b16 %v2818, %v2817
    %v2825 = vpack.c.b16 %v2820, %v2819
    %v2826 = vpack.c.b16 %v2822, %v2821
    %v2832 = vsel %vm593, %v2792, 0
    %2834 = vmatprep.subr.bf16.mxu0 0
    %2835 = vmatpush1.bf16.msra.mxu0 0
    %2836 = vmatprep.subr.bf16.mxu0 0
    %2837 = vmatpush1.bf16.msra.mxu0 0
    %2838 = vmatprep.subr.bf16.mxu0 0
    %2839 = vmatpush1.bf16.msra.mxu0 0
    %2840 = vmatprep.subr.bf16.mxu0 0
    %2841 = vmatpush1.bf16.msra.mxu0 0
    %2842 = vmatprep.subr.bf16.mxu0 0
    %2843 = vmatpush1.bf16.msra.mxu0 %v2826
    %2844 = vmatprep.subr.bf16.mxu0 0
    %2845 = vmatpush1.bf16.msra.mxu0 %v2825
    %2846 = vmatprep.subr.bf16.mxu0 0
    %2847 = vmatpush1.bf16.msra.mxu0 %v2824
    %2848 = vmatprep.subr.bf16.mxu0 0
    %2849 = vmatpush1.bf16.msra.mxu0 %v2823
    %2850 = vmatprep.subr.bf16.mxu0 0
    %2851 = vmatpush2.bf16.msra.mxu0 0
    %2852 = vmatprep.subr.bf16.mxu0 0
    %2853 = vmatpush2.bf16.msra.mxu0 0
    %2854 = vmatprep.subr.bf16.mxu0 0
    %2855 = vmatpush2.bf16.msra.mxu0 0
    %2856 = vmatprep.subr.bf16.mxu0 0
    %2857 = vmatpush2.bf16.msra.mxu0 0
    %2858 = vmatprep.subr.bf16.mxu0 0
    %2859 = vmatpush2.bf16.msra.mxu0 0
    %2860 = vmatprep.subr.bf16.mxu0 0
    %2861 = vmatpush2.bf16.msra.mxu0 0
    %2862 = vmatprep.subr.bf16.mxu0 0
    %2863 = vmatpush2.bf16.msra.mxu0 0
    %2864 = vmatprep.subr.bf16.mxu0 0
    %2865 = vmatpush2.bf16.msra.mxu0 0
    %2866 = vmatprep.mubr.bf16.mxu0 0
    %2867 = vmatmul.mubr.bf16.gmra.mxu0 %v2832
    %v2868 = vpop.f32.mrf.mxu0
    %v2869 = vadd.f32 %v2806, %v2868
    %v2870 = vpop.f32.mrf.mxu0
    %v2871 = vpop.f32.mrf.mxu0
    %v2872 = vadd.f32 %v2806, %v2871
    %v2873 = vpop.f32.mrf.mxu0
    %2874 = vdwg.mxu0
    %v2875 = vmul.f32 %v2869, 1.702
    %v2876 = vmul.f32 %v2872, 1.702
    %v2877 = vxor.u32 %v2875, 2147483648
    %v2878 = vxor.u32 %v2876, 2147483648
    %v2879 = vmul.f32 %v2877, 1.442695
    %v2880 = vpow.pop %v2879
    %v2881 = vmul.f32 %v2878, 1.442695
    %v2882 = vpow.pop %v2881
    %v2883 = vadd.f32 %v2880, 1.0
    %v2884 = vadd.f32 %v2882, 1.0
    %v2885 = vrcp.pop %v2883
    %v2886 = vmul.f32 1.0, %v2885
    %v2887 = vrcp.pop %v2884
    %v2888 = vmul.f32 1.0, %v2887
    %v2889 = vmul.f32 %v2869, %v2886
    %v2890 = vmul.f32 %v2872, %v2888
    %v2891 = vpack.c.bf16 %v2890, %v2889
    %s2892 = scalar_lea.vmem %s11, 64
    %v2893 = vld [vmem:[%s2892] sm:$0xf]
    %v2894 = vld [vmem:[%s2892 + $0x4] sm:$0xf]
    %v2895 = vld [vmem:[%s2892 + $0x8] sm:$0xf]
    %v2896 = vld [vmem:[%s2892 + $0xc] sm:$0xf]
    %v2897 = vld [vmem:[%s2892 + $0x10] sm:$0xf]
    %v2898 = vld [vmem:[%s2892 + $0x14] sm:$0xf]
    %v2899 = vld [vmem:[%s2892 + $0x18] sm:$0xf]
    %v2900 = vld [vmem:[%s2892 + $0x1c] sm:$0xf]
    %v2901 = vld [vmem:[%s2892 + $0x20] sm:$0xf]
    %v2902 = vld [vmem:[%s2892 + $0x24] sm:$0xf]
    %v2903 = vld [vmem:[%s2892 + $0x28] sm:$0xf]
    %v2904 = vld [vmem:[%s2892 + $0x2c] sm:$0xf]
    %v2905 = vld [vmem:[%s2892 + $0x30] sm:$0xf]
    %v2906 = vld [vmem:[%s2892 + $0x34] sm:$0xf]
    %v2907 = vld [vmem:[%s2892 + $0x38] sm:$0xf]
    %v2908 = vld [vmem:[%s2892 + $0x3c] sm:$0xf]
    %v2909 = vld [vmem:[%s2 + $0xd] sm:$0x1]
    %v2910 = vlaneseq
    %v2911 = vshrl.u32 %v2910, 7
    %v2912 = vsub.s32 0, %v2911
    %v2913 = vrot.slane %v2909, %v2912
    %v2930 = vunpack.c.l.b16 %v2893
    %v2931 = vunpack.c.l.b16 %v2894
    %v2932 = vunpack.c.l.b16 %v2895
    %v2933 = vunpack.c.l.b16 %v2896
    %v2934 = vunpack.c.l.b16 %v2897
    %v2935 = vunpack.c.l.b16 %v2898
    %v2936 = vunpack.c.l.b16 %v2899
    %v2937 = vunpack.c.l.b16 %v2900
    %v2938 = vunpack.c.l.b16 %v2901
    %v2939 = vunpack.c.l.b16 %v2902
    %v2940 = vunpack.c.l.b16 %v2903
    %v2941 = vunpack.c.l.b16 %v2904
    %v2942 = vunpack.c.l.b16 %v2905
    %v2943 = vunpack.c.l.b16 %v2906
    %v2944 = vunpack.c.l.b16 %v2907
    %v2945 = vunpack.c.l.b16 %v2908
    %v2946 = vpack.c.b16 %v2931, %v2930
    %v2947 = vpack.c.b16 %v2933, %v2932
    %v2948 = vpack.c.b16 %v2935, %v2934
    %v2949 = vpack.c.b16 %v2937, %v2936
    %v2950 = vpack.c.b16 %v2939, %v2938
    %v2951 = vpack.c.b16 %v2941, %v2940
    %v2952 = vpack.c.b16 %v2943, %v2942
    %v2953 = vpack.c.b16 %v2945, %v2944
    %2962 = vmatprep.subr.bf16.mxu0 0
    %2963 = vmatpush1.bf16.msra.mxu0 %v2953
    %2964 = vmatprep.subr.bf16.mxu0 0
    %2965 = vmatpush1.bf16.msra.mxu0 %v2952
    %2966 = vmatprep.subr.bf16.mxu0 0
    %2967 = vmatpush1.bf16.msra.mxu0 %v2951
    %2968 = vmatprep.subr.bf16.mxu0 0
    %2969 = vmatpush1.bf16.msra.mxu0 %v2950
    %2970 = vmatprep.subr.bf16.mxu0 0
    %2971 = vmatpush1.bf16.msra.mxu0 %v2949
    %2972 = vmatprep.subr.bf16.mxu0 0
    %2973 = vmatpush1.bf16.msra.mxu0 %v2948
    %2974 = vmatprep.subr.bf16.mxu0 0
    %2975 = vmatpush1.bf16.msra.mxu0 %v2947
    %2976 = vmatprep.subr.bf16.mxu0 0
    %2977 = vmatpush1.bf16.msra.mxu0 %v2946
    %2978 = vmatprep.subr.bf16.mxu0 0
    %2979 = vmatpush2.bf16.msra.mxu0 0
    %2980 = vmatprep.subr.bf16.mxu0 0
    %2981 = vmatpush2.bf16.msra.mxu0 0
    %2982 = vmatprep.subr.bf16.mxu0 0
    %2983 = vmatpush2.bf16.msra.mxu0 0
    %2984 = vmatprep.subr.bf16.mxu0 0
    %2985 = vmatpush2.bf16.msra.mxu0 0
    %2986 = vmatprep.subr.bf16.mxu0 0
    %2987 = vmatpush2.bf16.msra.mxu0 0
    %2988 = vmatprep.subr.bf16.mxu0 0
    %2989 = vmatpush2.bf16.msra.mxu0 0
    %2990 = vmatprep.subr.bf16.mxu0 0
    %2991 = vmatpush2.bf16.msra.mxu0 0
    %2992 = vmatprep.subr.bf16.mxu0 0
    %2993 = vmatpush2.bf16.msra.mxu0 0
    %2994 = vmatprep.mubr.bf16.mxu0 0
    %2995 = vmatmul.mubr.bf16.gmra.mxu0 %v2891
    %v2996 = vpop.f32.mrf.mxu0
    %v2997 = vadd.f32 %v2913, %v2996
    %v2998 = vpop.f32.mrf.mxu0
    %v2999 = vpop.f32.mrf.mxu0
    %v3000 = vadd.f32 %v2913, %v2999
    %v3001 = vpop.f32.mrf.mxu0
    %3002 = vdwg.mxu0
    %v3003 = vadd.f32 %v2750, %v2997
    %v3004 = vadd.f32 %v2751, %v3000
    %v3005 = vld [vmem:[%s4] sm:$0x3]
    %v3007 = vsel %vm1058, %v3005, 0
    %vm3009 = vcmask 1041408
    %v3011 = vsel %vm3009, %v3004, 0
    %3013 = vmatprep.subr.mxu0 0.0
    %3014 = vmatpush1.msra.mxu0 0.0
    %3015 = vmatprep.subr.mxu0 0.0
    %3016 = vmatpush1.msra.mxu0 0.0
    %3017 = vmatprep.subr.mxu0 0.0
    %3018 = vmatpush1.msra.mxu0 0.0
    %3019 = vmatprep.subr.mxu0 0.0
    %3020 = vmatpush1.msra.mxu0 0.0
    %3021 = vmatprep.subr.mxu0 0.0
    %3022 = vmatpush1.msra.mxu0 0.0
    %3023 = vmatprep.subr.mxu0 0.0
    %3024 = vmatpush1.msra.mxu0 0.0
    %3025 = vmatprep.subr.mxu0 0.0
    %3026 = vmatpush1.msra.mxu0 0.0
    %3027 = vmatprep.subr.mxu0 0.0
    %3028 = vmatpush1.msra.mxu0 0.0
    %3029 = vmatprep.subr.mxu0 0.0
    %3030 = vmatpush1.msra.mxu0 0.0
    %3031 = vmatprep.subr.mxu0 0.0
    %3032 = vmatpush1.msra.mxu0 0.0
    %3033 = vmatprep.subr.mxu0 0.0
    %3034 = vmatpush1.msra.mxu0 0.0
    %3035 = vmatprep.subr.mxu0 0.0
    %3036 = vmatpush1.msra.mxu0 0.0
    %3037 = vmatprep.subr.mxu0 0.0
    %3038 = vmatpush1.msra.mxu0 0.0
    %3039 = vmatprep.subr.mxu0 0.0
    %3040 = vmatpush1.msra.mxu0 0.0
    %3041 = vmatprep.subr.mxu0 0.0
    %3042 = vmatpush1.msra.mxu0 %v3011
    %3043 = vmatprep.subr.mxu0 0.0
    %3044 = vmatpush1.msra.mxu0 %v3003
    %3045 = vmatprep.subr.mxu0 0.0
    %3046 = vmatpush2.msra.mxu0 0.0
    %3047 = vmatprep.subr.mxu0 0.0
    %3048 = vmatpush2.msra.mxu0 0.0
    %3049 = vmatprep.subr.mxu0 0.0
    %3050 = vmatpush2.msra.mxu0 0.0
    %3051 = vmatprep.subr.mxu0 0.0
    %3052 = vmatpush2.msra.mxu0 0.0
    %3053 = vmatprep.subr.mxu0 0.0
    %3054 = vmatpush2.msra.mxu0 0.0
    %3055 = vmatprep.subr.mxu0 0.0
    %3056 = vmatpush2.msra.mxu0 0.0
    %3057 = vmatprep.subr.mxu0 0.0
    %3058 = vmatpush2.msra.mxu0 0.0
    %3059 = vmatprep.subr.mxu0 0.0
    %3060 = vmatpush2.msra.mxu0 0.0
    %3061 = vmatprep.subr.mxu0 0.0
    %3062 = vmatpush2.msra.mxu0 0.0
    %3063 = vmatprep.subr.mxu0 0.0
    %3064 = vmatpush2.msra.mxu0 0.0
    %3065 = vmatprep.subr.mxu0 0.0
    %3066 = vmatpush2.msra.mxu0 0.0
    %3067 = vmatprep.subr.mxu0 0.0
    %3068 = vmatpush2.msra.mxu0 0.0
    %3069 = vmatprep.subr.mxu0 0.0
    %3070 = vmatpush2.msra.mxu0 0.0
    %3071 = vmatprep.subr.mxu0 0.0
    %3072 = vmatpush2.msra.mxu0 0.0
    %3073 = vmatprep.subr.mxu0 0.0
    %3074 = vmatpush2.msra.mxu0 0.0
    %3075 = vmatprep.subr.mxu0 0.0
    %3076 = vmatpush2.msra.mxu0 0.0
    %3077 = vmatprep.mubr.f32.mxu0 0.0
    %3078 = vmatmul.mubr.f32.gmra.mxu0 %v3007
    %v3079 = vpop.f32.mrf.mxu0
    %v3080 = vadd.f32 0.0, %v3079
    %v3081 = vpop.f32.mrf.mxu0
    %3082 = vdwg.mxu0
    %v3083 = vld [vmem:[%s2 + $0xe] sm:$0x1]
    %v3084 = vld [vmem:[%s2 + $0xf] sm:$0x1]
    %v3085 = vsel %vm597, %v3080, 0.0
    %3086 = vadd.xlane.f32.xlu0 %v3085
    %v3087 = vpop.xlane.xlu0 %3086
    %v3088 = vmul.f32 %v3087, %v601
    %v3089 = vsub.f32 %v3080, %v3088
    %v3090 = vmul.f32 %v3089, %v3089
    %v3091 = vsel %vm597, %v3090, 0.0
    %3092 = vadd.xlane.f32.xlu0 %v3091
    %v3093 = vpop.xlane.xlu0 %3092
    %v3094 = vmul.f32 %v3093, %v601
    %v3095 = vadd.f32 %v3094, 1e-05
    %v3096 = vrsqrt.pop %v3095
    %v3097 = vmul.f32 %v3089, %v3096
    %v3098 = vlaneseq
    %v3099 = vshrl.u32 %v3098, 7
    %v3100 = vsub.s32 0, %v3099
    %v3101 = vrot.slane %v3083, %v3100
    %v3102 = vmul.f32 %v3097, %v3101
    %v3103 = vlaneseq
    %v3104 = vshrl.u32 %v3103, 7
    %v3105 = vsub.s32 0, %v3104
    %v3106 = vrot.slane %v3084, %v3105
    %v3107 = vadd.f32 %v3102, %v3106
    %v3108 = vpack.c.bf16 %v3107, %v3107
    %v3109 = vld [vmem:[%s12] sm:$0xff]
    %v3110 = vld [vmem:[%s12 + $0x8] sm:$0xff]
    %v3111 = vld [vmem:[%s12 + $0x10] sm:$0xff]
    %v3112 = vld [vmem:[%s12 + $0x18] sm:$0xff]
    %v3113 = vld [vmem:[%s12 + $0x20] sm:$0xff]
    %v3114 = vld [vmem:[%s12 + $0x28] sm:$0xff]
    %v3115 = vld [vmem:[%s12 + $0x30] sm:$0xff]
    %v3116 = vld [vmem:[%s12 + $0x38] sm:$0xff]
    %v3117 = vld [vmem:[%s12 + $0x40] sm:$0xff]
    %v3118 = vld [vmem:[%s12 + $0x48] sm:$0xff]
    %v3119 = vld [vmem:[%s12 + $0x50] sm:$0xff]
    %v3120 = vld [vmem:[%s12 + $0x58] sm:$0xff]
    %v3121 = vld [vmem:[%s12 + $0x60] sm:$0xff]
    %v3122 = vld [vmem:[%s12 + $0x68] sm:$0xff]
    %v3123 = vld [vmem:[%s12 + $0x70] sm:$0xff]
    %v3124 = vld [vmem:[%s12 + $0x78] sm:$0xff]
    %v3141 = vunpack.c.l.b16 %v3109
    %v3142 = vunpack.c.h.b16 %v3109
    %v3143 = vunpack.c.l.b16 %v3110
    %v3144 = vunpack.c.h.b16 %v3110
    %v3145 = vunpack.c.l.b16 %v3111
    %v3146 = vunpack.c.h.b16 %v3111
    %v3147 = vunpack.c.l.b16 %v3112
    %v3148 = vunpack.c.h.b16 %v3112
    %v3149 = vunpack.c.l.b16 %v3113
    %v3150 = vunpack.c.h.b16 %v3113
    %v3151 = vunpack.c.l.b16 %v3114
    %v3152 = vunpack.c.h.b16 %v3114
    %v3153 = vunpack.c.l.b16 %v3115
    %v3154 = vunpack.c.h.b16 %v3115
    %v3155 = vunpack.c.l.b16 %v3116
    %v3156 = vunpack.c.h.b16 %v3116
    %v3157 = vunpack.c.l.b16 %v3117
    %v3158 = vunpack.c.h.b16 %v3117
    %v3159 = vunpack.c.l.b16 %v3118
    %v3160 = vunpack.c.h.b16 %v3118
    %v3161 = vunpack.c.l.b16 %v3119
    %v3162 = vunpack.c.h.b16 %v3119
    %v3163 = vunpack.c.l.b16 %v3120
    %v3164 = vunpack.c.h.b16 %v3120
    %v3165 = vunpack.c.l.b16 %v3121
    %v3166 = vunpack.c.h.b16 %v3121
    %v3167 = vunpack.c.l.b16 %v3122
    %v3168 = vunpack.c.h.b16 %v3122
    %v3169 = vunpack.c.l.b16 %v3123
    %v3170 = vunpack.c.h.b16 %v3123
    %v3171 = vunpack.c.l.b16 %v3124
    %v3172 = vunpack.c.h.b16 %v3124
    %v3173 = vpack.c.b16 %v3145, %v3141
    %v3174 = vpack.c.b16 %v3146, %v3142
    %v3175 = vpack.c.b16 %v3147, %v3143
    %v3176 = vpack.c.b16 %v3148, %v3144
    %v3177 = vpack.c.b16 %v3153, %v3149
    %v3178 = vpack.c.b16 %v3154, %v3150
    %v3179 = vpack.c.b16 %v3155, %v3151
    %v3180 = vpack.c.b16 %v3156, %v3152
    %v3181 = vpack.c.b16 %v3161, %v3157
    %v3182 = vpack.c.b16 %v3162, %v3158
    %v3183 = vpack.c.b16 %v3163, %v3159
    %v3184 = vpack.c.b16 %v3164, %v3160
    %v3185 = vpack.c.b16 %v3169, %v3165
    %v3186 = vpack.c.b16 %v3170, %v3166
    %v3187 = vpack.c.b16 %v3171, %v3167
    %v3188 = vpack.c.b16 %v3172, %v3168
    %v3206 = vsel %vm593, %v3108, 0
    %3208 = vmatprep.subr.bf16.mxu0 0
    %3209 = vmatpush1.bf16.msra.mxu0 0
    %3210 = vmatprep.subr.bf16.mxu0 0
    %3211 = vmatpush1.bf16.msra.mxu0 0
    %3212 = vmatprep.subr.bf16.mxu0 0
    %3213 = vmatpush1.bf16.msra.mxu0 0
    %3214 = vmatprep.subr.bf16.mxu0 0
    %3215 = vmatpush1.bf16.msra.mxu0 0
    %3216 = vmatprep.subr.bf16.mxu0 %v3186
    %3217 = vmatpush1.bf16.msra.mxu0 %v3185
    %3218 = vmatprep.subr.bf16.mxu0 %v3182
    %3219 = vmatpush1.bf16.msra.mxu0 %v3181
    %3220 = vmatprep.subr.bf16.mxu0 %v3178
    %3221 = vmatpush1.bf16.msra.mxu0 %v3177
    %3222 = vmatprep.subr.bf16.mxu0 %v3174
    %3223 = vmatpush1.bf16.msra.mxu0 %v3173
    %3224 = vmatprep.subr.bf16.mxu0 0
    %3225 = vmatpush2.bf16.msra.mxu0 0
    %3226 = vmatprep.subr.bf16.mxu0 0
    %3227 = vmatpush2.bf16.msra.mxu0 0
    %3228 = vmatprep.subr.bf16.mxu0 0
    %3229 = vmatpush2.bf16.msra.mxu0 0
    %3230 = vmatprep.subr.bf16.mxu0 0
    %3231 = vmatpush2.bf16.msra.mxu0 0
    %3232 = vmatprep.subr.bf16.mxu0 0
    %3233 = vmatpush2.bf16.msra.mxu0 0
    %3234 = vmatprep.subr.bf16.mxu0 0
    %3235 = vmatpush2.bf16.msra.mxu0 0
    %3236 = vmatprep.subr.bf16.mxu0 0
    %3237 = vmatpush2.bf16.msra.mxu0 0
    %3238 = vmatprep.subr.bf16.mxu0 0
    %3239 = vmatpush2.bf16.msra.mxu0 0
    %3240 = vmatprep.mubr.bf16.mxu0 0
    %3241 = vmatmul.mubr.bf16.gmra.mxu0 %v3206
    %v3242 = vpop.f32.mrf.mxu0
    %v3243 = vadd.f32 0.0, %v3242
    %v3244 = vpop.f32.mrf.mxu0
    %v3245 = vadd.f32 0.0, %v3244
    %v3246 = vpop.f32.mrf.mxu0
    %v3247 = vpop.f32.mrf.mxu0
    %3248 = vdwg.mxu0
    %3249 = vmatprep.subr.bf16.mxu0 0
    %3250 = vmatpush1.bf16.msra.mxu0 0
    %3251 = vmatprep.subr.bf16.mxu0 0
    %3252 = vmatpush1.bf16.msra.mxu0 0
    %3253 = vmatprep.subr.bf16.mxu0 0
    %3254 = vmatpush1.bf16.msra.mxu0 0
    %3255 = vmatprep.subr.bf16.mxu0 0
    %3256 = vmatpush1.bf16.msra.mxu0 0
    %3257 = vmatprep.subr.bf16.mxu0 %v3188
    %3258 = vmatpush1.bf16.msra.mxu0 %v3187
    %3259 = vmatprep.subr.bf16.mxu0 %v3184
    %3260 = vmatpush1.bf16.msra.mxu0 %v3183
    %3261 = vmatprep.subr.bf16.mxu0 %v3180
    %3262 = vmatpush1.bf16.msra.mxu0 %v3179
    %3263 = vmatprep.subr.bf16.mxu0 %v3176
    %3264 = vmatpush1.bf16.msra.mxu0 %v3175
    %3265 = vmatprep.subr.bf16.mxu0 0
    %3266 = vmatpush2.bf16.msra.mxu0 0
    %3267 = vmatprep.subr.bf16.mxu0 0
    %3268 = vmatpush2.bf16.msra.mxu0 0
    %3269 = vmatprep.subr.bf16.mxu0 0
    %3270 = vmatpush2.bf16.msra.mxu0 0
    %3271 = vmatprep.subr.bf16.mxu0 0
    %3272 = vmatpush2.bf16.msra.mxu0 0
    %3273 = vmatprep.subr.bf16.mxu0 0
    %3274 = vmatpush2.bf16.msra.mxu0 0
    %3275 = vmatprep.subr.bf16.mxu0 0
    %3276 = vmatpush2.bf16.msra.mxu0 0
    %3277 = vmatprep.subr.bf16.mxu0 0
    %3278 = vmatpush2.bf16.msra.mxu0 0
    %3279 = vmatprep.subr.bf16.mxu0 0
    %3280 = vmatpush2.bf16.msra.mxu0 0
    %3281 = vmatprep.mubr.bf16.mxu0 0
    %3282 = vmatmul.mubr.bf16.gmra.mxu0 %v3206
    %v3283 = vpop.f32.mrf.mxu0
    %v3284 = vadd.f32 0.0, %v3283
    %v3285 = vpop.f32.mrf.mxu0
    %v3286 = vadd.f32 0.0, %v3285
    %v3287 = vpop.f32.mrf.mxu0
    %v3288 = vpop.f32.mrf.mxu0
    %3289 = vdwg.mxu0
    %v3294 = vcombine.low %v3243, %v3245
    %v3295 = vcombine.low %v3284, %v3286
    %v3297 = vunpack.c.l.s4 1983009808
    %v3298 = vunpack.c.0.s8 %v3297
    %v3299 = vlaneseq
    %v3300 = vshrl.u32 %v3299, 7
    %v3301 = vsub.s32 %v3298, %v3300
    %v3302 = vrot.slane %v3294, %v3301
    %v3304 = vunpack.c.l.s4 1983009808
    %v3305 = vunpack.c.0.s8 %v3304
    %v3306 = vlaneseq
    %v3307 = vshrl.u32 %v3306, 7
    %v3308 = vsub.s32 %v3305, %v3307
    %v3309 = vrot.slane %v3295, %v3308
    %v3310 = vcombine.low %v3302, %v3309
    %3312 = vst [vmem:[#allocation2] sm:$0xff] %v3310
    // Predicated region
    $region54: #{tpu_custom_call.1} parent=1 // pred_check
      _
    $region55: #{tpu_custom_call.1} parent=1 // pred_check_branch
      %3314 = sbr.rel (0) target = $region57
    $region56: #{tpu_custom_call.1} parent=1 // pred_region
      %s3316 = ssub.s32 128, 128
      %3317 = vsyncadd [#allocation3], %s3316
      %s3319 = sshll.u32 [#allocation2], 4
      %s3320 = int_to_ptr.vmem [resolvable:$true] %s3319
      %3322 = dma.vmem_to_hbm [thread:$0]  %s3320, 128, %s13, [#allocation3]
    $region57: #{tpu_custom_call.1} parent=1 // pred_fallthru
      _
    // Predicated region
    $region58: #{tpu_custom_call.1} parent=1 // pred_check
      _
    $region59: #{tpu_custom_call.1} parent=1 // pred_check_branch
      %3324 = sbr.rel (0) target = $region61
    $region60: #{tpu_custom_call.1} parent=1 // pred_region
      %3325 = dma.done [#allocation3], 128
    $region61: #{tpu_custom_call.1} parent=1 // pred_fallthru
      _
    %3326 = vsyncpa [#allocation3], 1

</llo_original>
